<compile_context>
chip_gen: v5e
topology: v5e:2x2
jax: 0.10.0
libtpu: 0.0.40
codegen_flags: <defaults>
</compile_context>

<pallas_src>
import functools

import jax
import jax.numpy as jnp
from jax.experimental import pallas as pl
from jax.experimental.pallas import tpu as pltpu


def _round_up(x, m):
    return (x + m - 1) // m * m


# ---------------------------------------------------------------------------
# Kernel 1: image preprocessing  (x - mean[c]) * inv_std[c]
# (only produces the returned `images`; the backbone folds this affine into its weights)
# ---------------------------------------------------------------------------
def _img_norm_kernel(mean_ref, inv_std_ref, x_ref, o_ref):
    r = pl.program_id(0)                         # flattened (n, c) plane index
    o_ref[...] = (x_ref[...] - mean_ref[r]) * inv_std_ref[r]


def preprocess_images(images, pixel_mean, pixel_std):
    """images: [N, C, H, W] f32. pixel_mean/std: [C] f32."""
    N, C, H, W = images.shape
    HW = H * W
    x3 = images.reshape(N * C, 1, HW)            # lane-dense: last dim = H*W
    mean_rows = jnp.tile(pixel_mean.astype(jnp.float32), N)          # (N*C,)
    inv_std_rows = jnp.tile(1.0 / pixel_std.astype(jnp.float32), N)  # reciprocal hoisted

    out = pl.pallas_call(
        _img_norm_kernel,
        out_shape=jax.ShapeDtypeStruct((N * C, 1, HW), jnp.float32),
        grid=(N * C,),
        in_specs=[
            pl.BlockSpec(memory_space=pltpu.MemorySpace.SMEM),
            pl.BlockSpec(memory_space=pltpu.MemorySpace.SMEM),
            pl.BlockSpec((1, 1, HW), lambda i: (i, 0, 0)),
        ],
        out_specs=pl.BlockSpec((1, 1, HW), lambda i: (i, 0, 0)),
        compiler_params=pltpu.CompilerParams(dimension_semantics=("parallel",)),
    )(mean_rows, inv_std_rows, x3)
    return out.reshape(N, C, H, W)


# ---------------------------------------------------------------------------
# Kernel 2: patchify-conv matmul (bf16 MXU) + bias, with fused per-lane min/max epilogue
# ---------------------------------------------------------------------------
def _matmul_minmax_kernel(a_ref, b_ref, bias_ref, o_ref, mn_ref, mx_ref, *,
                          tm, m_real, n_valid):
    acc = jnp.dot(a_ref[...], b_ref[...], preferred_element_type=jnp.float32)
    acc = acc + bias_ref[...]                    # (tm, Np) + (1, Np)
    o_ref[...] = acc

    # static column mask: only needed when the output columns were padded to Np
    if acc.shape[1] != n_valid:
        col_ok = jax.lax.broadcasted_iota(jnp.int32, (1, acc.shape[1]), 1) < n_valid
        acc_lo = jnp.where(col_ok, acc, jnp.inf)
        acc_hi = jnp.where(col_ok, acc, -jnp.inf)
    else:
        acc_lo = acc
        acc_hi = acc

    i = pl.program_id(0)
    last = pl.num_programs(0) - 1

    # sublane-only reduction -> per-lane partials (cross-lane reduce happens in JAX glue)
    @pl.when(i != last)
    def _():
        mn_ref[...] = jnp.min(acc_lo, axis=0, keepdims=True).reshape(mn_ref.shape)
        mx_ref[...] = jnp.max(acc_hi, axis=0, keepdims=True).reshape(mx_ref.shape)

    # only the last tile can contain padded rows -> mask only there
    @pl.when(i == last)
    def _():
        row_ok = (jax.lax.broadcasted_iota(jnp.int32, (acc.shape[0], 1), 0)
                  + i * tm) < m_real
        mn_ref[...] = jnp.min(jnp.where(row_ok, acc_lo, jnp.inf),
                              axis=0, keepdims=True).reshape(mn_ref.shape)
        mx_ref[...] = jnp.max(jnp.where(row_ok, acc_hi, -jnp.inf),
                              axis=0, keepdims=True).reshape(mx_ref.shape)


def backbone_level(images, w, pixel_mean, pixel_std, stride):
    """Patchify conv (kernel == stride) over the RAW image via Pallas MXU matmul, with the
    per-channel (x-mean)/std normalization folded exactly into the weights/bias.
    images: [N, C, H, W] f32, w: [C*stride*stride, Cout] f32.
    Returns feat in NHWC [N, H/stride, W/stride, Cout] f32 plus its global min / max."""
    N, C, H, W = images.shape
    Ho, Wo = H // stride, W // stride
    K = C * stride * stride
    Cout = w.shape[1]
    Np = _round_up(Cout, 128)                    # lane-dense matmul output columns

    # exact affine fold: (x - mean) * inv_std folded into scaled weights + bias column
    inv_std = (1.0 / pixel_std).astype(jnp.float32)
    mean = pixel_mean.astype(jnp.float32)
    row_c = jnp.arange(K) // (stride * stride)   # channel of each im2col row
    w_scaled = w * inv_std[row_c][:, None]
    bias = -(mean[row_c] * inv_std[row_c]) @ w   # (Cout,)
    if Np != Cout:
        w_scaled = jnp.pad(w_scaled, ((0, 0), (0, Np - Cout)))
        bias = jnp.pad(bias, (0, Np - Cout))
    bias = bias.reshape(1, Np).astype(jnp.float32)

    # bf16 BEFORE the im2col shuffle: halves the bytes moved by the XLA transpose.
    # TODO(synk): fully fusing the patch extraction into the Pallas matmul would remove
    #             this image-sized HBM round trip.
    xb = images.astype(jnp.bfloat16)
    patches = xb.reshape(N, C, Ho, stride, Wo, stride)
    patches = patches.transpose(0, 2, 4, 1, 3, 5).reshape(N * Ho * Wo, K)

    M = N * Ho * Wo
    tm = min(256, _round_up(M, 8))
    if M // max(tm, 1) < 2 and M >= 16:          # >=2 grid steps so both v7x TCs get work
        tm = max(8, _round_up(M // 2, 8))
    M_pad = _round_up(M, tm)
    # last tile must contain at least one real row, so the +/-inf sentinels stay local
    assert M_pad - M < tm
    if M_pad != M:
        patches = jnp.pad(patches, ((0, M_pad - M), (0, 0)))
    num_tiles = M_pad // tm

    b = w_scaled.astype(jnp.bfloat16)            # bf16 operands, f32 accumulation

    kernel = functools.partial(_matmul_minmax_kernel, tm=tm, m_real=M, n_valid=Cout)
    out, mn_part, mx_part = pl.pallas_call(
        kernel,
        out_shape=(
            jax.ShapeDtypeStruct((M_pad, Np), jnp.float32),
            jax.ShapeDtypeStruct((num_tiles, 1, Np), jnp.float32),
            jax.ShapeDtypeStruct((num_tiles, 1, Np), jnp.float32),
        ),
        grid=(num_tiles,),
        in_specs=[
            pl.BlockSpec((tm, K), lambda i: (i, 0)),
            pl.BlockSpec((K, Np), lambda i: (0, 0)),
            pl.BlockSpec((1, Np), lambda i: (0, 0)),
        ],
        out_specs=(
            pl.BlockSpec((tm, Np), lambda i: (i, 0)),
            pl.BlockSpec((1, 1, Np), lambda i: (i, 0, 0)),
            pl.BlockSpec((1, 1, Np), lambda i: (i, 0, 0)),
        ),
        compiler_params=pltpu.CompilerParams(dimension_semantics=("parallel",)),
    )(patches, b, bias)

    feat_nhwc = out[:M, :Cout].reshape(N, Ho, Wo, Cout)     # stays lane-dense (C on lanes)
    return feat_nhwc, jnp.min(mn_part), jnp.max(mx_part)


# ---------------------------------------------------------------------------
# Kernel 3: fused zero-pad (bottom/right) + normalize  (x - min) * inv_scale, NHWC lane-dense
# ---------------------------------------------------------------------------
def _pad_norm_kernel(s_ref, x_ref, o_ref, *, h, wc):
    gmin = s_ref[0]
    inv = s_ref[1]
    pad_val = (0.0 - gmin) * inv                 # pad-then-normalize order (matches reference)
    th = o_ref.shape[1]
    wpc = o_ref.shape[2]
    i = pl.program_id(1)                         # row-tile index inside the padded output

    # all real rows live in row-tile 0 (th >= h by construction); each output element is
    # written exactly once via disjoint lane-aligned stores
    @pl.when(i == 0)
    def _():
        o_ref[:, :h, :wc] = (x_ref[...] - gmin) * inv
        if wc < wpc:                             # right zero-pad strip
            o_ref[:, :h, wc:] = jnp.full((1, h, wpc - wc), pad_val, jnp.float32)
        if h < th:                               # bottom zero-pad strip inside tile 0
            o_ref[:, h:, :] = jnp.full((1, th - h, wpc), pad_val, jnp.float32)

    @pl.when(i > 0)
    def _():
        o_ref[...] = jnp.full(o_ref.shape, pad_val, jnp.float32)


def _choose_row_tile(h, hp, wpc, target_bytes=2 * 1024 * 1024):
    """Pick a row-tile th dividing hp with th >= h (so all real rows land in tile 0) and an
    output block of <= ~2 MiB (safe under v7x's 32 MiB scoped / 64 MiB physical VMEM with
    double buffering; v5e/v6e have plenty of headroom)."""
    candidates = [t for t in range(h, hp + 1) if hp % t == 0]
    fitting = [t for t in candidates if t * wpc * 4 <= target_bytes]
    return max(fitting) if fitting else min(candidates)


def pad_and_normalize(feat_nhwc, gmin, inv_scale, factor, min_size):
    """Mirror of Pfeature_zeropad_youxiajiao{128,256} followed by (x-min)/scale, fused so the
    padded tensor is written exactly once, operating in lane-dense NHWC layout."""
    N, H, W, C = feat_nhwc.shape
    Hp = max(_round_up(H, factor), min_size)
    Wp = max(_round_up(W, factor), min_size)
    wc, wpc = W * C, Wp * C
    s = jnp.stack([gmin, inv_scale]).astype(jnp.float32)
    x3 = feat_nhwc.reshape(N, H, wc)             # lane dim = W*C (large multiple of 128)

    th = _choose_row_tile(H, Hp, wpc)
    kernel = functools.partial(_pad_norm_kernel, h=H, wc=wc)
    out = pl.pallas_call(
        kernel,
        out_shape=jax.ShapeDtypeStruct((N, Hp, wpc), jnp.float32),
        grid=(N, Hp // th),
        in_specs=[
            pl.BlockSpec(memory_space=pltpu.MemorySpace.SMEM),
            pl.BlockSpec((1, H, wc), lambda n, i: (n, 0, 0)),
        ],
        out_specs=pl.BlockSpec((1, th, wpc), lambda n, i: (n, i, 0)),
        compiler_params=pltpu.CompilerParams(dimension_semantics=("parallel", "parallel")),
    )(s, x3)
    return out.reshape(N, Hp, Wp, C)


# ---------------------------------------------------------------------------
# Forward pass (feature-compression training branch of GeneralizedRCNN.forward)
# ---------------------------------------------------------------------------
def generalized_rcnn_forward(images, params):
    pixel_mean = params["pixel_mean"]
    pixel_std = params["pixel_std"]

    # --- preprocess_image: per-channel normalize (Pallas), returned-only tensor ------------
    imgs = preprocess_images(images, pixel_mean, pixel_std)
    # ImageList.from_tensors: all images share one shape divisible by 32 -> batched as-is.

    # --- backbone stand-in: p2 (stride 4), p3 (stride 8); normalization folded, min/max fused
    p2_nhwc, mn2, mx2 = backbone_level(images, params["w_p2"], pixel_mean, pixel_std, stride=4)
    p3_nhwc, mn3, mx3 = backbone_level(images, params["w_p3"], pixel_mean, pixel_std, stride=8)

    # --- guiyihua range ---------------------------------------------------------------------
    guiyihua_min = jnp.minimum(mn2, mn3)
    guiyihua_max = jnp.maximum(mx2, mx3)
    guiyihua_scale = guiyihua_max - guiyihua_min
    # NOTE: reference has no epsilon; a constant feature map would produce inf as in PyTorch.
    inv_scale = 1.0 / guiyihua_scale

    # --- fused pad (bottom/right, min 256 / 128) + normalize, NHWC lane-dense ---------------
    d_nhwc = pad_and_normalize(p2_nhwc, guiyihua_min, inv_scale, factor=32, min_size=256)
    d_p3_nhwc = pad_and_normalize(p3_nhwc, guiyihua_min, inv_scale, factor=16, min_size=128)

    # d_originalsize normalized == top-left slice of d_p3 (pad is bottom/right only)
    h3, w3 = p3_nhwc.shape[1], p3_nhwc.shape[2]
    d_orig_nhwc = d_p3_nhwc[:, :h3, :w3, :]

    # single NCHW conversion at the very end (PyTorch module convention)
    to_nchw = lambda t: jnp.transpose(t, (0, 3, 1, 2))

    # TODO(synk): net_belle (Cheng2020Anchor), RateDistortionLoss, gradient/optimizer steps,
    #             proposal_generator and roi_heads losses are not translatable.
    return {
        "images": imgs,
        "p2": to_nchw(p2_nhwc),
        "p3": to_nchw(p3_nhwc),
        "d": to_nchw(d_nhwc),
        "d_p3": to_nchw(d_p3_nhwc),
        "d_originalsize": to_nchw(d_orig_nhwc),
        "guiyihua_min": guiyihua_min,
        "guiyihua_max": guiyihua_max,
    }


if __name__ == "__main__":
    key = jax.random.PRNGKey(0)
    k_img, k_w2, k_w3 = jax.random.split(key, 3)

    N, C, H, W = 2, 3, 64, 64
    C_feat = 128  # FPN channel count stand-in (lane-dense output columns)
    images = jax.random.uniform(k_img, (N, C, H, W), jnp.float32, 0.0, 255.0)

    params = {
        # detectron2 defaults (BGR means / std)
        "pixel_mean": jnp.array([103.530, 116.280, 123.675], jnp.float32),
        "pixel_std": jnp.array([57.375, 57.120, 58.395], jnp.float32),
        # deterministic synthetic backbone weights
        "w_p2": jax.random.normal(k_w2, (C * 4 * 4, C_feat), jnp.float32) * 0.05,
        "w_p3": jax.random.normal(k_w3, (C * 8 * 8, C_feat), jnp.float32) * 0.05,
    }

    out = jax.jit(generalized_rcnn_forward)(images, params)
    out = jax.block_until_ready(out)

    assert out["images"].shape == (N, C, H, W)
    assert out["p2"].shape == (N, C_feat, 16, 16)
    assert out["p3"].shape == (N, C_feat, 8, 8)
    assert out["d"].shape == (N, C_feat, 256, 256)
    assert out["d_p3"].shape == (N, C_feat, 128, 128)
    assert out["d_originalsize"].shape == (N, C_feat, 8, 8)
    assert bool(jnp.isfinite(out["d"]).all())
    assert bool(jnp.isfinite(out["d_p3"]).all())

    # --- numerical self-checks against plain-JAX reference math -----------------------------
    ref_img = (images - params["pixel_mean"][None, :, None, None]) / \
              params["pixel_std"][None, :, None, None]
    assert bool(jnp.allclose(out["images"], ref_img, atol=1e-4, rtol=1e-4))

    # kernel-consistency: d_originalsize / d derive from p2/p3 and the fused min/max
    scale = out["guiyihua_max"] - out["guiyihua_min"]
    ref_orig = (out["p3"] - out["guiyihua_min"]) / scale
    assert bool(jnp.allclose(out["d_originalsize"], ref_orig, atol=1e-4, rtol=1e-4))
    ref_d_tl = (out["p2"] - out["guiyihua_min"]) / scale
    assert bool(jnp.allclose(out["d"][:, :, :16, :16], ref_d_tl, atol=1e-4, rtol=1e-4))
    pad_val = (0.0 - out["guiyihua_min"]) / scale
    assert bool(jnp.allclose(out["d"][:, :, 16:, :], pad_val, atol=1e-4, rtol=1e-4))

    # f32 conv reference: bounds the bf16-MXU deviation of p2/p3 (and hence guiyihua min/max)
    def ref_level(x_norm, w, stride):
        n, c, h, wdt = x_norm.shape
        ho, wo = h // stride, wdt // stride
        p = x_norm.reshape(n, c, ho, stride, wo, stride).transpose(0, 2, 4, 1, 3, 5)
        p = p.reshape(n, ho, wo, c * stride * stride)
        return jnp.einsum("nhwk,ko->nohw", p, w)

    ref_p2 = ref_level(ref_img, params["w_p2"], 4)
    ref_p3 = ref_level(ref_img, params["w_p3"], 8)
    assert float(jnp.max(jnp.abs(out["p2"] - ref_p2))) < 0.1   # bf16 operand rounding bound
    assert float(jnp.max(jnp.abs(out["p3"] - ref_p3))) < 0.1

    print("KERNEL_OK")
</pallas_src>

<mosaic_0001>
module attributes {stable_mosaic.version = 11 : i64} {
  func.func @_matmul_minmax_kernel(%arg0: i32, %arg1: memref<256x48xbf16, #tpu.memory_space<vmem>>, %arg2: memref<48x128xbf16, #tpu.memory_space<vmem>>, %arg3: memref<1x128xf32, #tpu.memory_space<vmem>>, %arg4: memref<256x128xf32, #tpu.memory_space<vmem>>, %arg5: memref<1x1x128xf32, #tpu.memory_space<vmem>>, %arg6: memref<1x1x128xf32, #tpu.memory_space<vmem>>) attributes {dimension_semantics = [#tpu.dimension_semantics<parallel>], iteration_bounds = array<i64: 2>, scalar_prefetch = 0 : i64, scratch_operands = 0 : i64, tpu.core_type = #tpu.core_type<tc>, window_params = [{transform_indices = @transform_0, window_bounds = array<i64: 256, 48>}, {pipeline_mode = #tpu.pipeline_mode<synchronous>, transform_indices = @transform_1, window_bounds = array<i64: 48, 128>}, {pipeline_mode = #tpu.pipeline_mode<synchronous>, transform_indices = @transform_2, window_bounds = array<i64: 1, 128>}, {transform_indices = @transform_3, window_bounds = array<i64: 256, 128>}, {transform_indices = @transform_4, window_bounds = array<i64: 1, 1, 128>}, {transform_indices = @transform_5, window_bounds = array<i64: 1, 1, 128>}]} {
    %c0 = arith.constant 0 : index
    %c0_0 = arith.constant 0 : index
    %0 = vector.load %arg1[%c0, %c0_0] : memref<256x48xbf16, #tpu.memory_space<vmem>>, vector<256x48xbf16>
    %c0_1 = arith.constant 0 : index
    %c0_2 = arith.constant 0 : index
    %1 = vector.load %arg2[%c0_1, %c0_2] : memref<48x128xbf16, #tpu.memory_space<vmem>>, vector<48x128xbf16>
    %cst = arith.constant dense<0.000000e+00> : vector<256x128xf32>
    %2 = tpu.matmul %0, %1, %cst {dimension_numbers = #tpu.dot_dimension_numbers<[1], [0], [0], [1], [0, 0, 1, 1], [], []>} : vector<256x48xbf16>, vector<48x128xbf16>, vector<256x128xf32> -> vector<256x128xf32>
    %c0_3 = arith.constant 0 : index
    %c0_4 = arith.constant 0 : index
    %3 = vector.load %arg3[%c0_3, %c0_4] : memref<1x128xf32, #tpu.memory_space<vmem>>, vector<1x128xf32>
    %4 = vector.broadcast %3 : vector<1x128xf32> to vector<256x128xf32>
    %5 = arith.addf %2, %4 : vector<256x128xf32>
    %c0_5 = arith.constant 0 : index
    %c0_6 = arith.constant 0 : index
    %6 = vector.load %arg4[%c0_5, %c0_6] : memref<256x128xf32, #tpu.memory_space<vmem>>, vector<256x128xf32>
    tpu.vector_store %arg4[%c0_5, %c0_6], %5 {strides = array<i32>} : memref<256x128xf32, #tpu.memory_space<vmem>>, vector<256x128xf32>,
    %c1_i32 = arith.constant 1 : i32
    %7 = arith.cmpi ne, %arg0, %c1_i32 : i32
    %8 = arith.extui %7 : i1 to i32
    %c0_i32 = arith.constant 0 : i32
    %9 = arith.cmpi ne, %8, %c0_i32 : i32
    scf.if %9 {
      %cst_9 = arith.constant dense<0x7F800000> : vector<128xf32>
      %13 = vector.multi_reduction <minimumf>, %5, %cst_9 [0] : vector<256x128xf32> to vector<128xf32>
      %14 = vector.shape_cast %13 : vector<128xf32> to vector<1x128xf32>
      %15 = vector.shape_cast %14 : vector<1x128xf32> to vector<1x1x128xf32>
      %c0_10 = arith.constant 0 : index
      %c0_11 = arith.constant 0 : index
      %c0_12 = arith.constant 0 : index
      %16 = vector.load %arg5[%c0_10, %c0_11, %c0_12] : memref<1x1x128xf32, #tpu.memory_space<vmem>>, vector<1x1x128xf32>
      tpu.vector_store %arg5[%c0_10, %c0_11, %c0_12], %15 {strides = array<i32>} : memref<1x1x128xf32, #tpu.memory_space<vmem>>, vector<1x1x128xf32>,
      %cst_13 = arith.constant dense<0xFF800000> : vector<128xf32>
      %17 = vector.multi_reduction <maximumf>, %5, %cst_13 [0] : vector<256x128xf32> to vector<128xf32>
      %18 = vector.shape_cast %17 : vector<128xf32> to vector<1x128xf32>
      %19 = vector.shape_cast %18 : vector<1x128xf32> to vector<1x1x128xf32>
      %c0_14 = arith.constant 0 : index
      %c0_15 = arith.constant 0 : index
      %c0_16 = arith.constant 0 : index
      %20 = vector.load %arg6[%c0_14, %c0_15, %c0_16] : memref<1x1x128xf32, #tpu.memory_space<vmem>>, vector<1x1x128xf32>
      tpu.vector_store %arg6[%c0_14, %c0_15, %c0_16], %19 {strides = array<i32>} : memref<1x1x128xf32, #tpu.memory_space<vmem>>, vector<1x1x128xf32>,
    } else {
    }
    %c1_i32_7 = arith.constant 1 : i32
    %10 = arith.cmpi eq, %arg0, %c1_i32_7 : i32
    %11 = arith.extui %10 : i1 to i32
    %c0_i32_8 = arith.constant 0 : i32
    %12 = arith.cmpi ne, %11, %c0_i32_8 : i32
    scf.if %12 {
      %13 = tpu.iota {dimensions = array<i32: 0>} : vector<256x1xi32>
      %c256_i32 = arith.constant 256 : i32
      %14 = arith.muli %arg0, %c256_i32 : i32
      %15 = vector.broadcast %14 : i32 to vector<256x1xi32>
      %16 = arith.addi %13, %15 : vector<256x1xi32>
      %c512_i32 = arith.constant 512 : i32
      %17 = vector.broadcast %c512_i32 : i32 to vector<256x1xi32>
      %18 = arith.cmpi slt, %16, %17 : vector<256x1xi32>
      %cst_9 = arith.constant 0x7F800000 : f32
      %19 = vector.shape_cast %18 : vector<256x1xi1> to vector<256x1xi1>
      %20 = vector.broadcast %19 : vector<256x1xi1> to vector<256x128xi1>
      %21 = vector.broadcast %cst_9 : f32 to vector<256x128xf32>
      %22 = arith.select %20, %5, %21 : vector<256x128xi1>, vector<256x128xf32>
      %cst_10 = arith.constant dense<0x7F800000> : vector<128xf32>
      %23 = vector.multi_reduction <minimumf>, %22, %cst_10 [0] : vector<256x128xf32> to vector<128xf32>
      %24 = vector.shape_cast %23 : vector<128xf32> to vector<1x128xf32>
      %25 = vector.shape_cast %24 : vector<1x128xf32> to vector<1x1x128xf32>
      %c0_11 = arith.constant 0 : index
      %c0_12 = arith.constant 0 : index
      %c0_13 = arith.constant 0 : index
      %26 = vector.load %arg5[%c0_11, %c0_12, %c0_13] : memref<1x1x128xf32, #tpu.memory_space<vmem>>, vector<1x1x128xf32>
      tpu.vector_store %arg5[%c0_11, %c0_12, %c0_13], %25 {strides = array<i32>} : memref<1x1x128xf32, #tpu.memory_space<vmem>>, vector<1x1x128xf32>,
      %cst_14 = arith.constant 0xFF800000 : f32
      %27 = vector.shape_cast %18 : vector<256x1xi1> to vector<256x1xi1>
      %28 = vector.broadcast %27 : vector<256x1xi1> to vector<256x128xi1>
      %29 = vector.broadcast %cst_14 : f32 to vector<256x128xf32>
      %30 = arith.select %28, %5, %29 : vector<256x128xi1>, vector<256x128xf32>
      %cst_15 = arith.constant dense<0xFF800000> : vector<128xf32>
      %31 = vector.multi_reduction <maximumf>, %30, %cst_15 [0] : vector<256x128xf32> to vector<128xf32>
      %32 = vector.shape_cast %31 : vector<128xf32> to vector<1x128xf32>
      %33 = vector.shape_cast %32 : vector<1x128xf32> to vector<1x1x128xf32>
      %c0_16 = arith.constant 0 : index
      %c0_17 = arith.constant 0 : index
      %c0_18 = arith.constant 0 : index
      %34 = vector.load %arg6[%c0_16, %c0_17, %c0_18] : memref<1x1x128xf32, #tpu.memory_space<vmem>>, vector<1x1x128xf32>
      tpu.vector_store %arg6[%c0_16, %c0_17, %c0_18], %33 {strides = array<i32>} : memref<1x1x128xf32, #tpu.memory_space<vmem>>, vector<1x1x128xf32>,
    } else {
    }
    return
  }
  func.func @transform_0(%arg0: i32) -> (i32, i32) {
    %c0_i32 = arith.constant 0 : i32
    %c0_i32_0 = arith.constant 0 : i32
    return %arg0, %c0_i32 : i32, i32
  }
  func.func @transform_1(%arg0: i32) -> (i32, i32) {
    %c0_i32 = arith.constant 0 : i32
    %c0_i32_0 = arith.constant 0 : i32
    %c0_i32_1 = arith.constant 0 : i32
    return %c0_i32, %c0_i32_0 : i32, i32
  }
  func.func @transform_2(%arg0: i32) -> (i32, i32) {
    %c0_i32 = arith.constant 0 : i32
    %c0_i32_0 = arith.constant 0 : i32
    %c0_i32_1 = arith.constant 0 : i32
    return %c0_i32, %c0_i32_0 : i32, i32
  }
  func.func @transform_3(%arg0: i32) -> (i32, i32) {
    %c0_i32 = arith.constant 0 : i32
    %c0_i32_0 = arith.constant 0 : i32
    return %arg0, %c0_i32 : i32, i32
  }
  func.func @transform_4(%arg0: i32) -> (i32, i32, i32) {
    %c0_i32 = arith.constant 0 : i32
    %c0_i32_0 = arith.constant 0 : i32
    %c0_i32_1 = arith.constant 0 : i32
    return %arg0, %c0_i32, %c0_i32_0 : i32, i32, i32
  }
  func.func @transform_5(%arg0: i32) -> (i32, i32, i32) {
    %c0_i32 = arith.constant 0 : i32
    %c0_i32_0 = arith.constant 0 : i32
    %c0_i32_1 = arith.constant 0 : i32
    return %arg0, %c0_i32, %c0_i32_0 : i32, i32, i32
  }
}

module attributes {stable_mosaic.version = 11 : i64} {
  func.func @_matmul_minmax_kernel(%arg0: i32, %arg1: memref<64x192xbf16, #tpu.memory_space<vmem>>, %arg2: memref<192x128xbf16, #tpu.memory_space<vmem>>, %arg3: memref<1x128xf32, #tpu.memory_space<vmem>>, %arg4: memref<64x128xf32, #tpu.memory_space<vmem>>, %arg5: memref<1x1x128xf32, #tpu.memory_space<vmem>>, %arg6: memref<1x1x128xf32, #tpu.memory_space<vmem>>) attributes {dimension_semantics = [#tpu.dimension_semantics<parallel>], iteration_bounds = array<i64: 2>, scalar_prefetch = 0 : i64, scratch_operands = 0 : i64, tpu.core_type = #tpu.core_type<tc>, window_params = [{transform_indices = @transform_0, window_bounds = array<i64: 64, 192>}, {pipeline_mode = #tpu.pipeline_mode<synchronous>, transform_indices = @transform_1, window_bounds = array<i64: 192, 128>}, {pipeline_mode = #tpu.pipeline_mode<synchronous>, transform_indices = @transform_2, window_bounds = array<i64: 1, 128>}, {transform_indices = @transform_3, window_bounds = array<i64: 64, 128>}, {transform_indices = @transform_4, window_bounds = array<i64: 1, 1, 128>}, {transform_indices = @transform_5, window_bounds = array<i64: 1, 1, 128>}]} {
    %c0 = arith.constant 0 : index
    %c0_0 = arith.constant 0 : index
    %0 = vector.load %arg1[%c0, %c0_0] : memref<64x192xbf16, #tpu.memory_space<vmem>>, vector<64x192xbf16>
    %c0_1 = arith.constant 0 : index
    %c0_2 = arith.constant 0 : index
    %1 = vector.load %arg2[%c0_1, %c0_2] : memref<192x128xbf16, #tpu.memory_space<vmem>>, vector<192x128xbf16>
    %cst = arith.constant dense<0.000000e+00> : vector<64x128xf32>
    %2 = tpu.matmul %0, %1, %cst {dimension_numbers = #tpu.dot_dimension_numbers<[1], [0], [0], [1], [0, 0, 1, 1], [], []>} : vector<64x192xbf16>, vector<192x128xbf16>, vector<64x128xf32> -> vector<64x128xf32>
    %c0_3 = arith.constant 0 : index
    %c0_4 = arith.constant 0 : index
    %3 = vector.load %arg3[%c0_3, %c0_4] : memref<1x128xf32, #tpu.memory_space<vmem>>, vector<1x128xf32>
    %4 = vector.broadcast %3 : vector<1x128xf32> to vector<64x128xf32>
    %5 = arith.addf %2, %4 : vector<64x128xf32>
    %c0_5 = arith.constant 0 : index
    %c0_6 = arith.constant 0 : index
    %6 = vector.load %arg4[%c0_5, %c0_6] : memref<64x128xf32, #tpu.memory_space<vmem>>, vector<64x128xf32>
    tpu.vector_store %arg4[%c0_5, %c0_6], %5 {strides = array<i32>} : memref<64x128xf32, #tpu.memory_space<vmem>>, vector<64x128xf32>,
    %c1_i32 = arith.constant 1 : i32
    %7 = arith.cmpi ne, %arg0, %c1_i32 : i32
    %8 = arith.extui %7 : i1 to i32
    %c0_i32 = arith.constant 0 : i32
    %9 = arith.cmpi ne, %8, %c0_i32 : i32
    scf.if %9 {
      %cst_9 = arith.constant dense<0x7F800000> : vector<128xf32>
      %13 = vector.multi_reduction <minimumf>, %5, %cst_9 [0] : vector<64x128xf32> to vector<128xf32>
      %14 = vector.shape_cast %13 : vector<128xf32> to vector<1x128xf32>
      %15 = vector.shape_cast %14 : vector<1x128xf32> to vector<1x1x128xf32>
      %c0_10 = arith.constant 0 : index
      %c0_11 = arith.constant 0 : index
      %c0_12 = arith.constant 0 : index
      %16 = vector.load %arg5[%c0_10, %c0_11, %c0_12] : memref<1x1x128xf32, #tpu.memory_space<vmem>>, vector<1x1x128xf32>
      tpu.vector_store %arg5[%c0_10, %c0_11, %c0_12], %15 {strides = array<i32>} : memref<1x1x128xf32, #tpu.memory_space<vmem>>, vector<1x1x128xf32>,
      %cst_13 = arith.constant dense<0xFF800000> : vector<128xf32>
      %17 = vector.multi_reduction <maximumf>, %5, %cst_13 [0] : vector<64x128xf32> to vector<128xf32>
      %18 = vector.shape_cast %17 : vector<128xf32> to vector<1x128xf32>
      %19 = vector.shape_cast %18 : vector<1x128xf32> to vector<1x1x128xf32>
      %c0_14 = arith.constant 0 : index
      %c0_15 = arith.constant 0 : index
      %c0_16 = arith.constant 0 : index
      %20 = vector.load %arg6[%c0_14, %c0_15, %c0_16] : memref<1x1x128xf32, #tpu.memory_space<vmem>>, vector<1x1x128xf32>
      tpu.vector_store %arg6[%c0_14, %c0_15, %c0_16], %19 {strides = array<i32>} : memref<1x1x128xf32, #tpu.memory_space<vmem>>, vector<1x1x128xf32>,
    } else {
    }
    %c1_i32_7 = arith.constant 1 : i32
    %10 = arith.cmpi eq, %arg0, %c1_i32_7 : i32
    %11 = arith.extui %10 : i1 to i32
    %c0_i32_8 = arith.constant 0 : i32
    %12 = arith.cmpi ne, %11, %c0_i32_8 : i32
    scf.if %12 {
      %13 = tpu.iota {dimensions = array<i32: 0>} : vector<64x1xi32>
      %c64_i32 = arith.constant 64 : i32
      %14 = arith.muli %arg0, %c64_i32 : i32
      %15 = vector.broadcast %14 : i32 to vector<64x1xi32>
      %16 = arith.addi %13, %15 : vector<64x1xi32>
      %c128_i32 = arith.constant 128 : i32
      %17 = vector.broadcast %c128_i32 : i32 to vector<64x1xi32>
      %18 = arith.cmpi slt, %16, %17 : vector<64x1xi32>
      %cst_9 = arith.constant 0x7F800000 : f32
      %19 = vector.shape_cast %18 : vector<64x1xi1> to vector<64x1xi1>
      %20 = vector.broadcast %19 : vector<64x1xi1> to vector<64x128xi1>
      %21 = vector.broadcast %cst_9 : f32 to vector<64x128xf32>
      %22 = arith.select %20, %5, %21 : vector<64x128xi1>, vector<64x128xf32>
      %cst_10 = arith.constant dense<0x7F800000> : vector<128xf32>
      %23 = vector.multi_reduction <minimumf>, %22, %cst_10 [0] : vector<64x128xf32> to vector<128xf32>
      %24 = vector.shape_cast %23 : vector<128xf32> to vector<1x128xf32>
      %25 = vector.shape_cast %24 : vector<1x128xf32> to vector<1x1x128xf32>
      %c0_11 = arith.constant 0 : index
      %c0_12 = arith.constant 0 : index
      %c0_13 = arith.constant 0 : index
      %26 = vector.load %arg5[%c0_11, %c0_12, %c0_13] : memref<1x1x128xf32, #tpu.memory_space<vmem>>, vector<1x1x128xf32>
      tpu.vector_store %arg5[%c0_11, %c0_12, %c0_13], %25 {strides = array<i32>} : memref<1x1x128xf32, #tpu.memory_space<vmem>>, vector<1x1x128xf32>,
      %cst_14 = arith.constant 0xFF800000 : f32
      %27 = vector.shape_cast %18 : vector<64x1xi1> to vector<64x1xi1>
      %28 = vector.broadcast %27 : vector<64x1xi1> to vector<64x128xi1>
      %29 = vector.broadcast %cst_14 : f32 to vector<64x128xf32>
      %30 = arith.select %28, %5, %29 : vector<64x128xi1>, vector<64x128xf32>
      %cst_15 = arith.constant dense<0xFF800000> : vector<128xf32>
      %31 = vector.multi_reduction <maximumf>, %30, %cst_15 [0] : vector<64x128xf32> to vector<128xf32>
      %32 = vector.shape_cast %31 : vector<128xf32> to vector<1x128xf32>
      %33 = vector.shape_cast %32 : vector<1x128xf32> to vector<1x1x128xf32>
      %c0_16 = arith.constant 0 : index
      %c0_17 = arith.constant 0 : index
      %c0_18 = arith.constant 0 : index
      %34 = vector.load %arg6[%c0_16, %c0_17, %c0_18] : memref<1x1x128xf32, #tpu.memory_space<vmem>>, vector<1x1x128xf32>
      tpu.vector_store %arg6[%c0_16, %c0_17, %c0_18], %33 {strides = array<i32>} : memref<1x1x128xf32, #tpu.memory_space<vmem>>, vector<1x1x128xf32>,
    } else {
    }
    return
  }
  func.func @transform_0(%arg0: i32) -> (i32, i32) {
    %c0_i32 = arith.constant 0 : i32
    %c0_i32_0 = arith.constant 0 : i32
    return %arg0, %c0_i32 : i32, i32
  }
  func.func @transform_1(%arg0: i32) -> (i32, i32) {
    %c0_i32 = arith.constant 0 : i32
    %c0_i32_0 = arith.constant 0 : i32
    %c0_i32_1 = arith.constant 0 : i32
    return %c0_i32, %c0_i32_0 : i32, i32
  }
  func.func @transform_2(%arg0: i32) -> (i32, i32) {
    %c0_i32 = arith.constant 0 : i32
    %c0_i32_0 = arith.constant 0 : i32
    %c0_i32_1 = arith.constant 0 : i32
    return %c0_i32, %c0_i32_0 : i32, i32
  }
  func.func @transform_3(%arg0: i32) -> (i32, i32) {
    %c0_i32 = arith.constant 0 : i32
    %c0_i32_0 = arith.constant 0 : i32
    return %arg0, %c0_i32 : i32, i32
  }
  func.func @transform_4(%arg0: i32) -> (i32, i32, i32) {
    %c0_i32 = arith.constant 0 : i32
    %c0_i32_0 = arith.constant 0 : i32
    %c0_i32_1 = arith.constant 0 : i32
    return %arg0, %c0_i32, %c0_i32_0 : i32, i32, i32
  }
  func.func @transform_5(%arg0: i32) -> (i32, i32, i32) {
    %c0_i32 = arith.constant 0 : i32
    %c0_i32_0 = arith.constant 0 : i32
    %c0_i32_1 = arith.constant 0 : i32
    return %arg0, %c0_i32, %c0_i32_0 : i32, i32, i32
  }
}

module attributes {stable_mosaic.version = 11 : i64} {
  func.func @_pad_norm_kernel(%arg0: i32, %arg1: i32, %arg2: memref<2xf32, #tpu.memory_space<smem>>, %arg3: memref<1x16x2048xf32, #tpu.memory_space<vmem>>, %arg4: memref<1x16x32768xf32, #tpu.memory_space<vmem>>) attributes {dimension_semantics = [#tpu.dimension_semantics<parallel>, #tpu.dimension_semantics<parallel>], iteration_bounds = array<i64: 2, 16>, scalar_prefetch = 0 : i64, scratch_operands = 0 : i64, tpu.core_type = #tpu.core_type<tc>, window_params = [{transform_indices = @transform_0, window_bounds = array<i64: 2>}, {transform_indices = @transform_1, window_bounds = array<i64: 1, 16, 2048>}, {transform_indices = @transform_2, window_bounds = array<i64: 1, 16, 32768>}]} {
    %c0 = arith.constant 0 : index
    %0 = memref.load %arg2[%c0] : memref<2xf32, #tpu.memory_space<smem>>
    %c1 = arith.constant 1 : index
    %1 = memref.load %arg2[%c1] : memref<2xf32, #tpu.memory_space<smem>>
    %cst = arith.constant 0.000000e+00 : f32
    %2 = arith.subf %cst, %0 : f32
    %3 = arith.mulf %2, %1 : f32
    %c0_i32 = arith.constant 0 : i32
    %4 = arith.cmpi eq, %arg1, %c0_i32 : i32
    %5 = arith.extui %4 : i1 to i32
    %c0_i32_0 = arith.constant 0 : i32
    %6 = arith.cmpi ne, %5, %c0_i32_0 : i32
    scf.if %6 {
      %c0_3 = arith.constant 0 : index
      %c0_4 = arith.constant 0 : index
      %c0_5 = arith.constant 0 : index
      %10 = vector.load %arg3[%c0_3, %c0_4, %c0_5] : memref<1x16x2048xf32, #tpu.memory_space<vmem>>, vector<1x16x2048xf32>
      %11 = vector.broadcast %0 : f32 to vector<1x16x2048xf32>
      %12 = arith.subf %10, %11 : vector<1x16x2048xf32>
      %13 = vector.broadcast %1 : f32 to vector<1x16x2048xf32>
      %14 = arith.mulf %12, %13 : vector<1x16x2048xf32>
      %c0_6 = arith.constant 0 : index
      %c0_7 = arith.constant 0 : index
      %c0_8 = arith.constant 0 : index
      %15 = vector.load %arg4[%c0_6, %c0_7, %c0_8] : memref<1x16x32768xf32, #tpu.memory_space<vmem>>, vector<1x16x2048xf32>
      tpu.vector_store %arg4[%c0_6, %c0_7, %c0_8], %14 {strides = array<i32>} : memref<1x16x32768xf32, #tpu.memory_space<vmem>>, vector<1x16x2048xf32>,
      %16 = vector.broadcast %3 : f32 to vector<1x16x30720xf32>
      %c0_9 = arith.constant 0 : index
      %c0_10 = arith.constant 0 : index
      %c2048 = arith.constant 2048 : index
      %17 = vector.load %arg4[%c0_9, %c0_10, %c2048] : memref<1x16x32768xf32, #tpu.memory_space<vmem>>, vector<1x16x30720xf32>
      tpu.vector_store %arg4[%c0_9, %c0_10, %c2048], %16 {strides = array<i32>} : memref<1x16x32768xf32, #tpu.memory_space<vmem>>, vector<1x16x30720xf32>,
    } else {
    }
    %c0_i32_1 = arith.constant 0 : i32
    %7 = arith.cmpi sgt, %arg1, %c0_i32_1 : i32
    %8 = arith.extui %7 : i1 to i32
    %c0_i32_2 = arith.constant 0 : i32
    %9 = arith.cmpi ne, %8, %c0_i32_2 : i32
    scf.if %9 {
      %10 = vector.broadcast %3 : f32 to vector<1x16x32768xf32>
      %c0_3 = arith.constant 0 : index
      %c0_4 = arith.constant 0 : index
      %c0_5 = arith.constant 0 : index
      %11 = vector.load %arg4[%c0_3, %c0_4, %c0_5] : memref<1x16x32768xf32, #tpu.memory_space<vmem>>, vector<1x16x32768xf32>
      tpu.vector_store %arg4[%c0_3, %c0_4, %c0_5], %10 {strides = array<i32>} : memref<1x16x32768xf32, #tpu.memory_space<vmem>>, vector<1x16x32768xf32>,
    } else {
    }
    return
  }
  func.func @transform_0(%arg0: i32, %arg1: i32) -> i32 {
    %c0_i32 = arith.constant 0 : i32
    %c0_i32_0 = arith.constant 0 : i32
    return %c0_i32 : i32
  }
  func.func @transform_1(%arg0: i32, %arg1: i32) -> (i32, i32, i32) {
    %c0_i32 = arith.constant 0 : i32
    %c0_i32_0 = arith.constant 0 : i32
    %c0_i32_1 = arith.constant 0 : i32
    return %arg0, %c0_i32, %c0_i32_0 : i32, i32, i32
  }
  func.func @transform_2(%arg0: i32, %arg1: i32) -> (i32, i32, i32) {
    %c0_i32 = arith.constant 0 : i32
    %c0_i32_0 = arith.constant 0 : i32
    return %arg0, %arg1, %c0_i32 : i32, i32, i32
  }
}

module attributes {stable_mosaic.version = 11 : i64} {
  func.func @_pad_norm_kernel(%arg0: i32, %arg1: i32, %arg2: memref<2xf32, #tpu.memory_space<smem>>, %arg3: memref<1x8x1024xf32, #tpu.memory_space<vmem>>, %arg4: memref<1x32x16384xf32, #tpu.memory_space<vmem>>) attributes {dimension_semantics = [#tpu.dimension_semantics<parallel>, #tpu.dimension_semantics<parallel>], iteration_bounds = array<i64: 2, 4>, scalar_prefetch = 0 : i64, scratch_operands = 0 : i64, tpu.core_type = #tpu.core_type<tc>, window_params = [{transform_indices = @transform_0, window_bounds = array<i64: 2>}, {transform_indices = @transform_1, window_bounds = array<i64: 1, 8, 1024>}, {transform_indices = @transform_2, window_bounds = array<i64: 1, 32, 16384>}]} {
    %c0 = arith.constant 0 : index
    %0 = memref.load %arg2[%c0] : memref<2xf32, #tpu.memory_space<smem>>
    %c1 = arith.constant 1 : index
    %1 = memref.load %arg2[%c1] : memref<2xf32, #tpu.memory_space<smem>>
    %cst = arith.constant 0.000000e+00 : f32
    %2 = arith.subf %cst, %0 : f32
    %3 = arith.mulf %2, %1 : f32
    %c0_i32 = arith.constant 0 : i32
    %4 = arith.cmpi eq, %arg1, %c0_i32 : i32
    %5 = arith.extui %4 : i1 to i32
    %c0_i32_0 = arith.constant 0 : i32
    %6 = arith.cmpi ne, %5, %c0_i32_0 : i32
    scf.if %6 {
      %c0_3 = arith.constant 0 : index
      %c0_4 = arith.constant 0 : index
      %c0_5 = arith.constant 0 : index
      %10 = vector.load %arg3[%c0_3, %c0_4, %c0_5] : memref<1x8x1024xf32, #tpu.memory_space<vmem>>, vector<1x8x1024xf32>
      %11 = vector.broadcast %0 : f32 to vector<1x8x1024xf32>
      %12 = arith.subf %10, %11 : vector<1x8x1024xf32>
      %13 = vector.broadcast %1 : f32 to vector<1x8x1024xf32>
      %14 = arith.mulf %12, %13 : vector<1x8x1024xf32>
      %c0_6 = arith.constant 0 : index
      %c0_7 = arith.constant 0 : index
      %c0_8 = arith.constant 0 : index
      %15 = vector.load %arg4[%c0_6, %c0_7, %c0_8] : memref<1x32x16384xf32, #tpu.memory_space<vmem>>, vector<1x8x1024xf32>
      tpu.vector_store %arg4[%c0_6, %c0_7, %c0_8], %14 {strides = array<i32>} : memref<1x32x16384xf32, #tpu.memory_space<vmem>>, vector<1x8x1024xf32>,
      %16 = vector.broadcast %3 : f32 to vector<1x8x15360xf32>
      %c0_9 = arith.constant 0 : index
      %c0_10 = arith.constant 0 : index
      %c1024 = arith.constant 1024 : index
      %17 = vector.load %arg4[%c0_9, %c0_10, %c1024] : memref<1x32x16384xf32, #tpu.memory_space<vmem>>, vector<1x8x15360xf32>
      tpu.vector_store %arg4[%c0_9, %c0_10, %c1024], %16 {strides = array<i32>} : memref<1x32x16384xf32, #tpu.memory_space<vmem>>, vector<1x8x15360xf32>,
      %18 = vector.broadcast %3 : f32 to vector<1x24x16384xf32>
      %c0_11 = arith.constant 0 : index
      %c8 = arith.constant 8 : index
      %c0_12 = arith.constant 0 : index
      %19 = vector.load %arg4[%c0_11, %c8, %c0_12] : memref<1x32x16384xf32, #tpu.memory_space<vmem>>, vector<1x24x16384xf32>
      tpu.vector_store %arg4[%c0_11, %c8, %c0_12], %18 {strides = array<i32>} : memref<1x32x16384xf32, #tpu.memory_space<vmem>>, vector<1x24x16384xf32>,
    } else {
    }
    %c0_i32_1 = arith.constant 0 : i32
    %7 = arith.cmpi sgt, %arg1, %c0_i32_1 : i32
    %8 = arith.extui %7 : i1 to i32
    %c0_i32_2 = arith.constant 0 : i32
    %9 = arith.cmpi ne, %8, %c0_i32_2 : i32
    scf.if %9 {
      %10 = vector.broadcast %3 : f32 to vector<1x32x16384xf32>
      %c0_3 = arith.constant 0 : index
      %c0_4 = arith.constant 0 : index
      %c0_5 = arith.constant 0 : index
      %11 = vector.load %arg4[%c0_3, %c0_4, %c0_5] : memref<1x32x16384xf32, #tpu.memory_space<vmem>>, vector<1x32x16384xf32>
      tpu.vector_store %arg4[%c0_3, %c0_4, %c0_5], %10 {strides = array<i32>} : memref<1x32x16384xf32, #tpu.memory_space<vmem>>, vector<1x32x16384xf32>,
    } else {
    }
    return
  }
  func.func @transform_0(%arg0: i32, %arg1: i32) -> i32 {
    %c0_i32 = arith.constant 0 : i32
    %c0_i32_0 = arith.constant 0 : i32
    return %c0_i32 : i32
  }
  func.func @transform_1(%arg0: i32, %arg1: i32) -> (i32, i32, i32) {
    %c0_i32 = arith.constant 0 : i32
    %c0_i32_0 = arith.constant 0 : i32
    %c0_i32_1 = arith.constant 0 : i32
    return %arg0, %c0_i32, %c0_i32_0 : i32, i32, i32
  }
  func.func @transform_2(%arg0: i32, %arg1: i32) -> (i32, i32, i32) {
    %c0_i32 = arith.constant 0 : i32
    %c0_i32_0 = arith.constant 0 : i32
    return %arg0, %arg1, %c0_i32 : i32, i32, i32
  }
}

module attributes {stable_mosaic.version = 11 : i64} {
  func.func @_img_norm_kernel(%arg0: i32, %arg1: memref<6xf32, #tpu.memory_space<smem>>, %arg2: memref<6xf32, #tpu.memory_space<smem>>, %arg3: memref<1x1x4096xf32, #tpu.memory_space<vmem>>, %arg4: memref<1x1x4096xf32, #tpu.memory_space<vmem>>) attributes {dimension_semantics = [#tpu.dimension_semantics<parallel>], iteration_bounds = array<i64: 6>, scalar_prefetch = 0 : i64, scratch_operands = 0 : i64, tpu.core_type = #tpu.core_type<tc>, window_params = [{transform_indices = @transform_0, window_bounds = array<i64: 6>}, {transform_indices = @transform_1, window_bounds = array<i64: 6>}, {transform_indices = @transform_2, window_bounds = array<i64: 1, 1, 4096>}, {transform_indices = @transform_3, window_bounds = array<i64: 1, 1, 4096>}]} {
    %c0 = arith.constant 0 : index
    %c0_0 = arith.constant 0 : index
    %c0_1 = arith.constant 0 : index
    %0 = vector.load %arg3[%c0, %c0_0, %c0_1] : memref<1x1x4096xf32, #tpu.memory_space<vmem>>, vector<1x1x4096xf32>
    %1 = arith.index_cast %arg0 : i32 to index
    %2 = memref.load %arg1[%1] : memref<6xf32, #tpu.memory_space<smem>>
    %3 = vector.broadcast %2 : f32 to vector<1x1x4096xf32>
    %4 = arith.subf %0, %3 : vector<1x1x4096xf32>
    %5 = arith.index_cast %arg0 : i32 to index
    %6 = memref.load %arg2[%5] : memref<6xf32, #tpu.memory_space<smem>>
    %7 = vector.broadcast %6 : f32 to vector<1x1x4096xf32>
    %8 = arith.mulf %4, %7 : vector<1x1x4096xf32>
    %c0_2 = arith.constant 0 : index
    %c0_3 = arith.constant 0 : index
    %c0_4 = arith.constant 0 : index
    %9 = vector.load %arg4[%c0_2, %c0_3, %c0_4] : memref<1x1x4096xf32, #tpu.memory_space<vmem>>, vector<1x1x4096xf32>
    tpu.vector_store %arg4[%c0_2, %c0_3, %c0_4], %8 {strides = array<i32>} : memref<1x1x4096xf32, #tpu.memory_space<vmem>>, vector<1x1x4096xf32>,
    return
  }
  func.func @transform_0(%arg0: i32) -> i32 {
    %c0_i32 = arith.constant 0 : i32
    %c0_i32_0 = arith.constant 0 : i32
    return %c0_i32 : i32
  }
  func.func @transform_1(%arg0: i32) -> i32 {
    %c0_i32 = arith.constant 0 : i32
    %c0_i32_0 = arith.constant 0 : i32
    return %c0_i32 : i32
  }
  func.func @transform_2(%arg0: i32) -> (i32, i32, i32) {
    %c0_i32 = arith.constant 0 : i32
    %c0_i32_0 = arith.constant 0 : i32
    %c0_i32_1 = arith.constant 0 : i32
    return %arg0, %c0_i32, %c0_i32_0 : i32, i32, i32
  }
  func.func @transform_3(%arg0: i32) -> (i32, i32, i32) {
    %c0_i32 = arith.constant 0 : i32
    %c0_i32_0 = arith.constant 0 : i32
    %c0_i32_1 = arith.constant 0 : i32
    return %arg0, %c0_i32, %c0_i32_0 : i32, i32, i32
  }
}

</mosaic_0001>

<llo_original>
// kernel: generalized_rcnn_forward.6
$region0: #{generalized_rcnn_forward.6}
  #allocation0 [shape = 'u32[]', space=smem, size = 0x4, offset = 0x4, fixed_abs, tag = 'smem constant byte address 0x4 - core index']
  #allocation1 [shape = 'u32[72,128]{1,0:T(1,128)}', space=vmem, size = 0x9000, scoped, tag = 'internal scratch']
  %s0 = inlined_call_operand.vmem [shape: bf16[512,48], index: 0, kind: input, shape index: {}]
  %s1 = inlined_call_operand.vmem [shape: bf16[48,128], index: 1, kind: input, shape index: {}]
  %s2 = inlined_call_operand.vmem [shape: f32[1,128], index: 2, kind: input, shape index: {}]
  %s3 = inlined_call_operand.vmem [shape: f32[512,128], index: 3, kind: output, shape index: {0}]
  %s4 = inlined_call_operand.vmem [shape: f32[2,1,128], index: 4, kind: output, shape index: {1}]
  %s5 = inlined_call_operand.vmem [shape: f32[2,1,128], index: 5, kind: output, shape index: {2}]
  %6 = xla_tuple %s3, %s4, %s5
  %s7 = sld [smem:[#allocation0]]
  $region69: #{generalized_rcnn_forward.6} parent=0
    _
  %s9 = ssub.s32 1, %s7
  %s10 = scalar_select 0, %s9, %s7
  loop: start=0, step=1, limit=4
  $region2: #{generalized_rcnn_forward.6} parent=0 // loop_pre_header
    _
  $region3: #{generalized_rcnn_forward.6} parent=0 // loop_header
    %s12 = sphi 0, %s16
    %p13 = scmp.ge.s32.totalorder %s12, 4
    %s22 = sphi 0, %s24
    %s25 = sphi 0, %s22
    %s26 = sphi 0, %s25
    %s42 = sphi 0, %s26
    %s46 = sphi 0, %s46
    %s48 = sphi 0, %s46
    %s49 = sphi 0, %s48
    %s63 = sphi 0, %s49
    %s67 = sphi 0, %s67
    %s69 = sphi 0, %s67
    %s70 = sphi 0, %s69
    %s84 = sphi 0, %s70
    %s90 = sphi 0, %s92
    %s93 = sphi 0, %s90
    %s94 = sphi 0, %s93
    %s110 = sphi 0, %s94
    %s116 = sphi 0, %s118
    %s119 = sphi 0, %s116
    %s120 = sphi 0, %s119
    %s136 = sphi 0, %s120
    %s142 = sphi 0, %s144
    %s145 = sphi 0, %s142
    %s146 = sphi 0, %s145
    %s162 = sphi 0, %s146
  $region4: #{generalized_rcnn_forward.6} parent=0 // loop_header_branch
    %15 = sbr.rel (%p13) target = $region8
  $region5: #{generalized_rcnn_forward.6} parent=0 // loop_body
    %s17 = ssub.s32 %s12, 1
    %s18 = ssub.s32 %s12, 2
    %s19 = sadd.s32 %s12, 1
    %s20 = ssub.s32 %s12, %s19
    %p21 = scmp.eq.s32.totalorder %s20, 0
    %s23 = sadd.s32 %s22, 1
    %s24 = scalar_select %p21, %s22, %s23
    %p27 = pneg %p21
    %p28 = scmp.eq.s32.totalorder %s12, 1
    %p29 = por %p27, %p28
    %p30 = scmp.ne.s32.totalorder %s22, %s25
    %p31 = scmp.eq.s32.totalorder %s12, 0
    %p32 = por %p30, %p31
    %p33 = scmp.ne.s32.totalorder %s22, %s25
    %p34 = scmp.eq.s32.totalorder %s17, 1
    %p35 = por %p33, %p34
    %p36 = scmp.ne.s32.totalorder %s25, %s26
    %p37 = scmp.eq.s32.totalorder %s17, 0
    %p38 = por %p36, %p37
    %p39 = scmp.ne.s32.totalorder %s25, %s26
    %p40 = scmp.eq.s32.totalorder %s18, 1
    %p41 = por %p39, %p40
    %p43 = scmp.ne.s32.totalorder %s26, %s42
    %p44 = scmp.eq.s32.totalorder %s18, 0
    %p45 = por %p43, %p44
    %s47 = sadd.s32 %s46, 1
    %p50 = scmp.eq.s32.totalorder %s12, 1
    %p51 = scmp.ne.s32.totalorder %s46, %s48
    %p52 = scmp.eq.s32.totalorder %s12, 0
    %p53 = por %p51, %p52
    %p54 = scmp.ne.s32.totalorder %s46, %s48
    %p55 = scmp.eq.s32.totalorder %s17, 1
    %p56 = por %p54, %p55
    %p57 = scmp.ne.s32.totalorder %s48, %s49
    %p58 = scmp.eq.s32.totalorder %s17, 0
    %p59 = por %p57, %p58
    %p60 = scmp.ne.s32.totalorder %s48, %s49
    %p61 = scmp.eq.s32.totalorder %s18, 1
    %p62 = por %p60, %p61
    %p64 = scmp.ne.s32.totalorder %s49, %s63
    %p65 = scmp.eq.s32.totalorder %s18, 0
    %p66 = por %p64, %p65
    %s68 = sadd.s32 %s67, 1
    %p71 = scmp.eq.s32.totalorder %s12, 1
    %p72 = scmp.ne.s32.totalorder %s67, %s69
    %p73 = scmp.eq.s32.totalorder %s12, 0
    %p74 = por %p72, %p73
    %p75 = scmp.ne.s32.totalorder %s67, %s69
    %p76 = scmp.eq.s32.totalorder %s17, 1
    %p77 = por %p75, %p76
    %p78 = scmp.ne.s32.totalorder %s69, %s70
    %p79 = scmp.eq.s32.totalorder %s17, 0
    %p80 = por %p78, %p79
    %p81 = scmp.ne.s32.totalorder %s69, %s70
    %p82 = scmp.eq.s32.totalorder %s18, 1
    %p83 = por %p81, %p82
    %p85 = scmp.ne.s32.totalorder %s70, %s84
    %p86 = scmp.eq.s32.totalorder %s18, 0
    %p87 = por %p85, %p86
    %s88 = ssub.s32 %s12, %s19
    %p89 = scmp.eq.s32.totalorder %s88, 0
    %s91 = sadd.s32 %s90, 1
    %s92 = scalar_select %p89, %s90, %s91
    %p95 = pneg %p89
    %p96 = scmp.eq.s32.totalorder %s12, 1
    %p97 = por %p95, %p96
    %p98 = scmp.ne.s32.totalorder %s90, %s93
    %p99 = scmp.eq.s32.totalorder %s12, 0
    %p100 = por %p98, %p99
    %p101 = scmp.ne.s32.totalorder %s90, %s93
    %p102 = scmp.eq.s32.totalorder %s17, 1
    %p103 = por %p101, %p102
    %p104 = scmp.ne.s32.totalorder %s93, %s94
    %p105 = scmp.eq.s32.totalorder %s17, 0
    %p106 = por %p104, %p105
    %p107 = scmp.ne.s32.totalorder %s93, %s94
    %p108 = scmp.eq.s32.totalorder %s18, 1
    %p109 = por %p107, %p108
    %p111 = scmp.ne.s32.totalorder %s94, %s110
    %p112 = scmp.eq.s32.totalorder %s18, 0
    %p113 = por %p111, %p112
    %s114 = ssub.s32 %s12, %s19
    %p115 = scmp.eq.s32.totalorder %s114, 0
    %s117 = sadd.s32 %s116, 1
    %s118 = scalar_select %p115, %s116, %s117
    %p121 = pneg %p115
    %p122 = scmp.eq.s32.totalorder %s12, 1
    %p123 = por %p121, %p122
    %p124 = scmp.ne.s32.totalorder %s116, %s119
    %p125 = scmp.eq.s32.totalorder %s12, 0
    %p126 = por %p124, %p125
    %p127 = scmp.ne.s32.totalorder %s116, %s119
    %p128 = scmp.eq.s32.totalorder %s17, 1
    %p129 = por %p127, %p128
    %p130 = scmp.ne.s32.totalorder %s119, %s120
    %p131 = scmp.eq.s32.totalorder %s17, 0
    %p132 = por %p130, %p131
    %p133 = scmp.ne.s32.totalorder %s119, %s120
    %p134 = scmp.eq.s32.totalorder %s18, 1
    %p135 = por %p133, %p134
    %p137 = scmp.ne.s32.totalorder %s120, %s136
    %p138 = scmp.eq.s32.totalorder %s18, 0
    %p139 = por %p137, %p138
    %s140 = ssub.s32 %s12, %s19
    %p141 = scmp.eq.s32.totalorder %s140, 0
    %s143 = sadd.s32 %s142, 1
    %s144 = scalar_select %p141, %s142, %s143
    %p147 = pneg %p141
    %p148 = scmp.eq.s32.totalorder %s12, 1
    %p149 = por %p147, %p148
    %p150 = scmp.ne.s32.totalorder %s142, %s145
    %p151 = scmp.eq.s32.totalorder %s12, 0
    %p152 = por %p150, %p151
    %p153 = scmp.ne.s32.totalorder %s142, %s145
    %p154 = scmp.eq.s32.totalorder %s17, 1
    %p155 = por %p153, %p154
    %p156 = scmp.ne.s32.totalorder %s145, %s146
    %p157 = scmp.eq.s32.totalorder %s17, 0
    %p158 = por %p156, %p157
    %p159 = scmp.ne.s32.totalorder %s145, %s146
    %p160 = scmp.eq.s32.totalorder %s18, 1
    %p161 = por %p159, %p160
    %p163 = scmp.ne.s32.totalorder %s146, %s162
    %p164 = scmp.eq.s32.totalorder %s18, 0
    %p165 = por %p163, %p164
    %p166 = scmp.le.s32.totalorder 1, %s12
    %p167 = scmp.lt.s32.totalorder %s12, 3
    %p168 = pnand %p166, %p167
    %p169 = pneg %p168
    // Predicated region
    $region9: #{generalized_rcnn_forward.6} parent=5 // pred_check
      _
    $region10: #{generalized_rcnn_forward.6} parent=5 // pred_check_branch
      %171 = sbr.rel (%p168) target = $region12
    $region11: #{generalized_rcnn_forward.6} parent=5 // pred_region
      %s172 = ssub.s32 %s12, 1
      // Predicated region
      $region13: #{generalized_rcnn_forward.6} parent=11 // pred_check
        %p173 = pneg %p59
      $region14: #{generalized_rcnn_forward.6} parent=11 // pred_check_branch
        %175 = sbr.rel (%p173) target = $region16
      $region15: #{generalized_rcnn_forward.6} parent=11 // pred_region
        _
      $region16: #{generalized_rcnn_forward.6} parent=11 // pred_fallthru
        _
      // Predicated region
      $region17: #{generalized_rcnn_forward.6} parent=11 // pred_check
        %p176 = pneg %p80
      $region18: #{generalized_rcnn_forward.6} parent=11 // pred_check_branch
        %178 = sbr.rel (%p176) target = $region20
      $region19: #{generalized_rcnn_forward.6} parent=11 // pred_region
        _
      $region20: #{generalized_rcnn_forward.6} parent=11 // pred_fallthru
        _
    $region12: #{generalized_rcnn_forward.6} parent=5 // pred_fallthru
      _
    %p179 = scmp.lt.s32.totalorder %s12, 2
    // Predicated region
    $region21: #{generalized_rcnn_forward.6} parent=5 // pred_check
      %p180 = pneg %p179
    $region22: #{generalized_rcnn_forward.6} parent=5 // pred_check_branch
      %182 = sbr.rel (%p180) target = $region24
    $region23: #{generalized_rcnn_forward.6} parent=5 // pred_region
      // Predicated region
      $region25: #{generalized_rcnn_forward.6} parent=23 // pred_check
        %p183 = pneg %p32
      $region26: #{generalized_rcnn_forward.6} parent=23 // pred_check_branch
        %185 = sbr.rel (%p183) target = $region28
      $region27: #{generalized_rcnn_forward.6} parent=23 // pred_region
        %s186 = smul.u32 32, %s12
        %p187 = scmp.lt.s32.totalorder %s186, 63
        %s188 = scalar_select %p187, %s186, 63
        %s189 = smul.addr %s188, 4
        %s190 = scalar_lea.vmem %s0, %s189
        %s191 = smul.u32 32, %s12
      $region28: #{generalized_rcnn_forward.6} parent=23 // pred_fallthru
        _
    $region24: #{generalized_rcnn_forward.6} parent=5 // pred_fallthru
      _
    %p192 = scmp.le.s32.totalorder 1, %s12
    %p193 = scmp.lt.s32.totalorder %s12, 3
    %p194 = pnand %p192, %p193
    %p195 = pneg %p194
    // Predicated region
    $region29: #{generalized_rcnn_forward.6} parent=5 // pred_check
      _
    $region30: #{generalized_rcnn_forward.6} parent=5 // pred_check_branch
      %197 = sbr.rel (%p194) target = $region32
    $region31: #{generalized_rcnn_forward.6} parent=5 // pred_region
      %s198 = ssub.s32 %s12, 1
      %s199 = smul.u32 32, %s17
      %p200 = scmp.lt.s32.totalorder %s199, 63
      %s201 = scalar_select %p200, %s199, 63
      %s202 = smul.addr %s201, 4
      %s203 = scalar_lea.vmem %s0, %s202
      %p204 = pneg %p38
      %p205 = pneg %p35
      %p206 = pneg %p59
      %p207 = pneg %p56
      %p208 = pneg %p80
      %p209 = pneg %p77
      %p210 = pneg %p106
      %p211 = pneg %p103
      %s212 = smul.u32 32, %s17
      %p213 = scmp.lt.s32.totalorder %s212, 63
      %s214 = scalar_select %p213, %s212, 63
      %s215 = smul.addr %s214, 8
      %s216 = scalar_lea.vmem %s3, %s215
      %p217 = pneg %p132
      %p218 = pneg %p129
      %p219 = scmp.lt.s32.totalorder %s17, 1
      %s220 = scalar_select %p219, %s17, 1
      %s221 = scalar_lea.vmem %s4, %s220
      %p222 = pneg %p158
      %p223 = pneg %p155
      %p224 = scmp.lt.s32.totalorder %s17, 1
      %s225 = scalar_select %p224, %s17, 1
      %s226 = scalar_lea.vmem %s5, %s225
      %s227 = smul.u32 32, %s17
      %p228 = scmp.lt.s32.totalorder %s227, 63
      %s229 = scalar_select %p228, %s227, 63
      %s230 = smul.addr %s229, 4
      %s231 = scalar_lea.vmem %s0, %s230
      %s232 = smul.u32 32, %s17
      %s233 = smul.u32 32, %s17
      %p234 = scmp.lt.s32.totalorder %s233, 63
      %s235 = scalar_select %p234, %s233, 63
      %s236 = smul.addr %s235, 8
      %s237 = scalar_lea.vmem %s3, %s236
      %s238 = smul.u32 32, %s17
      %p239 = scmp.lt.s32.totalorder %s17, 1
      %s240 = scalar_select %p239, %s17, 1
      %s241 = scalar_lea.vmem %s4, %s240
      %p242 = scmp.lt.s32.totalorder %s17, 1
      %s243 = scalar_select %p242, %s17, 1
      %s244 = scalar_lea.vmem %s5, %s243
      %v246 = vld [vmem:[%s231] sm:$0xf]
      %v247 = vld [vmem:[%s231 + $0x4] sm:$0xf]
      %v248 = vld [vmem:[%s231 + $0x8] sm:$0xf]
      %v249 = vld [vmem:[%s231 + $0xc] sm:$0xf]
      %v250 = vld [vmem:[%s231 + $0x10] sm:$0xf]
      %v251 = vld [vmem:[%s231 + $0x14] sm:$0xf]
      %v252 = vld [vmem:[%s231 + $0x18] sm:$0xf]
      %v253 = vld [vmem:[%s231 + $0x1c] sm:$0xf]
      %v254 = vld [vmem:[%s231 + $0x20] sm:$0xf]
      %v255 = vld [vmem:[%s231 + $0x24] sm:$0xf]
      %v256 = vld [vmem:[%s231 + $0x28] sm:$0xf]
      %v257 = vld [vmem:[%s231 + $0x2c] sm:$0xf]
      %v258 = vld [vmem:[%s231 + $0x30] sm:$0xf]
      %v259 = vld [vmem:[%s231 + $0x34] sm:$0xf]
      %v260 = vld [vmem:[%s231 + $0x38] sm:$0xf]
      %v261 = vld [vmem:[%s231 + $0x3c] sm:$0xf]
      %v262 = vld [vmem:[%s231 + $0x40] sm:$0xf]
      %v263 = vld [vmem:[%s231 + $0x44] sm:$0xf]
      %v264 = vld [vmem:[%s231 + $0x48] sm:$0xf]
      %v265 = vld [vmem:[%s231 + $0x4c] sm:$0xf]
      %v266 = vld [vmem:[%s231 + $0x50] sm:$0xf]
      %v267 = vld [vmem:[%s231 + $0x54] sm:$0xf]
      %v268 = vld [vmem:[%s231 + $0x58] sm:$0xf]
      %v269 = vld [vmem:[%s231 + $0x5c] sm:$0xf]
      %v270 = vld [vmem:[%s231 + $0x60] sm:$0xf]
      %v271 = vld [vmem:[%s231 + $0x64] sm:$0xf]
      %v272 = vld [vmem:[%s231 + $0x68] sm:$0xf]
      %v273 = vld [vmem:[%s231 + $0x6c] sm:$0xf]
      %v274 = vld [vmem:[%s231 + $0x70] sm:$0xf]
      %v275 = vld [vmem:[%s231 + $0x74] sm:$0xf]
      %v276 = vld [vmem:[%s231 + $0x78] sm:$0xf]
      %v277 = vld [vmem:[%s231 + $0x7c] sm:$0xf]
      %v278 = vld [vmem:[%s1] sm:$0xf]
      %v279 = vld [vmem:[%s1 + $0x4] sm:$0xf]
      %v280 = vld [vmem:[%s1 + $0x8] sm:$0xf]
      %v281 = vld [vmem:[%s1 + $0xc] sm:$0xf]
      %v282 = vld [vmem:[%s1 + $0x10] sm:$0xf]
      %v283 = vld [vmem:[%s1 + $0x14] sm:$0xf]
      %v284 = vld [vmem:[%s2] sm:$0x1]
      %v286 = vperm.slane %v284, 0
      %v320 = vunpack.c.l.b16 %v246
      %v321 = vunpack.c.l.b16 %v247
      %v322 = vunpack.c.l.b16 %v248
      %v323 = vunpack.c.l.b16 %v249
      %v324 = vunpack.c.l.b16 %v250
      %v325 = vunpack.c.l.b16 %v251
      %v326 = vunpack.c.l.b16 %v252
      %v327 = vunpack.c.l.b16 %v253
      %v328 = vunpack.c.l.b16 %v254
      %v329 = vunpack.c.l.b16 %v255
      %v330 = vunpack.c.l.b16 %v256
      %v331 = vunpack.c.l.b16 %v257
      %v332 = vunpack.c.l.b16 %v258
      %v333 = vunpack.c.l.b16 %v259
      %v334 = vunpack.c.l.b16 %v260
      %v335 = vunpack.c.l.b16 %v261
      %v336 = vunpack.c.l.b16 %v262
      %v337 = vunpack.c.l.b16 %v263
      %v338 = vunpack.c.l.b16 %v264
      %v339 = vunpack.c.l.b16 %v265
      %v340 = vunpack.c.l.b16 %v266
      %v341 = vunpack.c.l.b16 %v267
      %v342 = vunpack.c.l.b16 %v268
      %v343 = vunpack.c.l.b16 %v269
      %v344 = vunpack.c.l.b16 %v270
      %v345 = vunpack.c.l.b16 %v271
      %v346 = vunpack.c.l.b16 %v272
      %v347 = vunpack.c.l.b16 %v273
      %v348 = vunpack.c.l.b16 %v274
      %v349 = vunpack.c.l.b16 %v275
      %v350 = vunpack.c.l.b16 %v276
      %v351 = vunpack.c.l.b16 %v277
      %v352 = vpack.c.b16 %v321, %v320
      %v353 = vpack.c.b16 %v323, %v322
      %v354 = vpack.c.b16 %v325, %v324
      %v355 = vpack.c.b16 %v327, %v326
      %v356 = vpack.c.b16 %v329, %v328
      %v357 = vpack.c.b16 %v331, %v330
      %v358 = vpack.c.b16 %v333, %v332
      %v359 = vpack.c.b16 %v335, %v334
      %v360 = vpack.c.b16 %v337, %v336
      %v361 = vpack.c.b16 %v339, %v338
      %v362 = vpack.c.b16 %v341, %v340
      %v363 = vpack.c.b16 %v343, %v342
      %v364 = vpack.c.b16 %v345, %v344
      %v365 = vpack.c.b16 %v347, %v346
      %v366 = vpack.c.b16 %v349, %v348
      %v367 = vpack.c.b16 %v351, %v350
      %v374 = vunpack.c.l.b16 %v278
      %v375 = vunpack.c.l.b16 %v279
      %v376 = vunpack.c.l.b16 %v280
      %v377 = vunpack.c.l.b16 %v281
      %v378 = vunpack.c.l.b16 %v282
      %v379 = vunpack.c.l.b16 %v283
      %v380 = vpack.c.b16 %v375, %v374
      %v381 = vpack.c.b16 %v377, %v376
      %v382 = vpack.c.b16 %v379, %v378
      %vm386 = vcmask 392192
      %v388 = vsel %vm386, %v352, 0
      %v391 = vsel %vm386, %v353, 0
      %v394 = vsel %vm386, %v354, 0
      %v397 = vsel %vm386, %v355, 0
      %v400 = vsel %vm386, %v356, 0
      %v403 = vsel %vm386, %v357, 0
      %v406 = vsel %vm386, %v358, 0
      %v409 = vsel %vm386, %v359, 0
      %v412 = vsel %vm386, %v360, 0
      %v415 = vsel %vm386, %v361, 0
      %v418 = vsel %vm386, %v362, 0
      %v421 = vsel %vm386, %v363, 0
      %v424 = vsel %vm386, %v364, 0
      %v427 = vsel %vm386, %v365, 0
      %v430 = vsel %vm386, %v366, 0
      %v433 = vsel %vm386, %v367, 0
      %435 = vmatpush.bf16.msra.mxu0 0
      %436 = vmatpush.bf16.msra.mxu0 0
      %437 = vmatpush.bf16.msra.mxu0 0
      %438 = vmatpush.bf16.msra.mxu0 0
      %439 = vmatpush.bf16.msra.mxu0 0
      %440 = vmatpush.bf16.msra.mxu0 %v382
      %441 = vmatpush.bf16.msra.mxu0 %v381
      %442 = vmatpush.bf16.msra.mxu0 %v380
      %443 = vmatmul.bf16.gmra.mxu0 %v388
      %v444 = vpop.f32.mrf.mxu0
      %v445 = vadd.f32 %v286, %v444
      %v446 = vpop.f32.mrf.mxu0
      %v447 = vadd.f32 %v286, %v446
      %448 = vmatmul.bf16.gmra.mxu0 %v391
      %v449 = vpop.f32.mrf.mxu0
      %v450 = vadd.f32 %v286, %v449
      %v451 = vpop.f32.mrf.mxu0
      %v452 = vadd.f32 %v286, %v451
      %453 = vmatmul.bf16.gmra.mxu0 %v394
      %v454 = vpop.f32.mrf.mxu0
      %v455 = vadd.f32 %v286, %v454
      %v456 = vpop.f32.mrf.mxu0
      %v457 = vadd.f32 %v286, %v456
      %458 = vmatmul.bf16.gmra.mxu0 %v397
      %v459 = vpop.f32.mrf.mxu0
      %v460 = vadd.f32 %v286, %v459
      %v461 = vpop.f32.mrf.mxu0
      %v462 = vadd.f32 %v286, %v461
      %463 = vmatmul.bf16.gmra.mxu0 %v400
      %v464 = vpop.f32.mrf.mxu0
      %v465 = vadd.f32 %v286, %v464
      %v466 = vpop.f32.mrf.mxu0
      %v467 = vadd.f32 %v286, %v466
      %468 = vmatmul.bf16.gmra.mxu0 %v403
      %v469 = vpop.f32.mrf.mxu0
      %v470 = vadd.f32 %v286, %v469
      %v471 = vpop.f32.mrf.mxu0
      %v472 = vadd.f32 %v286, %v471
      %473 = vmatmul.bf16.gmra.mxu0 %v406
      %v474 = vpop.f32.mrf.mxu0
      %v475 = vadd.f32 %v286, %v474
      %v476 = vpop.f32.mrf.mxu0
      %v477 = vadd.f32 %v286, %v476
      %478 = vmatmul.bf16.gmra.mxu0 %v409
      %v479 = vpop.f32.mrf.mxu0
      %v480 = vadd.f32 %v286, %v479
      %v481 = vpop.f32.mrf.mxu0
      %v482 = vadd.f32 %v286, %v481
      %483 = vmatmul.bf16.gmra.mxu0 %v412
      %v484 = vpop.f32.mrf.mxu0
      %v485 = vadd.f32 %v286, %v484
      %v486 = vpop.f32.mrf.mxu0
      %v487 = vadd.f32 %v286, %v486
      %488 = vmatmul.bf16.gmra.mxu0 %v415
      %v489 = vpop.f32.mrf.mxu0
      %v490 = vadd.f32 %v286, %v489
      %v491 = vpop.f32.mrf.mxu0
      %v492 = vadd.f32 %v286, %v491
      %493 = vmatmul.bf16.gmra.mxu0 %v418
      %v494 = vpop.f32.mrf.mxu0
      %v495 = vadd.f32 %v286, %v494
      %v496 = vpop.f32.mrf.mxu0
      %v497 = vadd.f32 %v286, %v496
      %498 = vmatmul.bf16.gmra.mxu0 %v421
      %v499 = vpop.f32.mrf.mxu0
      %v500 = vadd.f32 %v286, %v499
      %v501 = vpop.f32.mrf.mxu0
      %v502 = vadd.f32 %v286, %v501
      %503 = vmatmul.bf16.gmra.mxu0 %v424
      %v504 = vpop.f32.mrf.mxu0
      %v505 = vadd.f32 %v286, %v504
      %v506 = vpop.f32.mrf.mxu0
      %v507 = vadd.f32 %v286, %v506
      %508 = vmatmul.bf16.gmra.mxu0 %v427
      %v509 = vpop.f32.mrf.mxu0
      %v510 = vadd.f32 %v286, %v509
      %v511 = vpop.f32.mrf.mxu0
      %v512 = vadd.f32 %v286, %v511
      %513 = vmatmul.bf16.gmra.mxu0 %v430
      %v514 = vpop.f32.mrf.mxu0
      %v515 = vadd.f32 %v286, %v514
      %v516 = vpop.f32.mrf.mxu0
      %v517 = vadd.f32 %v286, %v516
      %518 = vmatmul.bf16.gmra.mxu0 %v433
      %v519 = vpop.f32.mrf.mxu0
      %v520 = vadd.f32 %v286, %v519
      %v521 = vpop.f32.mrf.mxu0
      %v522 = vadd.f32 %v286, %v521
      %523 = vdwg.mxu0
      %524 = vst [vmem:[%s237] sm:$0xff] %v445
      %525 = vst [vmem:[%s237 + $0x8] sm:$0xff] %v447
      %526 = vst [vmem:[%s237 + $0x10] sm:$0xff] %v450
      %527 = vst [vmem:[%s237 + $0x18] sm:$0xff] %v452
      %528 = vst [vmem:[%s237 + $0x20] sm:$0xff] %v455
      %529 = vst [vmem:[%s237 + $0x28] sm:$0xff] %v457
      %530 = vst [vmem:[%s237 + $0x30] sm:$0xff] %v460
      %531 = vst [vmem:[%s237 + $0x38] sm:$0xff] %v462
      %532 = vst [vmem:[%s237 + $0x40] sm:$0xff] %v465
      %533 = vst [vmem:[%s237 + $0x48] sm:$0xff] %v467
      %534 = vst [vmem:[%s237 + $0x50] sm:$0xff] %v470
      %535 = vst [vmem:[%s237 + $0x58] sm:$0xff] %v472
      %536 = vst [vmem:[%s237 + $0x60] sm:$0xff] %v475
      %537 = vst [vmem:[%s237 + $0x68] sm:$0xff] %v477
      %538 = vst [vmem:[%s237 + $0x70] sm:$0xff] %v480
      %539 = vst [vmem:[%s237 + $0x78] sm:$0xff] %v482
      %540 = vst [vmem:[%s237 + $0x80] sm:$0xff] %v485
      %541 = vst [vmem:[%s237 + $0x88] sm:$0xff] %v487
      %542 = vst [vmem:[%s237 + $0x90] sm:$0xff] %v490
      %543 = vst [vmem:[%s237 + $0x98] sm:$0xff] %v492
      %544 = vst [vmem:[%s237 + $0xa0] sm:$0xff] %v495
      %545 = vst [vmem:[%s237 + $0xa8] sm:$0xff] %v497
      %546 = vst [vmem:[%s237 + $0xb0] sm:$0xff] %v500
      %547 = vst [vmem:[%s237 + $0xb8] sm:$0xff] %v502
      %548 = vst [vmem:[%s237 + $0xc0] sm:$0xff] %v505
      %549 = vst [vmem:[%s237 + $0xc8] sm:$0xff] %v507
      %550 = vst [vmem:[%s237 + $0xd0] sm:$0xff] %v510
      %551 = vst [vmem:[%s237 + $0xd8] sm:$0xff] %v512
      %552 = vst [vmem:[%s237 + $0xe0] sm:$0xff] %v515
      %553 = vst [vmem:[%s237 + $0xe8] sm:$0xff] %v517
      %554 = vst [vmem:[%s237 + $0xf0] sm:$0xff] %v520
      %555 = vst [vmem:[%s237 + $0xf8] sm:$0xff] %v522
      %p556 = scmp.ne.s32.totalorder %s17, 1
      // Predicated region
      $region33: #{generalized_rcnn_forward.6} parent=31 // pred_check
        %p557 = pneg %p556
      $region34: #{generalized_rcnn_forward.6} parent=31 // pred_check_branch
        %559 = sbr.rel (%p557) target = $region36
      $region35: #{generalized_rcnn_forward.6} parent=31 // pred_region
        %v560 = vmin.f32 %v445, %v455
        %v561 = vmin.f32 %v447, %v457
        %v562 = vmin.f32 %v450, %v460
        %v563 = vmin.f32 %v452, %v462
        %v564 = vmin.f32 %v560, %v465
        %v565 = vmin.f32 %v561, %v467
        %v566 = vmin.f32 %v562, %v470
        %v567 = vmin.f32 %v563, %v472
        %v568 = vmin.f32 %v564, %v475
        %v569 = vmin.f32 %v565, %v477
        %v570 = vmin.f32 %v566, %v480
        %v571 = vmin.f32 %v567, %v482
        %v572 = vmin.f32 %v568, %v485
        %v573 = vmin.f32 %v569, %v487
        %v574 = vmin.f32 %v570, %v490
        %v575 = vmin.f32 %v571, %v492
        %v576 = vmin.f32 %v572, %v495
        %v577 = vmin.f32 %v573, %v497
        %v578 = vmin.f32 %v574, %v500
        %v579 = vmin.f32 %v575, %v502
        %v580 = vmin.f32 %v576, %v505
        %v581 = vmin.f32 %v577, %v507
        %v582 = vmin.f32 %v578, %v510
        %v583 = vmin.f32 %v579, %v512
        %v584 = vmin.f32 %v580, %v515
        %v585 = vmin.f32 %v581, %v517
        %v586 = vmin.f32 %v582, %v520
        %v587 = vmin.f32 %v583, %v522
        %v588 = vmin.f32 %v584, %v585
        %v589 = vmin.f32 %v586, %v587
        %v590 = vmin.f32 %v588, %v589
        %v591 = vrot.slane %v590, 4
        %v592 = vmin.f32 %v590, %v591
        %v593 = vrot.slane %v592, 2
        %v594 = vmin.f32 %v592, %v593
        %v595 = vrot.slane %v594, 1
        %v596 = vmin.f32 %v594, %v595
        %597 = vst [vmem:[%s241] sm:$0x1] %v596
        %v598 = vmax.f32 %v445, %v455
        %v599 = vmax.f32 %v447, %v457
        %v600 = vmax.f32 %v450, %v460
        %v601 = vmax.f32 %v452, %v462
        %v602 = vmax.f32 %v598, %v465
        %v603 = vmax.f32 %v599, %v467
        %v604 = vmax.f32 %v600, %v470
        %v605 = vmax.f32 %v601, %v472
        %v606 = vmax.f32 %v602, %v475
        %v607 = vmax.f32 %v603, %v477
        %v608 = vmax.f32 %v604, %v480
        %v609 = vmax.f32 %v605, %v482
        %v610 = vmax.f32 %v606, %v485
        %v611 = vmax.f32 %v607, %v487
        %v612 = vmax.f32 %v608, %v490
        %v613 = vmax.f32 %v609, %v492
        %v614 = vmax.f32 %v610, %v495
        %v615 = vmax.f32 %v611, %v497
        %v616 = vmax.f32 %v612, %v500
        %v617 = vmax.f32 %v613, %v502
        %v618 = vmax.f32 %v614, %v505
        %v619 = vmax.f32 %v615, %v507
        %v620 = vmax.f32 %v616, %v510
        %v621 = vmax.f32 %v617, %v512
        %v622 = vmax.f32 %v618, %v515
        %v623 = vmax.f32 %v619, %v517
        %v624 = vmax.f32 %v620, %v520
        %v625 = vmax.f32 %v621, %v522
        %v626 = vmax.f32 %v622, %v623
        %v627 = vmax.f32 %v624, %v625
        %v628 = vmax.f32 %v626, %v627
        %v629 = vrot.slane %v628, 4
        %v630 = vmax.f32 %v628, %v629
        %v631 = vrot.slane %v630, 2
        %v632 = vmax.f32 %v630, %v631
        %v633 = vrot.slane %v632, 1
        %v634 = vmax.f32 %v632, %v633
        %635 = vst [vmem:[%s244] sm:$0x1] %v634
      $region36: #{generalized_rcnn_forward.6} parent=31 // pred_fallthru
        _
      %p636 = scmp.eq.s32.totalorder %s17, 1
      // Predicated region
      $region37: #{generalized_rcnn_forward.6} parent=31 // pred_check
        %p637 = pneg %p636
      $region38: #{generalized_rcnn_forward.6} parent=31 // pred_check_branch
        %639 = sbr.rel (%p637) target = $region40
      $region39: #{generalized_rcnn_forward.6} parent=31 // pred_region
        %v640 = vlaneseq
        %v641 = vshrl.u32 %v640, 7
        %v642 = vadd.s32 %v641, 8
        %v643 = vadd.s32 %v641, 16
        %v644 = vadd.s32 %v641, 24
        %v645 = vadd.s32 %v641, 32
        %v646 = vadd.s32 %v641, 40
        %v647 = vadd.s32 %v641, 48
        %v648 = vadd.s32 %v641, 56
        %v649 = vadd.s32 %v641, 64
        %v650 = vadd.s32 %v641, 72
        %v651 = vadd.s32 %v641, 80
        %v652 = vadd.s32 %v641, 88
        %v653 = vadd.s32 %v641, 96
        %v654 = vadd.s32 %v641, 104
        %v655 = vadd.s32 %v641, 112
        %v656 = vadd.s32 %v641, 120
        %v657 = vadd.s32 %v641, 128
        %v658 = vadd.s32 %v641, 136
        %v659 = vadd.s32 %v641, 144
        %v660 = vadd.s32 %v641, 152
        %v661 = vadd.s32 %v641, 160
        %v662 = vadd.s32 %v641, 168
        %v663 = vadd.s32 %v641, 176
        %v664 = vadd.s32 %v641, 184
        %v665 = vadd.s32 %v641, 192
        %v666 = vadd.s32 %v641, 200
        %v667 = vadd.s32 %v641, 208
        %v668 = vadd.s32 %v641, 216
        %v669 = vadd.s32 %v641, 224
        %v670 = vadd.s32 %v641, 232
        %v671 = vadd.s32 %v641, 240
        %v672 = vadd.s32 %v641, 248
        %s673 = smul.u32 %s17, 256
        %v674 = vstv %s673
        %v675 = vadd.s32 %v641, %v674
        %v676 = vadd.s32 %v642, %v674
        %v677 = vadd.s32 %v643, %v674
        %v678 = vadd.s32 %v644, %v674
        %v679 = vadd.s32 %v645, %v674
        %v680 = vadd.s32 %v646, %v674
        %v681 = vadd.s32 %v647, %v674
        %v682 = vadd.s32 %v648, %v674
        %v683 = vadd.s32 %v649, %v674
        %v684 = vadd.s32 %v650, %v674
        %v685 = vadd.s32 %v651, %v674
        %v686 = vadd.s32 %v652, %v674
        %v687 = vadd.s32 %v653, %v674
        %v688 = vadd.s32 %v654, %v674
        %v689 = vadd.s32 %v655, %v674
        %v690 = vadd.s32 %v656, %v674
        %v691 = vadd.s32 %v657, %v674
        %v692 = vadd.s32 %v658, %v674
        %v693 = vadd.s32 %v659, %v674
        %v694 = vadd.s32 %v660, %v674
        %v695 = vadd.s32 %v661, %v674
        %v696 = vadd.s32 %v662, %v674
        %v697 = vadd.s32 %v663, %v674
        %v698 = vadd.s32 %v664, %v674
        %v699 = vadd.s32 %v665, %v674
        %v700 = vadd.s32 %v666, %v674
        %v701 = vadd.s32 %v667, %v674
        %v702 = vadd.s32 %v668, %v674
        %v703 = vadd.s32 %v669, %v674
        %v704 = vadd.s32 %v670, %v674
        %v705 = vadd.s32 %v671, %v674
        %v706 = vadd.s32 %v672, %v674
        %vm707 = vcmp.lt.s32.totalorder %v675, 512
        %vm708 = vcmp.lt.s32.totalorder %v676, 512
        %vm709 = vcmp.lt.s32.totalorder %v677, 512
        %vm710 = vcmp.lt.s32.totalorder %v678, 512
        %vm711 = vcmp.lt.s32.totalorder %v679, 512
        %vm712 = vcmp.lt.s32.totalorder %v680, 512
        %vm713 = vcmp.lt.s32.totalorder %v681, 512
        %vm714 = vcmp.lt.s32.totalorder %v682, 512
        %vm715 = vcmp.lt.s32.totalorder %v683, 512
        %vm716 = vcmp.lt.s32.totalorder %v684, 512
        %vm717 = vcmp.lt.s32.totalorder %v685, 512
        %vm718 = vcmp.lt.s32.totalorder %v686, 512
        %vm719 = vcmp.lt.s32.totalorder %v687, 512
        %vm720 = vcmp.lt.s32.totalorder %v688, 512
        %vm721 = vcmp.lt.s32.totalorder %v689, 512
        %vm722 = vcmp.lt.s32.totalorder %v690, 512
        %vm723 = vcmp.lt.s32.totalorder %v691, 512
        %vm724 = vcmp.lt.s32.totalorder %v692, 512
        %vm725 = vcmp.lt.s32.totalorder %v693, 512
        %vm726 = vcmp.lt.s32.totalorder %v694, 512
        %vm727 = vcmp.lt.s32.totalorder %v695, 512
        %vm728 = vcmp.lt.s32.totalorder %v696, 512
        %vm729 = vcmp.lt.s32.totalorder %v697, 512
        %vm730 = vcmp.lt.s32.totalorder %v698, 512
        %vm731 = vcmp.lt.s32.totalorder %v699, 512
        %vm732 = vcmp.lt.s32.totalorder %v700, 512
        %vm733 = vcmp.lt.s32.totalorder %v701, 512
        %vm734 = vcmp.lt.s32.totalorder %v702, 512
        %vm735 = vcmp.lt.s32.totalorder %v703, 512
        %vm736 = vcmp.lt.s32.totalorder %v704, 512
        %vm737 = vcmp.lt.s32.totalorder %v705, 512
        %vm738 = vcmp.lt.s32.totalorder %v706, 512
        %v739 = vsel %vm707, 1, 0
        %v740 = vsel %vm708, 1, 0
        %v741 = vsel %vm709, 1, 0
        %v742 = vsel %vm710, 1, 0
        %v743 = vsel %vm711, 1, 0
        %v744 = vsel %vm712, 1, 0
        %v745 = vsel %vm713, 1, 0
        %v746 = vsel %vm714, 1, 0
        %v747 = vsel %vm715, 1, 0
        %v748 = vsel %vm716, 1, 0
        %v749 = vsel %vm717, 1, 0
        %v750 = vsel %vm718, 1, 0
        %v751 = vsel %vm719, 1, 0
        %v752 = vsel %vm720, 1, 0
        %v753 = vsel %vm721, 1, 0
        %v754 = vsel %vm722, 1, 0
        %v755 = vsel %vm723, 1, 0
        %v756 = vsel %vm724, 1, 0
        %v757 = vsel %vm725, 1, 0
        %v758 = vsel %vm726, 1, 0
        %v759 = vsel %vm727, 1, 0
        %v760 = vsel %vm728, 1, 0
        %v761 = vsel %vm729, 1, 0
        %v762 = vsel %vm730, 1, 0
        %v763 = vsel %vm731, 1, 0
        %v764 = vsel %vm732, 1, 0
        %v765 = vsel %vm733, 1, 0
        %v766 = vsel %vm734, 1, 0
        %v767 = vsel %vm735, 1, 0
        %v768 = vsel %vm736, 1, 0
        %v769 = vsel %vm737, 1, 0
        %v770 = vsel %vm738, 1, 0
        %vm771 = vcmp.eq.s32.totalorder %v739, 1
        %vm772 = vcmp.eq.s32.totalorder %v740, 1
        %vm773 = vcmp.eq.s32.totalorder %v741, 1
        %vm774 = vcmp.eq.s32.totalorder %v742, 1
        %vm775 = vcmp.eq.s32.totalorder %v743, 1
        %vm776 = vcmp.eq.s32.totalorder %v744, 1
        %vm777 = vcmp.eq.s32.totalorder %v745, 1
        %vm778 = vcmp.eq.s32.totalorder %v746, 1
        %vm779 = vcmp.eq.s32.totalorder %v747, 1
        %vm780 = vcmp.eq.s32.totalorder %v748, 1
        %vm781 = vcmp.eq.s32.totalorder %v749, 1
        %vm782 = vcmp.eq.s32.totalorder %v750, 1
        %vm783 = vcmp.eq.s32.totalorder %v751, 1
        %vm784 = vcmp.eq.s32.totalorder %v752, 1
        %vm785 = vcmp.eq.s32.totalorder %v753, 1
        %vm786 = vcmp.eq.s32.totalorder %v754, 1
        %vm787 = vcmp.eq.s32.totalorder %v755, 1
        %vm788 = vcmp.eq.s32.totalorder %v756, 1
        %vm789 = vcmp.eq.s32.totalorder %v757, 1
        %vm790 = vcmp.eq.s32.totalorder %v758, 1
        %vm791 = vcmp.eq.s32.totalorder %v759, 1
        %vm792 = vcmp.eq.s32.totalorder %v760, 1
        %vm793 = vcmp.eq.s32.totalorder %v761, 1
        %vm794 = vcmp.eq.s32.totalorder %v762, 1
        %vm795 = vcmp.eq.s32.totalorder %v763, 1
        %vm796 = vcmp.eq.s32.totalorder %v764, 1
        %vm797 = vcmp.eq.s32.totalorder %v765, 1
        %vm798 = vcmp.eq.s32.totalorder %v766, 1
        %vm799 = vcmp.eq.s32.totalorder %v767, 1
        %vm800 = vcmp.eq.s32.totalorder %v768, 1
        %vm801 = vcmp.eq.s32.totalorder %v769, 1
        %vm802 = vcmp.eq.s32.totalorder %v770, 1
        %v803 = vsel %vm771, %v445, inf
        %v804 = vsel %vm772, %v447, inf
        %v805 = vsel %vm773, %v450, inf
        %v806 = vsel %vm774, %v452, inf
        %v807 = vsel %vm775, %v455, inf
        %v808 = vsel %vm776, %v457, inf
        %v809 = vsel %vm777, %v460, inf
        %v810 = vsel %vm778, %v462, inf
        %v811 = vsel %vm779, %v465, inf
        %v812 = vsel %vm780, %v467, inf
        %v813 = vsel %vm781, %v470, inf
        %v814 = vsel %vm782, %v472, inf
        %v815 = vsel %vm783, %v475, inf
        %v816 = vsel %vm784, %v477, inf
        %v817 = vsel %vm785, %v480, inf
        %v818 = vsel %vm786, %v482, inf
        %v819 = vsel %vm787, %v485, inf
        %v820 = vsel %vm788, %v487, inf
        %v821 = vsel %vm789, %v490, inf
        %v822 = vsel %vm790, %v492, inf
        %v823 = vsel %vm791, %v495, inf
        %v824 = vsel %vm792, %v497, inf
        %v825 = vsel %vm793, %v500, inf
        %v826 = vsel %vm794, %v502, inf
        %v827 = vsel %vm795, %v505, inf
        %v828 = vsel %vm796, %v507, inf
        %v829 = vsel %vm797, %v510, inf
        %v830 = vsel %vm798, %v512, inf
        %v831 = vsel %vm799, %v515, inf
        %v832 = vsel %vm800, %v517, inf
        %v833 = vsel %vm801, %v520, inf
        %v834 = vsel %vm802, %v522, inf
        %v835 = vmin.f32 %v803, %v807
        %v836 = vmin.f32 %v804, %v808
        %v837 = vmin.f32 %v805, %v809
        %v838 = vmin.f32 %v806, %v810
        %v839 = vmin.f32 %v835, %v811
        %v840 = vmin.f32 %v836, %v812
        %v841 = vmin.f32 %v837, %v813
        %v842 = vmin.f32 %v838, %v814
        %v843 = vmin.f32 %v839, %v815
        %v844 = vmin.f32 %v840, %v816
        %v845 = vmin.f32 %v841, %v817
        %v846 = vmin.f32 %v842, %v818
        %v847 = vmin.f32 %v843, %v819
        %v848 = vmin.f32 %v844, %v820
        %v849 = vmin.f32 %v845, %v821
        %v850 = vmin.f32 %v846, %v822
        %v851 = vmin.f32 %v847, %v823
        %v852 = vmin.f32 %v848, %v824
        %v853 = vmin.f32 %v849, %v825
        %v854 = vmin.f32 %v850, %v826
        %v855 = vmin.f32 %v851, %v827
        %v856 = vmin.f32 %v852, %v828
        %v857 = vmin.f32 %v853, %v829
        %v858 = vmin.f32 %v854, %v830
        %v859 = vmin.f32 %v855, %v831
        %v860 = vmin.f32 %v856, %v832
        %v861 = vmin.f32 %v857, %v833
        %v862 = vmin.f32 %v858, %v834
        %v863 = vmin.f32 %v859, %v860
        %v864 = vmin.f32 %v861, %v862
        %v865 = vmin.f32 %v863, %v864
        %v866 = vrot.slane %v865, 4
        %v867 = vmin.f32 %v865, %v866
        %v868 = vrot.slane %v867, 2
        %v869 = vmin.f32 %v867, %v868
        %v870 = vrot.slane %v869, 1
        %v871 = vmin.f32 %v869, %v870
        %872 = vst [vmem:[%s241] sm:$0x1] %v871
        %v873 = vsel %vm771, %v445, -inf
        %v874 = vsel %vm772, %v447, -inf
        %v875 = vsel %vm773, %v450, -inf
        %v876 = vsel %vm774, %v452, -inf
        %v877 = vsel %vm775, %v455, -inf
        %v878 = vsel %vm776, %v457, -inf
        %v879 = vsel %vm777, %v460, -inf
        %v880 = vsel %vm778, %v462, -inf
        %v881 = vsel %vm779, %v465, -inf
        %v882 = vsel %vm780, %v467, -inf
        %v883 = vsel %vm781, %v470, -inf
        %v884 = vsel %vm782, %v472, -inf
        %v885 = vsel %vm783, %v475, -inf
        %v886 = vsel %vm784, %v477, -inf
        %v887 = vsel %vm785, %v480, -inf
        %v888 = vsel %vm786, %v482, -inf
        %v889 = vsel %vm787, %v485, -inf
        %v890 = vsel %vm788, %v487, -inf
        %v891 = vsel %vm789, %v490, -inf
        %v892 = vsel %vm790, %v492, -inf
        %v893 = vsel %vm791, %v495, -inf
        %v894 = vsel %vm792, %v497, -inf
        %v895 = vsel %vm793, %v500, -inf
        %v896 = vsel %vm794, %v502, -inf
        %v897 = vsel %vm795, %v505, -inf
        %v898 = vsel %vm796, %v507, -inf
        %v899 = vsel %vm797, %v510, -inf
        %v900 = vsel %vm798, %v512, -inf
        %v901 = vsel %vm799, %v515, -inf
        %v902 = vsel %vm800, %v517, -inf
        %v903 = vsel %vm801, %v520, -inf
        %v904 = vsel %vm802, %v522, -inf
        %v905 = vmax.f32 %v873, %v877
        %v906 = vmax.f32 %v874, %v878
        %v907 = vmax.f32 %v875, %v879
        %v908 = vmax.f32 %v876, %v880
        %v909 = vmax.f32 %v905, %v881
        %v910 = vmax.f32 %v906, %v882
        %v911 = vmax.f32 %v907, %v883
        %v912 = vmax.f32 %v908, %v884
        %v913 = vmax.f32 %v909, %v885
        %v914 = vmax.f32 %v910, %v886
        %v915 = vmax.f32 %v911, %v887
        %v916 = vmax.f32 %v912, %v888
        %v917 = vmax.f32 %v913, %v889
        %v918 = vmax.f32 %v914, %v890
        %v919 = vmax.f32 %v915, %v891
        %v920 = vmax.f32 %v916, %v892
        %v921 = vmax.f32 %v917, %v893
        %v922 = vmax.f32 %v918, %v894
        %v923 = vmax.f32 %v919, %v895
        %v924 = vmax.f32 %v920, %v896
        %v925 = vmax.f32 %v921, %v897
        %v926 = vmax.f32 %v922, %v898
        %v927 = vmax.f32 %v923, %v899
        %v928 = vmax.f32 %v924, %v900
        %v929 = vmax.f32 %v925, %v901
        %v930 = vmax.f32 %v926, %v902
        %v931 = vmax.f32 %v927, %v903
        %v932 = vmax.f32 %v928, %v904
        %v933 = vmax.f32 %v929, %v930
        %v934 = vmax.f32 %v931, %v932
        %v935 = vmax.f32 %v933, %v934
        %v936 = vrot.slane %v935, 4
        %v937 = vmax.f32 %v935, %v936
        %v938 = vrot.slane %v937, 2
        %v939 = vmax.f32 %v937, %v938
        %v940 = vrot.slane %v939, 1
        %v941 = vmax.f32 %v939, %v940
        %942 = vst [vmem:[%s244] sm:$0x1] %v941
      $region40: #{generalized_rcnn_forward.6} parent=31 // pred_fallthru
        _
      %s943 = smul.u32 32, %s17
      %p944 = scmp.lt.s32.totalorder %s943, 63
      %s945 = scalar_select %p944, %s943, 63
      %s946 = smul.addr %s945, 8
      %s947 = scalar_lea.vmem %s3, %s946
      %p948 = scmp.lt.s32.totalorder %s17, 1
      %s949 = scalar_select %p948, %s17, 1
      %s950 = scalar_lea.vmem %s4, %s949
      %p951 = scmp.lt.s32.totalorder %s17, 1
      %s952 = scalar_select %p951, %s17, 1
      %s953 = scalar_lea.vmem %s5, %s952
      // Predicated region
      $region41: #{generalized_rcnn_forward.6} parent=31 // pred_check
        %p954 = pneg %p103
      $region42: #{generalized_rcnn_forward.6} parent=31 // pred_check_branch
        %956 = sbr.rel (%p954) target = $region44
      $region43: #{generalized_rcnn_forward.6} parent=31 // pred_region
        %s957 = smul.u32 32, %s17
      $region44: #{generalized_rcnn_forward.6} parent=31 // pred_fallthru
        _
      // Predicated region
      $region45: #{generalized_rcnn_forward.6} parent=31 // pred_check
        %p958 = pneg %p129
      $region46: #{generalized_rcnn_forward.6} parent=31 // pred_check_branch
        %960 = sbr.rel (%p958) target = $region48
      $region47: #{generalized_rcnn_forward.6} parent=31 // pred_region
        _
      $region48: #{generalized_rcnn_forward.6} parent=31 // pred_fallthru
        _
      // Predicated region
      $region49: #{generalized_rcnn_forward.6} parent=31 // pred_check
        %p961 = pneg %p155
      $region50: #{generalized_rcnn_forward.6} parent=31 // pred_check_branch
        %963 = sbr.rel (%p961) target = $region52
      $region51: #{generalized_rcnn_forward.6} parent=31 // pred_region
        _
      $region52: #{generalized_rcnn_forward.6} parent=31 // pred_fallthru
        _
    $region32: #{generalized_rcnn_forward.6} parent=5 // pred_fallthru
      _
    %p964 = scmp.le.s32.totalorder 2, %s12
    // Predicated region
    $region53: #{generalized_rcnn_forward.6} parent=5 // pred_check
      %p965 = pneg %p964
    $region54: #{generalized_rcnn_forward.6} parent=5 // pred_check_branch
      %967 = sbr.rel (%p965) target = $region56
    $region55: #{generalized_rcnn_forward.6} parent=5 // pred_region
      %s968 = ssub.s32 %s12, 2
      // Predicated region
      $region57: #{generalized_rcnn_forward.6} parent=55 // pred_check
        %p969 = pneg %p109
      $region58: #{generalized_rcnn_forward.6} parent=55 // pred_check_branch
        %971 = sbr.rel (%p969) target = $region60
      $region59: #{generalized_rcnn_forward.6} parent=55 // pred_region
        %s972 = smul.u32 32, %s18
        %p973 = scmp.lt.s32.totalorder %s972, 63
        %s974 = scalar_select %p973, %s972, 63
        %s975 = smul.addr %s974, 8
        %s976 = scalar_lea.vmem %s3, %s975
      $region60: #{generalized_rcnn_forward.6} parent=55 // pred_fallthru
        _
      // Predicated region
      $region61: #{generalized_rcnn_forward.6} parent=55 // pred_check
        %p977 = pneg %p135
      $region62: #{generalized_rcnn_forward.6} parent=55 // pred_check_branch
        %979 = sbr.rel (%p977) target = $region64
      $region63: #{generalized_rcnn_forward.6} parent=55 // pred_region
        %p980 = scmp.lt.s32.totalorder %s18, 1
        %s981 = scalar_select %p980, %s18, 1
        %s982 = scalar_lea.vmem %s4, %s981
      $region64: #{generalized_rcnn_forward.6} parent=55 // pred_fallthru
        _
      // Predicated region
      $region65: #{generalized_rcnn_forward.6} parent=55 // pred_check
        %p983 = pneg %p161
      $region66: #{generalized_rcnn_forward.6} parent=55 // pred_check_branch
        %985 = sbr.rel (%p983) target = $region68
      $region67: #{generalized_rcnn_forward.6} parent=55 // pred_region
        %p986 = scmp.lt.s32.totalorder %s18, 1
        %s987 = scalar_select %p986, %s18, 1
        %s988 = scalar_lea.vmem %s5, %s987
      $region68: #{generalized_rcnn_forward.6} parent=55 // pred_fallthru
        _
    $region56: #{generalized_rcnn_forward.6} parent=5 // pred_fallthru
      _
  $region6: #{generalized_rcnn_forward.6} parent=0 // loop_footer
    %s16 = sadd.s32 1, %s12
  $region7: #{generalized_rcnn_forward.6} parent=0 // loop_footer_branch
    %11 = sbr.rel target = $region3
  $region8: #{generalized_rcnn_forward.6} parent=0 // loop_exit
    _

// kernel: generalized_rcnn_forward.7
$region0: #{generalized_rcnn_forward.7}
  #allocation0 [shape = 'u32[]', space=smem, size = 0x4, offset = 0x4, fixed_abs, tag = 'smem constant byte address 0x4 - core index']
  #allocation1 [shape = 'u32[72,128]{1,0:T(1,128)}', space=vmem, size = 0x9000, scoped, tag = 'internal scratch']
  %s0 = inlined_call_operand.vmem [shape: bf16[128,192], index: 0, kind: input, shape index: {}]
  %s1 = inlined_call_operand.vmem [shape: bf16[192,128], index: 1, kind: input, shape index: {}]
  %s2 = inlined_call_operand.vmem [shape: f32[1,128], index: 2, kind: input, shape index: {}]
  %s3 = inlined_call_operand.vmem [shape: f32[128,128], index: 3, kind: output, shape index: {0}]
  %s4 = inlined_call_operand.vmem [shape: f32[2,1,128], index: 4, kind: output, shape index: {1}]
  %s5 = inlined_call_operand.vmem [shape: f32[2,1,128], index: 5, kind: output, shape index: {2}]
  %6 = xla_tuple %s3, %s4, %s5
  %s7 = sld [smem:[#allocation0]]
  $region69: #{generalized_rcnn_forward.7} parent=0
    _
  %s9 = ssub.s32 1, %s7
  %s10 = scalar_select 0, %s9, %s7
  loop: start=0, step=1, limit=4
  $region2: #{generalized_rcnn_forward.7} parent=0 // loop_pre_header
    _
  $region3: #{generalized_rcnn_forward.7} parent=0 // loop_header
    %s12 = sphi 0, %s16
    %p13 = scmp.ge.s32.totalorder %s12, 4
    %s22 = sphi 0, %s24
    %s25 = sphi 0, %s22
    %s26 = sphi 0, %s25
    %s42 = sphi 0, %s26
    %s46 = sphi 0, %s46
    %s48 = sphi 0, %s46
    %s49 = sphi 0, %s48
    %s63 = sphi 0, %s49
    %s67 = sphi 0, %s67
    %s69 = sphi 0, %s67
    %s70 = sphi 0, %s69
    %s84 = sphi 0, %s70
    %s90 = sphi 0, %s92
    %s93 = sphi 0, %s90
    %s94 = sphi 0, %s93
    %s110 = sphi 0, %s94
    %s116 = sphi 0, %s118
    %s119 = sphi 0, %s116
    %s120 = sphi 0, %s119
    %s136 = sphi 0, %s120
    %s142 = sphi 0, %s144
    %s145 = sphi 0, %s142
    %s146 = sphi 0, %s145
    %s162 = sphi 0, %s146
  $region4: #{generalized_rcnn_forward.7} parent=0 // loop_header_branch
    %15 = sbr.rel (%p13) target = $region8
  $region5: #{generalized_rcnn_forward.7} parent=0 // loop_body
    %s17 = ssub.s32 %s12, 1
    %s18 = ssub.s32 %s12, 2
    %s19 = sadd.s32 %s12, 1
    %s20 = ssub.s32 %s12, %s19
    %p21 = scmp.eq.s32.totalorder %s20, 0
    %s23 = sadd.s32 %s22, 1
    %s24 = scalar_select %p21, %s22, %s23
    %p27 = pneg %p21
    %p28 = scmp.eq.s32.totalorder %s12, 1
    %p29 = por %p27, %p28
    %p30 = scmp.ne.s32.totalorder %s22, %s25
    %p31 = scmp.eq.s32.totalorder %s12, 0
    %p32 = por %p30, %p31
    %p33 = scmp.ne.s32.totalorder %s22, %s25
    %p34 = scmp.eq.s32.totalorder %s17, 1
    %p35 = por %p33, %p34
    %p36 = scmp.ne.s32.totalorder %s25, %s26
    %p37 = scmp.eq.s32.totalorder %s17, 0
    %p38 = por %p36, %p37
    %p39 = scmp.ne.s32.totalorder %s25, %s26
    %p40 = scmp.eq.s32.totalorder %s18, 1
    %p41 = por %p39, %p40
    %p43 = scmp.ne.s32.totalorder %s26, %s42
    %p44 = scmp.eq.s32.totalorder %s18, 0
    %p45 = por %p43, %p44
    %s47 = sadd.s32 %s46, 1
    %p50 = scmp.eq.s32.totalorder %s12, 1
    %p51 = scmp.ne.s32.totalorder %s46, %s48
    %p52 = scmp.eq.s32.totalorder %s12, 0
    %p53 = por %p51, %p52
    %p54 = scmp.ne.s32.totalorder %s46, %s48
    %p55 = scmp.eq.s32.totalorder %s17, 1
    %p56 = por %p54, %p55
    %p57 = scmp.ne.s32.totalorder %s48, %s49
    %p58 = scmp.eq.s32.totalorder %s17, 0
    %p59 = por %p57, %p58
    %p60 = scmp.ne.s32.totalorder %s48, %s49
    %p61 = scmp.eq.s32.totalorder %s18, 1
    %p62 = por %p60, %p61
    %p64 = scmp.ne.s32.totalorder %s49, %s63
    %p65 = scmp.eq.s32.totalorder %s18, 0
    %p66 = por %p64, %p65
    %s68 = sadd.s32 %s67, 1
    %p71 = scmp.eq.s32.totalorder %s12, 1
    %p72 = scmp.ne.s32.totalorder %s67, %s69
    %p73 = scmp.eq.s32.totalorder %s12, 0
    %p74 = por %p72, %p73
    %p75 = scmp.ne.s32.totalorder %s67, %s69
    %p76 = scmp.eq.s32.totalorder %s17, 1
    %p77 = por %p75, %p76
    %p78 = scmp.ne.s32.totalorder %s69, %s70
    %p79 = scmp.eq.s32.totalorder %s17, 0
    %p80 = por %p78, %p79
    %p81 = scmp.ne.s32.totalorder %s69, %s70
    %p82 = scmp.eq.s32.totalorder %s18, 1
    %p83 = por %p81, %p82
    %p85 = scmp.ne.s32.totalorder %s70, %s84
    %p86 = scmp.eq.s32.totalorder %s18, 0
    %p87 = por %p85, %p86
    %s88 = ssub.s32 %s12, %s19
    %p89 = scmp.eq.s32.totalorder %s88, 0
    %s91 = sadd.s32 %s90, 1
    %s92 = scalar_select %p89, %s90, %s91
    %p95 = pneg %p89
    %p96 = scmp.eq.s32.totalorder %s12, 1
    %p97 = por %p95, %p96
    %p98 = scmp.ne.s32.totalorder %s90, %s93
    %p99 = scmp.eq.s32.totalorder %s12, 0
    %p100 = por %p98, %p99
    %p101 = scmp.ne.s32.totalorder %s90, %s93
    %p102 = scmp.eq.s32.totalorder %s17, 1
    %p103 = por %p101, %p102
    %p104 = scmp.ne.s32.totalorder %s93, %s94
    %p105 = scmp.eq.s32.totalorder %s17, 0
    %p106 = por %p104, %p105
    %p107 = scmp.ne.s32.totalorder %s93, %s94
    %p108 = scmp.eq.s32.totalorder %s18, 1
    %p109 = por %p107, %p108
    %p111 = scmp.ne.s32.totalorder %s94, %s110
    %p112 = scmp.eq.s32.totalorder %s18, 0
    %p113 = por %p111, %p112
    %s114 = ssub.s32 %s12, %s19
    %p115 = scmp.eq.s32.totalorder %s114, 0
    %s117 = sadd.s32 %s116, 1
    %s118 = scalar_select %p115, %s116, %s117
    %p121 = pneg %p115
    %p122 = scmp.eq.s32.totalorder %s12, 1
    %p123 = por %p121, %p122
    %p124 = scmp.ne.s32.totalorder %s116, %s119
    %p125 = scmp.eq.s32.totalorder %s12, 0
    %p126 = por %p124, %p125
    %p127 = scmp.ne.s32.totalorder %s116, %s119
    %p128 = scmp.eq.s32.totalorder %s17, 1
    %p129 = por %p127, %p128
    %p130 = scmp.ne.s32.totalorder %s119, %s120
    %p131 = scmp.eq.s32.totalorder %s17, 0
    %p132 = por %p130, %p131
    %p133 = scmp.ne.s32.totalorder %s119, %s120
    %p134 = scmp.eq.s32.totalorder %s18, 1
    %p135 = por %p133, %p134
    %p137 = scmp.ne.s32.totalorder %s120, %s136
    %p138 = scmp.eq.s32.totalorder %s18, 0
    %p139 = por %p137, %p138
    %s140 = ssub.s32 %s12, %s19
    %p141 = scmp.eq.s32.totalorder %s140, 0
    %s143 = sadd.s32 %s142, 1
    %s144 = scalar_select %p141, %s142, %s143
    %p147 = pneg %p141
    %p148 = scmp.eq.s32.totalorder %s12, 1
    %p149 = por %p147, %p148
    %p150 = scmp.ne.s32.totalorder %s142, %s145
    %p151 = scmp.eq.s32.totalorder %s12, 0
    %p152 = por %p150, %p151
    %p153 = scmp.ne.s32.totalorder %s142, %s145
    %p154 = scmp.eq.s32.totalorder %s17, 1
    %p155 = por %p153, %p154
    %p156 = scmp.ne.s32.totalorder %s145, %s146
    %p157 = scmp.eq.s32.totalorder %s17, 0
    %p158 = por %p156, %p157
    %p159 = scmp.ne.s32.totalorder %s145, %s146
    %p160 = scmp.eq.s32.totalorder %s18, 1
    %p161 = por %p159, %p160
    %p163 = scmp.ne.s32.totalorder %s146, %s162
    %p164 = scmp.eq.s32.totalorder %s18, 0
    %p165 = por %p163, %p164
    %p166 = scmp.le.s32.totalorder 1, %s12
    %p167 = scmp.lt.s32.totalorder %s12, 3
    %p168 = pnand %p166, %p167
    %p169 = pneg %p168
    // Predicated region
    $region9: #{generalized_rcnn_forward.7} parent=5 // pred_check
      _
    $region10: #{generalized_rcnn_forward.7} parent=5 // pred_check_branch
      %171 = sbr.rel (%p168) target = $region12
    $region11: #{generalized_rcnn_forward.7} parent=5 // pred_region
      %s172 = ssub.s32 %s12, 1
      // Predicated region
      $region13: #{generalized_rcnn_forward.7} parent=11 // pred_check
        %p173 = pneg %p59
      $region14: #{generalized_rcnn_forward.7} parent=11 // pred_check_branch
        %175 = sbr.rel (%p173) target = $region16
      $region15: #{generalized_rcnn_forward.7} parent=11 // pred_region
        _
      $region16: #{generalized_rcnn_forward.7} parent=11 // pred_fallthru
        _
      // Predicated region
      $region17: #{generalized_rcnn_forward.7} parent=11 // pred_check
        %p176 = pneg %p80
      $region18: #{generalized_rcnn_forward.7} parent=11 // pred_check_branch
        %178 = sbr.rel (%p176) target = $region20
      $region19: #{generalized_rcnn_forward.7} parent=11 // pred_region
        _
      $region20: #{generalized_rcnn_forward.7} parent=11 // pred_fallthru
        _
    $region12: #{generalized_rcnn_forward.7} parent=5 // pred_fallthru
      _
    %p179 = scmp.lt.s32.totalorder %s12, 2
    // Predicated region
    $region21: #{generalized_rcnn_forward.7} parent=5 // pred_check
      %p180 = pneg %p179
    $region22: #{generalized_rcnn_forward.7} parent=5 // pred_check_branch
      %182 = sbr.rel (%p180) target = $region24
    $region23: #{generalized_rcnn_forward.7} parent=5 // pred_region
      // Predicated region
      $region25: #{generalized_rcnn_forward.7} parent=23 // pred_check
        %p183 = pneg %p32
      $region26: #{generalized_rcnn_forward.7} parent=23 // pred_check_branch
        %185 = sbr.rel (%p183) target = $region28
      $region27: #{generalized_rcnn_forward.7} parent=23 // pred_region
        %s186 = smul.u32 8, %s12
        %p187 = scmp.lt.s32.totalorder %s186, 15
        %s188 = scalar_select %p187, %s186, 15
        %s189 = smul.addr %s188, 2
        %s190 = smul.addr %s189, 4
        %s191 = scalar_lea.vmem %s0, %s190
        %s192 = smul.u32 8, %s12
      $region28: #{generalized_rcnn_forward.7} parent=23 // pred_fallthru
        _
    $region24: #{generalized_rcnn_forward.7} parent=5 // pred_fallthru
      _
    %p193 = scmp.le.s32.totalorder 1, %s12
    %p194 = scmp.lt.s32.totalorder %s12, 3
    %p195 = pnand %p193, %p194
    %p196 = pneg %p195
    // Predicated region
    $region29: #{generalized_rcnn_forward.7} parent=5 // pred_check
      _
    $region30: #{generalized_rcnn_forward.7} parent=5 // pred_check_branch
      %198 = sbr.rel (%p195) target = $region32
    $region31: #{generalized_rcnn_forward.7} parent=5 // pred_region
      %s199 = ssub.s32 %s12, 1
      %s200 = smul.u32 8, %s17
      %p201 = scmp.lt.s32.totalorder %s200, 15
      %s202 = scalar_select %p201, %s200, 15
      %s203 = smul.addr %s202, 2
      %s204 = smul.addr %s203, 4
      %s205 = scalar_lea.vmem %s0, %s204
      %p206 = pneg %p38
      %p207 = pneg %p35
      %p208 = pneg %p59
      %p209 = pneg %p56
      %p210 = pneg %p80
      %p211 = pneg %p77
      %p212 = pneg %p106
      %p213 = pneg %p103
      %s214 = smul.u32 8, %s17
      %p215 = scmp.lt.s32.totalorder %s214, 15
      %s216 = scalar_select %p215, %s214, 15
      %s217 = smul.addr %s216, 8
      %s218 = scalar_lea.vmem %s3, %s217
      %p219 = pneg %p132
      %p220 = pneg %p129
      %p221 = scmp.lt.s32.totalorder %s17, 1
      %s222 = scalar_select %p221, %s17, 1
      %s223 = scalar_lea.vmem %s4, %s222
      %p224 = pneg %p158
      %p225 = pneg %p155
      %p226 = scmp.lt.s32.totalorder %s17, 1
      %s227 = scalar_select %p226, %s17, 1
      %s228 = scalar_lea.vmem %s5, %s227
      %s229 = smul.u32 8, %s17
      %p230 = scmp.lt.s32.totalorder %s229, 15
      %s231 = scalar_select %p230, %s229, 15
      %s232 = smul.addr %s231, 2
      %s233 = smul.addr %s232, 4
      %s234 = scalar_lea.vmem %s0, %s233
      %s235 = smul.u32 8, %s17
      %s236 = smul.u32 8, %s17
      %p237 = scmp.lt.s32.totalorder %s236, 15
      %s238 = scalar_select %p237, %s236, 15
      %s239 = smul.addr %s238, 8
      %s240 = scalar_lea.vmem %s3, %s239
      %s241 = smul.u32 8, %s17
      %p242 = scmp.lt.s32.totalorder %s17, 1
      %s243 = scalar_select %p242, %s17, 1
      %s244 = scalar_lea.vmem %s4, %s243
      %p245 = scmp.lt.s32.totalorder %s17, 1
      %s246 = scalar_select %p245, %s17, 1
      %s247 = scalar_lea.vmem %s5, %s246
      %v249 = vld [vmem:[%s234] sm:$0xff]
      %v250 = vld [vmem:[%s234 + $0x8] sm:$0xff]
      %v251 = vld [vmem:[%s234 + $0x10] sm:$0xff]
      %v252 = vld [vmem:[%s234 + $0x18] sm:$0xff]
      %v253 = vld [vmem:[%s234 + $0x20] sm:$0xff]
      %v254 = vld [vmem:[%s234 + $0x28] sm:$0xff]
      %v255 = vld [vmem:[%s234 + $0x30] sm:$0xff]
      %v256 = vld [vmem:[%s234 + $0x38] sm:$0xff]
      %v257 = vld [vmem:[%s1] sm:$0xf]
      %v258 = vld [vmem:[%s1 + $0x4] sm:$0xf]
      %v259 = vld [vmem:[%s1 + $0x8] sm:$0xf]
      %v260 = vld [vmem:[%s1 + $0xc] sm:$0xf]
      %v261 = vld [vmem:[%s1 + $0x10] sm:$0xf]
      %v262 = vld [vmem:[%s1 + $0x14] sm:$0xf]
      %v263 = vld [vmem:[%s1 + $0x18] sm:$0xf]
      %v264 = vld [vmem:[%s1 + $0x1c] sm:$0xf]
      %v265 = vld [vmem:[%s1 + $0x20] sm:$0xf]
      %v266 = vld [vmem:[%s1 + $0x24] sm:$0xf]
      %v267 = vld [vmem:[%s1 + $0x28] sm:$0xf]
      %v268 = vld [vmem:[%s1 + $0x2c] sm:$0xf]
      %v269 = vld [vmem:[%s1 + $0x30] sm:$0xf]
      %v270 = vld [vmem:[%s1 + $0x34] sm:$0xf]
      %v271 = vld [vmem:[%s1 + $0x38] sm:$0xf]
      %v272 = vld [vmem:[%s1 + $0x3c] sm:$0xf]
      %v273 = vld [vmem:[%s1 + $0x40] sm:$0xf]
      %v274 = vld [vmem:[%s1 + $0x44] sm:$0xf]
      %v275 = vld [vmem:[%s1 + $0x48] sm:$0xf]
      %v276 = vld [vmem:[%s1 + $0x4c] sm:$0xf]
      %v277 = vld [vmem:[%s1 + $0x50] sm:$0xf]
      %v278 = vld [vmem:[%s1 + $0x54] sm:$0xf]
      %v279 = vld [vmem:[%s1 + $0x58] sm:$0xf]
      %v280 = vld [vmem:[%s1 + $0x5c] sm:$0xf]
      %v281 = vld [vmem:[%s2] sm:$0x1]
      %v283 = vperm.slane %v281, 0
      %v293 = vunpack.c.l.b16 %v249
      %v294 = vunpack.c.h.b16 %v249
      %v295 = vunpack.c.l.b16 %v250
      %v296 = vunpack.c.h.b16 %v250
      %v297 = vunpack.c.l.b16 %v251
      %v298 = vunpack.c.h.b16 %v251
      %v299 = vunpack.c.l.b16 %v252
      %v300 = vunpack.c.h.b16 %v252
      %v301 = vunpack.c.l.b16 %v253
      %v302 = vunpack.c.h.b16 %v253
      %v303 = vunpack.c.l.b16 %v254
      %v304 = vunpack.c.h.b16 %v254
      %v305 = vunpack.c.l.b16 %v255
      %v306 = vunpack.c.h.b16 %v255
      %v307 = vunpack.c.l.b16 %v256
      %v308 = vunpack.c.h.b16 %v256
      %v309 = vpack.c.b16 %v295, %v293
      %v310 = vpack.c.b16 %v296, %v294
      %v311 = vpack.c.b16 %v299, %v297
      %v312 = vpack.c.b16 %v300, %v298
      %v313 = vpack.c.b16 %v303, %v301
      %v314 = vpack.c.b16 %v304, %v302
      %v315 = vpack.c.b16 %v307, %v305
      %v316 = vpack.c.b16 %v308, %v306
      %v345 = vunpack.c.l.b16 %v257
      %v346 = vunpack.c.l.b16 %v258
      %v347 = vunpack.c.l.b16 %v259
      %v348 = vunpack.c.l.b16 %v260
      %v349 = vunpack.c.l.b16 %v261
      %v350 = vunpack.c.l.b16 %v262
      %v351 = vunpack.c.l.b16 %v263
      %v352 = vunpack.c.l.b16 %v264
      %v353 = vunpack.c.l.b16 %v265
      %v354 = vunpack.c.l.b16 %v266
      %v355 = vunpack.c.l.b16 %v267
      %v356 = vunpack.c.l.b16 %v268
      %v357 = vunpack.c.l.b16 %v269
      %v358 = vunpack.c.l.b16 %v270
      %v359 = vunpack.c.l.b16 %v271
      %v360 = vunpack.c.l.b16 %v272
      %v361 = vunpack.c.l.b16 %v273
      %v362 = vunpack.c.l.b16 %v274
      %v363 = vunpack.c.l.b16 %v275
      %v364 = vunpack.c.l.b16 %v276
      %v365 = vunpack.c.l.b16 %v277
      %v366 = vunpack.c.l.b16 %v278
      %v367 = vunpack.c.l.b16 %v279
      %v368 = vunpack.c.l.b16 %v280
      %v369 = vpack.c.b16 %v346, %v345
      %v370 = vpack.c.b16 %v348, %v347
      %v371 = vpack.c.b16 %v350, %v349
      %v372 = vpack.c.b16 %v352, %v351
      %v373 = vpack.c.b16 %v354, %v353
      %v374 = vpack.c.b16 %v356, %v355
      %v375 = vpack.c.b16 %v358, %v357
      %v376 = vpack.c.b16 %v360, %v359
      %v377 = vpack.c.b16 %v362, %v361
      %v378 = vpack.c.b16 %v364, %v363
      %v379 = vpack.c.b16 %v366, %v365
      %v380 = vpack.c.b16 %v368, %v367
      %vm393 = vcmask 523264
      %v395 = vsel %vm393, %v310, 0
      %v398 = vsel %vm393, %v312, 0
      %v401 = vsel %vm393, %v314, 0
      %v404 = vsel %vm393, %v316, 0
      %406 = vmatpush.bf16.msra.mxu0 %v376
      %407 = vmatpush.bf16.msra.mxu0 %v375
      %408 = vmatpush.bf16.msra.mxu0 %v374
      %409 = vmatpush.bf16.msra.mxu0 %v373
      %410 = vmatpush.bf16.msra.mxu0 %v372
      %411 = vmatpush.bf16.msra.mxu0 %v371
      %412 = vmatpush.bf16.msra.mxu0 %v370
      %413 = vmatpush.bf16.msra.mxu0 %v369
      %414 = vmatmul.bf16.gmra.mxu0 %v309
      %v415 = vpop.f32.mrf.mxu0
      %v416 = vadd.f32 %v283, %v415
      %v417 = vpop.f32.mrf.mxu0
      %v418 = vadd.f32 %v283, %v417
      %419 = vmatmul.bf16.gmra.mxu0 %v311
      %v420 = vpop.f32.mrf.mxu0
      %v421 = vadd.f32 %v283, %v420
      %v422 = vpop.f32.mrf.mxu0
      %v423 = vadd.f32 %v283, %v422
      %424 = vmatmul.bf16.gmra.mxu0 %v313
      %v425 = vpop.f32.mrf.mxu0
      %v426 = vadd.f32 %v283, %v425
      %v427 = vpop.f32.mrf.mxu0
      %v428 = vadd.f32 %v283, %v427
      %429 = vmatmul.bf16.gmra.mxu0 %v315
      %v430 = vpop.f32.mrf.mxu0
      %v431 = vadd.f32 %v283, %v430
      %v432 = vpop.f32.mrf.mxu0
      %v433 = vadd.f32 %v283, %v432
      %434 = vdwg.mxu0
      %435 = vmatpush.bf16.msra.mxu0 0
      %436 = vmatpush.bf16.msra.mxu0 0
      %437 = vmatpush.bf16.msra.mxu0 0
      %438 = vmatpush.bf16.msra.mxu0 0
      %439 = vmatpush.bf16.msra.mxu0 %v380
      %440 = vmatpush.bf16.msra.mxu0 %v379
      %441 = vmatpush.bf16.msra.mxu0 %v378
      %442 = vmatpush.bf16.msra.mxu0 %v377
      %443 = vmatmul.bf16.gmra.mxu0 %v395
      %v444 = vpop.f32.mrf.mxu0
      %v445 = vadd.f32 %v416, %v444
      %v446 = vpop.f32.mrf.mxu0
      %v447 = vadd.f32 %v418, %v446
      %448 = vmatmul.bf16.gmra.mxu0 %v398
      %v449 = vpop.f32.mrf.mxu0
      %v450 = vadd.f32 %v421, %v449
      %v451 = vpop.f32.mrf.mxu0
      %v452 = vadd.f32 %v423, %v451
      %453 = vmatmul.bf16.gmra.mxu0 %v401
      %v454 = vpop.f32.mrf.mxu0
      %v455 = vadd.f32 %v426, %v454
      %v456 = vpop.f32.mrf.mxu0
      %v457 = vadd.f32 %v428, %v456
      %458 = vmatmul.bf16.gmra.mxu0 %v404
      %v459 = vpop.f32.mrf.mxu0
      %v460 = vadd.f32 %v431, %v459
      %v461 = vpop.f32.mrf.mxu0
      %v462 = vadd.f32 %v433, %v461
      %463 = vdwg.mxu0
      %464 = vst [vmem:[%s240] sm:$0xff] %v445
      %465 = vst [vmem:[%s240 + $0x8] sm:$0xff] %v447
      %466 = vst [vmem:[%s240 + $0x10] sm:$0xff] %v450
      %467 = vst [vmem:[%s240 + $0x18] sm:$0xff] %v452
      %468 = vst [vmem:[%s240 + $0x20] sm:$0xff] %v455
      %469 = vst [vmem:[%s240 + $0x28] sm:$0xff] %v457
      %470 = vst [vmem:[%s240 + $0x30] sm:$0xff] %v460
      %471 = vst [vmem:[%s240 + $0x38] sm:$0xff] %v462
      %p472 = scmp.ne.s32.totalorder %s17, 1
      // Predicated region
      $region33: #{generalized_rcnn_forward.7} parent=31 // pred_check
        %p473 = pneg %p472
      $region34: #{generalized_rcnn_forward.7} parent=31 // pred_check_branch
        %475 = sbr.rel (%p473) target = $region36
      $region35: #{generalized_rcnn_forward.7} parent=31 // pred_region
        %v476 = vmin.f32 %v445, %v455
        %v477 = vmin.f32 %v447, %v457
        %v478 = vmin.f32 %v450, %v460
        %v479 = vmin.f32 %v452, %v462
        %v480 = vmin.f32 %v476, %v477
        %v481 = vmin.f32 %v478, %v479
        %v482 = vmin.f32 %v480, %v481
        %v483 = vrot.slane %v482, 4
        %v484 = vmin.f32 %v482, %v483
        %v485 = vrot.slane %v484, 2
        %v486 = vmin.f32 %v484, %v485
        %v487 = vrot.slane %v486, 1
        %v488 = vmin.f32 %v486, %v487
        %489 = vst [vmem:[%s244] sm:$0x1] %v488
        %v490 = vmax.f32 %v445, %v455
        %v491 = vmax.f32 %v447, %v457
        %v492 = vmax.f32 %v450, %v460
        %v493 = vmax.f32 %v452, %v462
        %v494 = vmax.f32 %v490, %v491
        %v495 = vmax.f32 %v492, %v493
        %v496 = vmax.f32 %v494, %v495
        %v497 = vrot.slane %v496, 4
        %v498 = vmax.f32 %v496, %v497
        %v499 = vrot.slane %v498, 2
        %v500 = vmax.f32 %v498, %v499
        %v501 = vrot.slane %v500, 1
        %v502 = vmax.f32 %v500, %v501
        %503 = vst [vmem:[%s247] sm:$0x1] %v502
      $region36: #{generalized_rcnn_forward.7} parent=31 // pred_fallthru
        _
      %p504 = scmp.eq.s32.totalorder %s17, 1
      // Predicated region
      $region37: #{generalized_rcnn_forward.7} parent=31 // pred_check
        %p505 = pneg %p504
      $region38: #{generalized_rcnn_forward.7} parent=31 // pred_check_branch
        %507 = sbr.rel (%p505) target = $region40
      $region39: #{generalized_rcnn_forward.7} parent=31 // pred_region
        %v508 = vlaneseq
        %v509 = vshrl.u32 %v508, 7
        %v510 = vadd.s32 %v509, 8
        %v511 = vadd.s32 %v509, 16
        %v512 = vadd.s32 %v509, 24
        %v513 = vadd.s32 %v509, 32
        %v514 = vadd.s32 %v509, 40
        %v515 = vadd.s32 %v509, 48
        %v516 = vadd.s32 %v509, 56
        %s517 = smul.u32 %s17, 64
        %v518 = vstv %s517
        %v519 = vadd.s32 %v509, %v518
        %v520 = vadd.s32 %v510, %v518
        %v521 = vadd.s32 %v511, %v518
        %v522 = vadd.s32 %v512, %v518
        %v523 = vadd.s32 %v513, %v518
        %v524 = vadd.s32 %v514, %v518
        %v525 = vadd.s32 %v515, %v518
        %v526 = vadd.s32 %v516, %v518
        %vm527 = vcmp.lt.s32.totalorder %v519, 128
        %vm528 = vcmp.lt.s32.totalorder %v520, 128
        %vm529 = vcmp.lt.s32.totalorder %v521, 128
        %vm530 = vcmp.lt.s32.totalorder %v522, 128
        %vm531 = vcmp.lt.s32.totalorder %v523, 128
        %vm532 = vcmp.lt.s32.totalorder %v524, 128
        %vm533 = vcmp.lt.s32.totalorder %v525, 128
        %vm534 = vcmp.lt.s32.totalorder %v526, 128
        %v535 = vsel %vm527, 1, 0
        %v536 = vsel %vm528, 1, 0
        %v537 = vsel %vm529, 1, 0
        %v538 = vsel %vm530, 1, 0
        %v539 = vsel %vm531, 1, 0
        %v540 = vsel %vm532, 1, 0
        %v541 = vsel %vm533, 1, 0
        %v542 = vsel %vm534, 1, 0
        %vm543 = vcmp.eq.s32.totalorder %v535, 1
        %vm544 = vcmp.eq.s32.totalorder %v536, 1
        %vm545 = vcmp.eq.s32.totalorder %v537, 1
        %vm546 = vcmp.eq.s32.totalorder %v538, 1
        %vm547 = vcmp.eq.s32.totalorder %v539, 1
        %vm548 = vcmp.eq.s32.totalorder %v540, 1
        %vm549 = vcmp.eq.s32.totalorder %v541, 1
        %vm550 = vcmp.eq.s32.totalorder %v542, 1
        %v551 = vsel %vm543, %v445, inf
        %v552 = vsel %vm544, %v447, inf
        %v553 = vsel %vm545, %v450, inf
        %v554 = vsel %vm546, %v452, inf
        %v555 = vsel %vm547, %v455, inf
        %v556 = vsel %vm548, %v457, inf
        %v557 = vsel %vm549, %v460, inf
        %v558 = vsel %vm550, %v462, inf
        %v559 = vmin.f32 %v551, %v555
        %v560 = vmin.f32 %v552, %v556
        %v561 = vmin.f32 %v553, %v557
        %v562 = vmin.f32 %v554, %v558
        %v563 = vmin.f32 %v559, %v560
        %v564 = vmin.f32 %v561, %v562
        %v565 = vmin.f32 %v563, %v564
        %v566 = vrot.slane %v565, 4
        %v567 = vmin.f32 %v565, %v566
        %v568 = vrot.slane %v567, 2
        %v569 = vmin.f32 %v567, %v568
        %v570 = vrot.slane %v569, 1
        %v571 = vmin.f32 %v569, %v570
        %572 = vst [vmem:[%s244] sm:$0x1] %v571
        %v573 = vsel %vm543, %v445, -inf
        %v574 = vsel %vm544, %v447, -inf
        %v575 = vsel %vm545, %v450, -inf
        %v576 = vsel %vm546, %v452, -inf
        %v577 = vsel %vm547, %v455, -inf
        %v578 = vsel %vm548, %v457, -inf
        %v579 = vsel %vm549, %v460, -inf
        %v580 = vsel %vm550, %v462, -inf
        %v581 = vmax.f32 %v573, %v577
        %v582 = vmax.f32 %v574, %v578
        %v583 = vmax.f32 %v575, %v579
        %v584 = vmax.f32 %v576, %v580
        %v585 = vmax.f32 %v581, %v582
        %v586 = vmax.f32 %v583, %v584
        %v587 = vmax.f32 %v585, %v586
        %v588 = vrot.slane %v587, 4
        %v589 = vmax.f32 %v587, %v588
        %v590 = vrot.slane %v589, 2
        %v591 = vmax.f32 %v589, %v590
        %v592 = vrot.slane %v591, 1
        %v593 = vmax.f32 %v591, %v592
        %594 = vst [vmem:[%s247] sm:$0x1] %v593
      $region40: #{generalized_rcnn_forward.7} parent=31 // pred_fallthru
        _
      %s595 = smul.u32 8, %s17
      %p596 = scmp.lt.s32.totalorder %s595, 15
      %s597 = scalar_select %p596, %s595, 15
      %s598 = smul.addr %s597, 8
      %s599 = scalar_lea.vmem %s3, %s598
      %p600 = scmp.lt.s32.totalorder %s17, 1
      %s601 = scalar_select %p600, %s17, 1
      %s602 = scalar_lea.vmem %s4, %s601
      %p603 = scmp.lt.s32.totalorder %s17, 1
      %s604 = scalar_select %p603, %s17, 1
      %s605 = scalar_lea.vmem %s5, %s604
      // Predicated region
      $region41: #{generalized_rcnn_forward.7} parent=31 // pred_check
        %p606 = pneg %p103
      $region42: #{generalized_rcnn_forward.7} parent=31 // pred_check_branch
        %608 = sbr.rel (%p606) target = $region44
      $region43: #{generalized_rcnn_forward.7} parent=31 // pred_region
        %s609 = smul.u32 8, %s17
      $region44: #{generalized_rcnn_forward.7} parent=31 // pred_fallthru
        _
      // Predicated region
      $region45: #{generalized_rcnn_forward.7} parent=31 // pred_check
        %p610 = pneg %p129
      $region46: #{generalized_rcnn_forward.7} parent=31 // pred_check_branch
        %612 = sbr.rel (%p610) target = $region48
      $region47: #{generalized_rcnn_forward.7} parent=31 // pred_region
        _
      $region48: #{generalized_rcnn_forward.7} parent=31 // pred_fallthru
        _
      // Predicated region
      $region49: #{generalized_rcnn_forward.7} parent=31 // pred_check
        %p613 = pneg %p155
      $region50: #{generalized_rcnn_forward.7} parent=31 // pred_check_branch
        %615 = sbr.rel (%p613) target = $region52
      $region51: #{generalized_rcnn_forward.7} parent=31 // pred_region
        _
      $region52: #{generalized_rcnn_forward.7} parent=31 // pred_fallthru
        _
    $region32: #{generalized_rcnn_forward.7} parent=5 // pred_fallthru
      _
    %p616 = scmp.le.s32.totalorder 2, %s12
    // Predicated region
    $region53: #{generalized_rcnn_forward.7} parent=5 // pred_check
      %p617 = pneg %p616
    $region54: #{generalized_rcnn_forward.7} parent=5 // pred_check_branch
      %619 = sbr.rel (%p617) target = $region56
    $region55: #{generalized_rcnn_forward.7} parent=5 // pred_region
      %s620 = ssub.s32 %s12, 2
      // Predicated region
      $region57: #{generalized_rcnn_forward.7} parent=55 // pred_check
        %p621 = pneg %p109
      $region58: #{generalized_rcnn_forward.7} parent=55 // pred_check_branch
        %623 = sbr.rel (%p621) target = $region60
      $region59: #{generalized_rcnn_forward.7} parent=55 // pred_region
        %s624 = smul.u32 8, %s18
        %p625 = scmp.lt.s32.totalorder %s624, 15
        %s626 = scalar_select %p625, %s624, 15
        %s627 = smul.addr %s626, 8
        %s628 = scalar_lea.vmem %s3, %s627
      $region60: #{generalized_rcnn_forward.7} parent=55 // pred_fallthru
        _
      // Predicated region
      $region61: #{generalized_rcnn_forward.7} parent=55 // pred_check
        %p629 = pneg %p135
      $region62: #{generalized_rcnn_forward.7} parent=55 // pred_check_branch
        %631 = sbr.rel (%p629) target = $region64
      $region63: #{generalized_rcnn_forward.7} parent=55 // pred_region
        %p632 = scmp.lt.s32.totalorder %s18, 1
        %s633 = scalar_select %p632, %s18, 1
        %s634 = scalar_lea.vmem %s4, %s633
      $region64: #{generalized_rcnn_forward.7} parent=55 // pred_fallthru
        _
      // Predicated region
      $region65: #{generalized_rcnn_forward.7} parent=55 // pred_check
        %p635 = pneg %p161
      $region66: #{generalized_rcnn_forward.7} parent=55 // pred_check_branch
        %637 = sbr.rel (%p635) target = $region68
      $region67: #{generalized_rcnn_forward.7} parent=55 // pred_region
        %p638 = scmp.lt.s32.totalorder %s18, 1
        %s639 = scalar_select %p638, %s18, 1
        %s640 = scalar_lea.vmem %s5, %s639
      $region68: #{generalized_rcnn_forward.7} parent=55 // pred_fallthru
        _
    $region56: #{generalized_rcnn_forward.7} parent=5 // pred_fallthru
      _
  $region6: #{generalized_rcnn_forward.7} parent=0 // loop_footer
    %s16 = sadd.s32 1, %s12
  $region7: #{generalized_rcnn_forward.7} parent=0 // loop_footer_branch
    %11 = sbr.rel target = $region3
  $region8: #{generalized_rcnn_forward.7} parent=0 // loop_exit
    _

// kernel: generalized_rcnn_forward.8
$region0: #{generalized_rcnn_forward.8}
  #allocation0 [shape = 'u32[]', space=smem, size = 0x4, offset = 0x4, fixed_abs, tag = 'smem constant byte address 0x4 - core index']
  #allocation1 [shape = 'u32[72,128]{1,0:T(1,128)}', space=vmem, size = 0x9000, scoped, tag = 'internal scratch']
  %s0 = inlined_call_operand.vmem [shape: f32[2], index: 0, kind: input, shape index: {}]
  %s1 = inlined_call_operand.vmem [shape: f32[2,16,2048], index: 1, kind: input, shape index: {}]
  %s2 = inlined_call_operand.hbm [shape: f32[2,256,32768], index: 2, kind: output, shape index: {}]
  %s3 = sld [smem:[#allocation0]]
  $region53: #{generalized_rcnn_forward.8} parent=0
    _
  %s5 = ssub.s32 1, %s3
  %s6 = scalar_select 0, %s5, %s3
  $region1: #{generalized_rcnn_forward.8} parent=0
    #allocation2 [shape = 'u8[512]{0}', space=smem, size = 0x200, scoped, tag = 'input window, operand 0, single buffered']
    #allocation3 [shape = 's32[2]{0}', space=sflag, size = 0x8, scoped, tag = 'scoped memory for generalized_rcnn_forward.8']
    #allocation4 [shape = 's32[2]{0}', space=sflag, size = 0x8, scoped, tag = 'scoped memory for generalized_rcnn_forward.8']
    #allocation5 [shape = 'u8[4194304]{0}', space=vmem, size = 0x400000, scoped, tag = 'output window, operand 0']
    %7 = vsyncpa [#allocation4], 0
    %8 = vsyncpa [#allocation3], 0
    %s9 = scalar_lea.sflag [#allocation3], 1
    %10 = vsyncpa %s9, 0
    loop: start=0, step=1, limit=34
    $region2: #{generalized_rcnn_forward.8} parent=1 // loop_pre_header
      _
    $region3: #{generalized_rcnn_forward.8} parent=1 // loop_header
      %s12 = sphi 0, %s16
      %p13 = scmp.ge.s32.totalorder %s12, 34
      %s19 = sphi 0, %s31
      %s20 = sphi 0, %s27
      %s21 = sphi 0, %s19
      %s22 = sphi 0, %s20
      %s23 = sphi 0, %s21
      %s24 = sphi 0, %s22
      %s32 = sphi 0, %s32
      %s34 = sphi 0, %s32
      %s35 = sphi 0, %s34
      %s49 = sphi 0, %s35
      %s55 = sphi 0, %s57
      %s58 = sphi 0, %s55
      %s59 = sphi 0, %s58
      %s75 = sphi 0, %s59
      %s83 = sphi 0, %s85
      %s86 = sphi 0, %s83
      %s87 = sphi 0, %s86
      %s103 = sphi 0, %s87
    $region4: #{generalized_rcnn_forward.8} parent=1 // loop_header_branch
      %15 = sbr.rel (%p13) target = $region8
    $region5: #{generalized_rcnn_forward.8} parent=1 // loop_body
      %s17 = ssub.s32 %s12, 1
      %s18 = ssub.s32 %s12, 2
      %s25 = sadd.s32 1, %s20
      %p26 = scmp.ge.s32.totalorder %s25, 16
      %s27 = scalar_select %p26, 0, %s25
      %s28 = sadd.s32 1, %s19
      %s29 = scalar_select %p26, %s28, %s19
      %p30 = scmp.ge.s32.totalorder %s29, 2
      %s31 = scalar_select %p30, 0, %s29
      %s33 = sadd.s32 %s32, 1
      %p36 = scmp.eq.s32.totalorder %s12, 31
      %p37 = scmp.ne.s32.totalorder %s32, %s34
      %p38 = scmp.eq.s32.totalorder %s12, 0
      %p39 = por %p37, %p38
      %p40 = scmp.ne.s32.totalorder %s32, %s34
      %p41 = scmp.eq.s32.totalorder %s17, 31
      %p42 = por %p40, %p41
      %p43 = scmp.ne.s32.totalorder %s34, %s35
      %p44 = scmp.eq.s32.totalorder %s17, 0
      %p45 = por %p43, %p44
      %p46 = scmp.ne.s32.totalorder %s34, %s35
      %p47 = scmp.eq.s32.totalorder %s18, 31
      %p48 = por %p46, %p47
      %p50 = scmp.ne.s32.totalorder %s35, %s49
      %p51 = scmp.eq.s32.totalorder %s18, 0
      %p52 = por %p50, %p51
      %s53 = ssub.s32 %s19, %s31
      %p54 = scmp.eq.s32.totalorder %s53, 0
      %s56 = sadd.s32 %s55, 1
      %s57 = scalar_select %p54, %s55, %s56
      %p60 = pneg %p54
      %p61 = scmp.eq.s32.totalorder %s12, 31
      %p62 = por %p60, %p61
      %p63 = scmp.ne.s32.totalorder %s55, %s58
      %p64 = scmp.eq.s32.totalorder %s12, 0
      %p65 = por %p63, %p64
      %p66 = scmp.ne.s32.totalorder %s55, %s58
      %p67 = scmp.eq.s32.totalorder %s17, 31
      %p68 = por %p66, %p67
      %p69 = scmp.ne.s32.totalorder %s58, %s59
      %p70 = scmp.eq.s32.totalorder %s17, 0
      %p71 = por %p69, %p70
      %p72 = scmp.ne.s32.totalorder %s58, %s59
      %p73 = scmp.eq.s32.totalorder %s18, 31
      %p74 = por %p72, %p73
      %p76 = scmp.ne.s32.totalorder %s59, %s75
      %p77 = scmp.eq.s32.totalorder %s18, 0
      %p78 = por %p76, %p77
      %s79 = ssub.s32 %s19, %s31
      %s80 = ssub.s32 %s20, %s27
      %s81 = sor.u32 %s79, %s80
      %p82 = scmp.eq.s32.totalorder %s81, 0
      %s84 = sadd.s32 %s83, 1
      %s85 = scalar_select %p82, %s83, %s84
      %p88 = pneg %p82
      %p89 = scmp.eq.s32.totalorder %s12, 31
      %p90 = por %p88, %p89
      %p91 = scmp.ne.s32.totalorder %s83, %s86
      %p92 = scmp.eq.s32.totalorder %s12, 0
      %p93 = por %p91, %p92
      %p94 = scmp.ne.s32.totalorder %s83, %s86
      %p95 = scmp.eq.s32.totalorder %s17, 31
      %p96 = por %p94, %p95
      %p97 = scmp.ne.s32.totalorder %s86, %s87
      %p98 = scmp.eq.s32.totalorder %s17, 0
      %p99 = por %p97, %p98
      %p100 = scmp.ne.s32.totalorder %s86, %s87
      %p101 = scmp.eq.s32.totalorder %s18, 31
      %p102 = por %p100, %p101
      %p104 = scmp.ne.s32.totalorder %s87, %s103
      %p105 = scmp.eq.s32.totalorder %s18, 0
      %p106 = por %p104, %p105
      %p107 = scmp.le.s32.totalorder 1, %s12
      %p108 = scmp.lt.s32.totalorder %s12, 33
      %p109 = pnand %p107, %p108
      %p110 = pneg %p109
      // Predicated region
      $region9: #{generalized_rcnn_forward.8} parent=5 // pred_check
        _
      $region10: #{generalized_rcnn_forward.8} parent=5 // pred_check_branch
        %112 = sbr.rel (%p109) target = $region12
      $region11: #{generalized_rcnn_forward.8} parent=5 // pred_region
        %s113 = ssub.s32 %s12, 1
        // Predicated region
        $region13: #{generalized_rcnn_forward.8} parent=11 // pred_check
          %p114 = pneg %p45
        $region14: #{generalized_rcnn_forward.8} parent=11 // pred_check_branch
          %116 = sbr.rel (%p114) target = $region16
        $region15: #{generalized_rcnn_forward.8} parent=11 // pred_region
          %118 = vsyncadd [#allocation4], 0
          %s120 = sshll.u32 %s0, 4
          %s121 = int_to_ptr.vmem [resolvable:$true] %s120
          %123 = dma.vmem_to_smem %s121, 16, [#allocation2], [#allocation4]
        $region16: #{generalized_rcnn_forward.8} parent=11 // pred_fallthru
          _
      $region12: #{generalized_rcnn_forward.8} parent=5 // pred_fallthru
        _
      %p124 = scmp.lt.s32.totalorder %s12, 32
      // Predicated region
      $region17: #{generalized_rcnn_forward.8} parent=5 // pred_check
        %p125 = pneg %p124
      $region18: #{generalized_rcnn_forward.8} parent=5 // pred_check_branch
        %127 = sbr.rel (%p125) target = $region20
      $region19: #{generalized_rcnn_forward.8} parent=5 // pred_region
        // Predicated region
        $region21: #{generalized_rcnn_forward.8} parent=19 // pred_check
          %p128 = pneg %p65
        $region22: #{generalized_rcnn_forward.8} parent=19 // pred_check_branch
          %130 = sbr.rel (%p128) target = $region24
        $region23: #{generalized_rcnn_forward.8} parent=19 // pred_region
          %p131 = scmp.lt.s32.totalorder %s19, 1
          %s132 = scalar_select %p131, %s19, 1
          %s133 = smul.addr %s132, 32
          %s134 = smul.addr %s133, 8
          %s135 = scalar_lea.vmem %s1, %s134
        $region24: #{generalized_rcnn_forward.8} parent=19 // pred_fallthru
          _
      $region20: #{generalized_rcnn_forward.8} parent=5 // pred_fallthru
        _
      %p136 = scmp.le.s32.totalorder 1, %s12
      %p137 = scmp.lt.s32.totalorder %s12, 33
      %p138 = pnand %p136, %p137
      %p139 = pneg %p138
      // Predicated region
      $region25: #{generalized_rcnn_forward.8} parent=5 // pred_check
        _
      $region26: #{generalized_rcnn_forward.8} parent=5 // pred_check_branch
        %141 = sbr.rel (%p138) target = $region28
      $region27: #{generalized_rcnn_forward.8} parent=5 // pred_region
        %s142 = ssub.s32 %s12, 1
        // Predicated region
        $region29: #{generalized_rcnn_forward.8} parent=27 // pred_check
          %p143 = pneg %p45
        $region30: #{generalized_rcnn_forward.8} parent=27 // pred_check_branch
          %145 = sbr.rel (%p143) target = $region32
        $region31: #{generalized_rcnn_forward.8} parent=27 // pred_region
          %147 = dma.done [#allocation4], 16
        $region32: #{generalized_rcnn_forward.8} parent=27 // pred_fallthru
          _
        %148 = sfence
        %p149 = pneg %p45
        %p150 = pneg %p42
        %p151 = scmp.lt.s32.totalorder %s21, 1
        %s152 = scalar_select %p151, %s21, 1
        %s153 = smul.addr %s152, 32
        %s154 = smul.addr %s153, 8
        %s155 = scalar_lea.vmem %s1, %s154
        %p156 = pneg %p71
        %p157 = pneg %p68
        %p158 = pneg %p99
        %p159 = pneg %p96
        %s160 = sand.u32 %s86, 1
        %s161 = scalar_lea.sflag [#allocation3], %s160
        %s162 = sand.u32 %s86, 1
        %s163 = smul.addr %s162, 4096
        %s164 = scalar_lea.vmem [#allocation5], %s163
        %p165 = scmp.lt.s32.totalorder %s21, 1
        %s166 = scalar_select %p165, %s21, 1
        %s167 = smul.addr %s166, 32
        %s168 = smul.addr %s167, 8
        %s169 = scalar_lea.vmem %s1, %s168
        %s170 = smul.u32 2, %s22
        %s171 = sld [smem:[#allocation2]]
        %s172 = sld [smem:[#allocation2 + $0x1]]
        %s173 = ssub.f32 0.0, %s171
        %s174 = smul.f32 %s173, %s172
        %p175 = scmp.eq.s32.totalorder %s22, 0
        // Predicated region
        $region33: #{generalized_rcnn_forward.8} parent=27 // pred_check
          %p176 = pneg %p175
        $region34: #{generalized_rcnn_forward.8} parent=27 // pred_check_branch
          %178 = sbr.rel (%p176) target = $region36
        $region35: #{generalized_rcnn_forward.8} parent=27 // pred_region
          %v179 = vld [vmem:[%s169] sm:$0xff]
          %v180 = vld [vmem:[%s169 + $0x8] sm:$0xff]
          %v181 = vld [vmem:[%s169 + $0x10] sm:$0xff]
          %v182 = vld [vmem:[%s169 + $0x18] sm:$0xff]
          %v183 = vld [vmem:[%s169 + $0x20] sm:$0xff]
          %v184 = vld [vmem:[%s169 + $0x28] sm:$0xff]
          %v185 = vld [vmem:[%s169 + $0x30] sm:$0xff]
          %v186 = vld [vmem:[%s169 + $0x38] sm:$0xff]
          %v187 = vld [vmem:[%s169 + $0x40] sm:$0xff]
          %v188 = vld [vmem:[%s169 + $0x48] sm:$0xff]
          %v189 = vld [vmem:[%s169 + $0x50] sm:$0xff]
          %v190 = vld [vmem:[%s169 + $0x58] sm:$0xff]
          %v191 = vld [vmem:[%s169 + $0x60] sm:$0xff]
          %v192 = vld [vmem:[%s169 + $0x68] sm:$0xff]
          %v193 = vld [vmem:[%s169 + $0x70] sm:$0xff]
          %v194 = vld [vmem:[%s169 + $0x78] sm:$0xff]
          %v195 = vld [vmem:[%s169 + $0x80] sm:$0xff]
          %v196 = vld [vmem:[%s169 + $0x88] sm:$0xff]
          %v197 = vld [vmem:[%s169 + $0x90] sm:$0xff]
          %v198 = vld [vmem:[%s169 + $0x98] sm:$0xff]
          %v199 = vld [vmem:[%s169 + $0xa0] sm:$0xff]
          %v200 = vld [vmem:[%s169 + $0xa8] sm:$0xff]
          %v201 = vld [vmem:[%s169 + $0xb0] sm:$0xff]
          %v202 = vld [vmem:[%s169 + $0xb8] sm:$0xff]
          %v203 = vld [vmem:[%s169 + $0xc0] sm:$0xff]
          %v204 = vld [vmem:[%s169 + $0xc8] sm:$0xff]
          %v205 = vld [vmem:[%s169 + $0xd0] sm:$0xff]
          %v206 = vld [vmem:[%s169 + $0xd8] sm:$0xff]
          %v207 = vld [vmem:[%s169 + $0xe0] sm:$0xff]
          %v208 = vld [vmem:[%s169 + $0xe8] sm:$0xff]
          %v209 = vld [vmem:[%s169 + $0xf0] sm:$0xff]
          %v210 = vld [vmem:[%s169 + $0xf8] sm:$0xff]
          %v211 = vstv %s171
          %v212 = vsub.f32 %v179, %v211
          %v213 = vsub.f32 %v180, %v211
          %v214 = vsub.f32 %v181, %v211
          %v215 = vsub.f32 %v182, %v211
          %v216 = vsub.f32 %v183, %v211
          %v217 = vsub.f32 %v184, %v211
          %v218 = vsub.f32 %v185, %v211
          %v219 = vsub.f32 %v186, %v211
          %v220 = vsub.f32 %v187, %v211
          %v221 = vsub.f32 %v188, %v211
          %v222 = vsub.f32 %v189, %v211
          %v223 = vsub.f32 %v190, %v211
          %v224 = vsub.f32 %v191, %v211
          %v225 = vsub.f32 %v192, %v211
          %v226 = vsub.f32 %v193, %v211
          %v227 = vsub.f32 %v194, %v211
          %v228 = vsub.f32 %v195, %v211
          %v229 = vsub.f32 %v196, %v211
          %v230 = vsub.f32 %v197, %v211
          %v231 = vsub.f32 %v198, %v211
          %v232 = vsub.f32 %v199, %v211
          %v233 = vsub.f32 %v200, %v211
          %v234 = vsub.f32 %v201, %v211
          %v235 = vsub.f32 %v202, %v211
          %v236 = vsub.f32 %v203, %v211
          %v237 = vsub.f32 %v204, %v211
          %v238 = vsub.f32 %v205, %v211
          %v239 = vsub.f32 %v206, %v211
          %v240 = vsub.f32 %v207, %v211
          %v241 = vsub.f32 %v208, %v211
          %v242 = vsub.f32 %v209, %v211
          %v243 = vsub.f32 %v210, %v211
          %v244 = vstv %s172
          %v245 = vmul.f32 %v212, %v244
          %v246 = vmul.f32 %v213, %v244
          %v247 = vmul.f32 %v214, %v244
          %v248 = vmul.f32 %v215, %v244
          %v249 = vmul.f32 %v216, %v244
          %v250 = vmul.f32 %v217, %v244
          %v251 = vmul.f32 %v218, %v244
          %v252 = vmul.f32 %v219, %v244
          %v253 = vmul.f32 %v220, %v244
          %v254 = vmul.f32 %v221, %v244
          %v255 = vmul.f32 %v222, %v244
          %v256 = vmul.f32 %v223, %v244
          %v257 = vmul.f32 %v224, %v244
          %v258 = vmul.f32 %v225, %v244
          %v259 = vmul.f32 %v226, %v244
          %v260 = vmul.f32 %v227, %v244
          %v261 = vmul.f32 %v228, %v244
          %v262 = vmul.f32 %v229, %v244
          %v263 = vmul.f32 %v230, %v244
          %v264 = vmul.f32 %v231, %v244
          %v265 = vmul.f32 %v232, %v244
          %v266 = vmul.f32 %v233, %v244
          %v267 = vmul.f32 %v234, %v244
          %v268 = vmul.f32 %v235, %v244
          %v269 = vmul.f32 %v236, %v244
          %v270 = vmul.f32 %v237, %v244
          %v271 = vmul.f32 %v238, %v244
          %v272 = vmul.f32 %v239, %v244
          %v273 = vmul.f32 %v240, %v244
          %v274 = vmul.f32 %v241, %v244
          %v275 = vmul.f32 %v242, %v244
          %v276 = vmul.f32 %v243, %v244
          %277 = vst [vmem:[%s164] sm:$0xff] %v245
          %278 = vst [vmem:[%s164 + $0x8] sm:$0xff] %v246
          %279 = vst [vmem:[%s164 + $0x10] sm:$0xff] %v247
          %280 = vst [vmem:[%s164 + $0x18] sm:$0xff] %v248
          %281 = vst [vmem:[%s164 + $0x20] sm:$0xff] %v249
          %282 = vst [vmem:[%s164 + $0x28] sm:$0xff] %v250
          %283 = vst [vmem:[%s164 + $0x30] sm:$0xff] %v251
          %284 = vst [vmem:[%s164 + $0x38] sm:$0xff] %v252
          %285 = vst [vmem:[%s164 + $0x40] sm:$0xff] %v253
          %286 = vst [vmem:[%s164 + $0x48] sm:$0xff] %v254
          %287 = vst [vmem:[%s164 + $0x50] sm:$0xff] %v255
          %288 = vst [vmem:[%s164 + $0x58] sm:$0xff] %v256
          %289 = vst [vmem:[%s164 + $0x60] sm:$0xff] %v257
          %290 = vst [vmem:[%s164 + $0x68] sm:$0xff] %v258
          %291 = vst [vmem:[%s164 + $0x70] sm:$0xff] %v259
          %292 = vst [vmem:[%s164 + $0x78] sm:$0xff] %v260
          %293 = vst [vmem:[%s164 + $0x800] sm:$0xff] %v261
          %294 = vst [vmem:[%s164 + $0x808] sm:$0xff] %v262
          %295 = vst [vmem:[%s164 + $0x810] sm:$0xff] %v263
          %296 = vst [vmem:[%s164 + $0x818] sm:$0xff] %v264
          %297 = vst [vmem:[%s164 + $0x820] sm:$0xff] %v265
          %298 = vst [vmem:[%s164 + $0x828] sm:$0xff] %v266
          %299 = vst [vmem:[%s164 + $0x830] sm:$0xff] %v267
          %300 = vst [vmem:[%s164 + $0x838] sm:$0xff] %v268
          %301 = vst [vmem:[%s164 + $0x840] sm:$0xff] %v269
          %302 = vst [vmem:[%s164 + $0x848] sm:$0xff] %v270
          %303 = vst [vmem:[%s164 + $0x850] sm:$0xff] %v271
          %304 = vst [vmem:[%s164 + $0x858] sm:$0xff] %v272
          %305 = vst [vmem:[%s164 + $0x860] sm:$0xff] %v273
          %306 = vst [vmem:[%s164 + $0x868] sm:$0xff] %v274
          %307 = vst [vmem:[%s164 + $0x870] sm:$0xff] %v275
          %308 = vst [vmem:[%s164 + $0x878] sm:$0xff] %v276
          %v309 = vstv %s174
          %310 = vst [vmem:[%s164 + $0x80] sm:$0xff] %v309
          %311 = vst [vmem:[%s164 + $0x88] sm:$0xff] %v309
          %312 = vst [vmem:[%s164 + $0x90] sm:$0xff] %v309
          %313 = vst [vmem:[%s164 + $0x98] sm:$0xff] %v309
          %314 = vst [vmem:[%s164 + $0xa0] sm:$0xff] %v309
          %315 = vst [vmem:[%s164 + $0xa8] sm:$0xff] %v309
          %316 = vst [vmem:[%s164 + $0xb0] sm:$0xff] %v309
          %317 = vst [vmem:[%s164 + $0xb8] sm:$0xff] %v309
          %318 = vst [vmem:[%s164 + $0xc0] sm:$0xff] %v309
          %319 = vst [vmem:[%s164 + $0xc8] sm:$0xff] %v309
          %320 = vst [vmem:[%s164 + $0xd0] sm:$0xff] %v309
          %321 = vst [vmem:[%s164 + $0xd8] sm:$0xff] %v309
          %322 = vst [vmem:[%s164 + $0xe0] sm:$0xff] %v309
          %323 = vst [vmem:[%s164 + $0xe8] sm:$0xff] %v309
          %324 = vst [vmem:[%s164 + $0xf0] sm:$0xff] %v309
          %325 = vst [vmem:[%s164 + $0xf8] sm:$0xff] %v309
          %326 = vst [vmem:[%s164 + $0x100] sm:$0xff] %v309
          %327 = vst [vmem:[%s164 + $0x108] sm:$0xff] %v309
          %328 = vst [vmem:[%s164 + $0x110] sm:$0xff] %v309
          %329 = vst [vmem:[%s164 + $0x118] sm:$0xff] %v309
          %330 = vst [vmem:[%s164 + $0x120] sm:$0xff] %v309
          %331 = vst [vmem:[%s164 + $0x128] sm:$0xff] %v309
          %332 = vst [vmem:[%s164 + $0x130] sm:$0xff] %v309
          %333 = vst [vmem:[%s164 + $0x138] sm:$0xff] %v309
          %334 = vst [vmem:[%s164 + $0x140] sm:$0xff] %v309
          %335 = vst [vmem:[%s164 + $0x148] sm:$0xff] %v309
          %336 = vst [vmem:[%s164 + $0x150] sm:$0xff] %v309
          %337 = vst [vmem:[%s164 + $0x158] sm:$0xff] %v309
          %338 = vst [vmem:[%s164 + $0x160] sm:$0xff] %v309
          %339 = vst [vmem:[%s164 + $0x168] sm:$0xff] %v309
          %340 = vst [vmem:[%s164 + $0x170] sm:$0xff] %v309
          %341 = vst [vmem:[%s164 + $0x178] sm:$0xff] %v309
          %342 = vst [vmem:[%s164 + $0x180] sm:$0xff] %v309
          %343 = vst [vmem:[%s164 + $0x188] sm:$0xff] %v309
          %344 = vst [vmem:[%s164 + $0x190] sm:$0xff] %v309
          %345 = vst [vmem:[%s164 + $0x198] sm:$0xff] %v309
          %346 = vst [vmem:[%s164 + $0x1a0] sm:$0xff] %v309
          %347 = vst [vmem:[%s164 + $0x1a8] sm:$0xff] %v309
          %348 = vst [vmem:[%s164 + $0x1b0] sm:$0xff] %v309
          %349 = vst [vmem:[%s164 + $0x1b8] sm:$0xff] %v309
          %350 = vst [vmem:[%s164 + $0x1c0] sm:$0xff] %v309
          %351 = vst [vmem:[%s164 + $0x1c8] sm:$0xff] %v309
          %352 = vst [vmem:[%s164 + $0x1d0] sm:$0xff] %v309
          %353 = vst [vmem:[%s164 + $0x1d8] sm:$0xff] %v309
          %354 = vst [vmem:[%s164 + $0x1e0] sm:$0xff] %v309
          %355 = vst [vmem:[%s164 + $0x1e8] sm:$0xff] %v309
          %356 = vst [vmem:[%s164 + $0x1f0] sm:$0xff] %v309
          %357 = vst [vmem:[%s164 + $0x1f8] sm:$0xff] %v309
          %358 = vst [vmem:[%s164 + $0x200] sm:$0xff] %v309
          %359 = vst [vmem:[%s164 + $0x208] sm:$0xff] %v309
          %360 = vst [vmem:[%s164 + $0x210] sm:$0xff] %v309
          %361 = vst [vmem:[%s164 + $0x218] sm:$0xff] %v309
          %362 = vst [vmem:[%s164 + $0x220] sm:$0xff] %v309
          %363 = vst [vmem:[%s164 + $0x228] sm:$0xff] %v309
          %364 = vst [vmem:[%s164 + $0x230] sm:$0xff] %v309
          %365 = vst [vmem:[%s164 + $0x238] sm:$0xff] %v309
          %366 = vst [vmem:[%s164 + $0x240] sm:$0xff] %v309
          %367 = vst [vmem:[%s164 + $0x248] sm:$0xff] %v309
          %368 = vst [vmem:[%s164 + $0x250] sm:$0xff] %v309
          %369 = vst [vmem:[%s164 + $0x258] sm:$0xff] %v309
          %370 = vst [vmem:[%s164 + $0x260] sm:$0xff] %v309
          %371 = vst [vmem:[%s164 + $0x268] sm:$0xff] %v309
          %372 = vst [vmem:[%s164 + $0x270] sm:$0xff] %v309
          %373 = vst [vmem:[%s164 + $0x278] sm:$0xff] %v309
          %374 = vst [vmem:[%s164 + $0x280] sm:$0xff] %v309
          %375 = vst [vmem:[%s164 + $0x288] sm:$0xff] %v309
          %376 = vst [vmem:[%s164 + $0x290] sm:$0xff] %v309
          %377 = vst [vmem:[%s164 + $0x298] sm:$0xff] %v309
          %378 = vst [vmem:[%s164 + $0x2a0] sm:$0xff] %v309
          %379 = vst [vmem:[%s164 + $0x2a8] sm:$0xff] %v309
          %380 = vst [vmem:[%s164 + $0x2b0] sm:$0xff] %v309
          %381 = vst [vmem:[%s164 + $0x2b8] sm:$0xff] %v309
          %382 = vst [vmem:[%s164 + $0x2c0] sm:$0xff] %v309
          %383 = vst [vmem:[%s164 + $0x2c8] sm:$0xff] %v309
          %384 = vst [vmem:[%s164 + $0x2d0] sm:$0xff] %v309
          %385 = vst [vmem:[%s164 + $0x2d8] sm:$0xff] %v309
          %386 = vst [vmem:[%s164 + $0x2e0] sm:$0xff] %v309
          %387 = vst [vmem:[%s164 + $0x2e8] sm:$0xff] %v309
          %388 = vst [vmem:[%s164 + $0x2f0] sm:$0xff] %v309
          %389 = vst [vmem:[%s164 + $0x2f8] sm:$0xff] %v309
          %390 = vst [vmem:[%s164 + $0x300] sm:$0xff] %v309
          %391 = vst [vmem:[%s164 + $0x308] sm:$0xff] %v309
          %392 = vst [vmem:[%s164 + $0x310] sm:$0xff] %v309
          %393 = vst [vmem:[%s164 + $0x318] sm:$0xff] %v309
          %394 = vst [vmem:[%s164 + $0x320] sm:$0xff] %v309
          %395 = vst [vmem:[%s164 + $0x328] sm:$0xff] %v309
          %396 = vst [vmem:[%s164 + $0x330] sm:$0xff] %v309
          %397 = vst [vmem:[%s164 + $0x338] sm:$0xff] %v309
          %398 = vst [vmem:[%s164 + $0x340] sm:$0xff] %v309
          %399 = vst [vmem:[%s164 + $0x348] sm:$0xff] %v309
          %400 = vst [vmem:[%s164 + $0x350] sm:$0xff] %v309
          %401 = vst [vmem:[%s164 + $0x358] sm:$0xff] %v309
          %402 = vst [vmem:[%s164 + $0x360] sm:$0xff] %v309
          %403 = vst [vmem:[%s164 + $0x368] sm:$0xff] %v309
          %404 = vst [vmem:[%s164 + $0x370] sm:$0xff] %v309
          %405 = vst [vmem:[%s164 + $0x378] sm:$0xff] %v309
          %406 = vst [vmem:[%s164 + $0x380] sm:$0xff] %v309
          %407 = vst [vmem:[%s164 + $0x388] sm:$0xff] %v309
          %408 = vst [vmem:[%s164 + $0x390] sm:$0xff] %v309
          %409 = vst [vmem:[%s164 + $0x398] sm:$0xff] %v309
          %410 = vst [vmem:[%s164 + $0x3a0] sm:$0xff] %v309
          %411 = vst [vmem:[%s164 + $0x3a8] sm:$0xff] %v309
          %412 = vst [vmem:[%s164 + $0x3b0] sm:$0xff] %v309
          %413 = vst [vmem:[%s164 + $0x3b8] sm:$0xff] %v309
          %414 = vst [vmem:[%s164 + $0x3c0] sm:$0xff] %v309
          %415 = vst [vmem:[%s164 + $0x3c8] sm:$0xff] %v309
          %416 = vst [vmem:[%s164 + $0x3d0] sm:$0xff] %v309
          %417 = vst [vmem:[%s164 + $0x3d8] sm:$0xff] %v309
          %418 = vst [vmem:[%s164 + $0x3e0] sm:$0xff] %v309
          %419 = vst [vmem:[%s164 + $0x3e8] sm:$0xff] %v309
          %420 = vst [vmem:[%s164 + $0x3f0] sm:$0xff] %v309
          %421 = vst [vmem:[%s164 + $0x3f8] sm:$0xff] %v309
          %422 = vst [vmem:[%s164 + $0x400] sm:$0xff] %v309
          %423 = vst [vmem:[%s164 + $0x408] sm:$0xff] %v309
          %424 = vst [vmem:[%s164 + $0x410] sm:$0xff] %v309
          %425 = vst [vmem:[%s164 + $0x418] sm:$0xff] %v309
          %426 = vst [vmem:[%s164 + $0x420] sm:$0xff] %v309
          %427 = vst [vmem:[%s164 + $0x428] sm:$0xff] %v309
          %428 = vst [vmem:[%s164 + $0x430] sm:$0xff] %v309
          %429 = vst [vmem:[%s164 + $0x438] sm:$0xff] %v309
          %430 = vst [vmem:[%s164 + $0x440] sm:$0xff] %v309
          %431 = vst [vmem:[%s164 + $0x448] sm:$0xff] %v309
          %432 = vst [vmem:[%s164 + $0x450] sm:$0xff] %v309
          %433 = vst [vmem:[%s164 + $0x458] sm:$0xff] %v309
          %434 = vst [vmem:[%s164 + $0x460] sm:$0xff] %v309
          %435 = vst [vmem:[%s164 + $0x468] sm:$0xff] %v309
          %436 = vst [vmem:[%s164 + $0x470] sm:$0xff] %v309
          %437 = vst [vmem:[%s164 + $0x478] sm:$0xff] %v309
          %438 = vst [vmem:[%s164 + $0x480] sm:$0xff] %v309
          %439 = vst [vmem:[%s164 + $0x488] sm:$0xff] %v309
          %440 = vst [vmem:[%s164 + $0x490] sm:$0xff] %v309
          %441 = vst [vmem:[%s164 + $0x498] sm:$0xff] %v309
          %442 = vst [vmem:[%s164 + $0x4a0] sm:$0xff] %v309
          %443 = vst [vmem:[%s164 + $0x4a8] sm:$0xff] %v309
          %444 = vst [vmem:[%s164 + $0x4b0] sm:$0xff] %v309
          %445 = vst [vmem:[%s164 + $0x4b8] sm:$0xff] %v309
          %446 = vst [vmem:[%s164 + $0x4c0] sm:$0xff] %v309
          %447 = vst [vmem:[%s164 + $0x4c8] sm:$0xff] %v309
          %448 = vst [vmem:[%s164 + $0x4d0] sm:$0xff] %v309
          %449 = vst [vmem:[%s164 + $0x4d8] sm:$0xff] %v309
          %450 = vst [vmem:[%s164 + $0x4e0] sm:$0xff] %v309
          %451 = vst [vmem:[%s164 + $0x4e8] sm:$0xff] %v309
          %452 = vst [vmem:[%s164 + $0x4f0] sm:$0xff] %v309
          %453 = vst [vmem:[%s164 + $0x4f8] sm:$0xff] %v309
          %454 = vst [vmem:[%s164 + $0x500] sm:$0xff] %v309
          %455 = vst [vmem:[%s164 + $0x508] sm:$0xff] %v309
          %456 = vst [vmem:[%s164 + $0x510] sm:$0xff] %v309
          %457 = vst [vmem:[%s164 + $0x518] sm:$0xff] %v309
          %458 = vst [vmem:[%s164 + $0x520] sm:$0xff] %v309
          %459 = vst [vmem:[%s164 + $0x528] sm:$0xff] %v309
          %460 = vst [vmem:[%s164 + $0x530] sm:$0xff] %v309
          %461 = vst [vmem:[%s164 + $0x538] sm:$0xff] %v309
          %462 = vst [vmem:[%s164 + $0x540] sm:$0xff] %v309
          %463 = vst [vmem:[%s164 + $0x548] sm:$0xff] %v309
          %464 = vst [vmem:[%s164 + $0x550] sm:$0xff] %v309
          %465 = vst [vmem:[%s164 + $0x558] sm:$0xff] %v309
          %466 = vst [vmem:[%s164 + $0x560] sm:$0xff] %v309
          %467 = vst [vmem:[%s164 + $0x568] sm:$0xff] %v309
          %468 = vst [vmem:[%s164 + $0x570] sm:$0xff] %v309
          %469 = vst [vmem:[%s164 + $0x578] sm:$0xff] %v309
          %470 = vst [vmem:[%s164 + $0x580] sm:$0xff] %v309
          %471 = vst [vmem:[%s164 + $0x588] sm:$0xff] %v309
          %472 = vst [vmem:[%s164 + $0x590] sm:$0xff] %v309
          %473 = vst [vmem:[%s164 + $0x598] sm:$0xff] %v309
          %474 = vst [vmem:[%s164 + $0x5a0] sm:$0xff] %v309
          %475 = vst [vmem:[%s164 + $0x5a8] sm:$0xff] %v309
          %476 = vst [vmem:[%s164 + $0x5b0] sm:$0xff] %v309
          %477 = vst [vmem:[%s164 + $0x5b8] sm:$0xff] %v309
          %478 = vst [vmem:[%s164 + $0x5c0] sm:$0xff] %v309
          %479 = vst [vmem:[%s164 + $0x5c8] sm:$0xff] %v309
          %480 = vst [vmem:[%s164 + $0x5d0] sm:$0xff] %v309
          %481 = vst [vmem:[%s164 + $0x5d8] sm:$0xff] %v309
          %482 = vst [vmem:[%s164 + $0x5e0] sm:$0xff] %v309
          %483 = vst [vmem:[%s164 + $0x5e8] sm:$0xff] %v309
          %484 = vst [vmem:[%s164 + $0x5f0] sm:$0xff] %v309
          %485 = vst [vmem:[%s164 + $0x5f8] sm:$0xff] %v309
          %486 = vst [vmem:[%s164 + $0x600] sm:$0xff] %v309
          %487 = vst [vmem:[%s164 + $0x608] sm:$0xff] %v309
          %488 = vst [vmem:[%s164 + $0x610] sm:$0xff] %v309
          %489 = vst [vmem:[%s164 + $0x618] sm:$0xff] %v309
          %490 = vst [vmem:[%s164 + $0x620] sm:$0xff] %v309
          %491 = vst [vmem:[%s164 + $0x628] sm:$0xff] %v309
          %492 = vst [vmem:[%s164 + $0x630] sm:$0xff] %v309
          %493 = vst [vmem:[%s164 + $0x638] sm:$0xff] %v309
          %494 = vst [vmem:[%s164 + $0x640] sm:$0xff] %v309
          %495 = vst [vmem:[%s164 + $0x648] sm:$0xff] %v309
          %496 = vst [vmem:[%s164 + $0x650] sm:$0xff] %v309
          %497 = vst [vmem:[%s164 + $0x658] sm:$0xff] %v309
          %498 = vst [vmem:[%s164 + $0x660] sm:$0xff] %v309
          %499 = vst [vmem:[%s164 + $0x668] sm:$0xff] %v309
          %500 = vst [vmem:[%s164 + $0x670] sm:$0xff] %v309
          %501 = vst [vmem:[%s164 + $0x678] sm:$0xff] %v309
          %502 = vst [vmem:[%s164 + $0x680] sm:$0xff] %v309
          %503 = vst [vmem:[%s164 + $0x688] sm:$0xff] %v309
          %504 = vst [vmem:[%s164 + $0x690] sm:$0xff] %v309
          %505 = vst [vmem:[%s164 + $0x698] sm:$0xff] %v309
          %506 = vst [vmem:[%s164 + $0x6a0] sm:$0xff] %v309
          %507 = vst [vmem:[%s164 + $0x6a8] sm:$0xff] %v309
          %508 = vst [vmem:[%s164 + $0x6b0] sm:$0xff] %v309
          %509 = vst [vmem:[%s164 + $0x6b8] sm:$0xff] %v309
          %510 = vst [vmem:[%s164 + $0x6c0] sm:$0xff] %v309
          %511 = vst [vmem:[%s164 + $0x6c8] sm:$0xff] %v309
          %512 = vst [vmem:[%s164 + $0x6d0] sm:$0xff] %v309
          %513 = vst [vmem:[%s164 + $0x6d8] sm:$0xff] %v309
          %514 = vst [vmem:[%s164 + $0x6e0] sm:$0xff] %v309
          %515 = vst [vmem:[%s164 + $0x6e8] sm:$0xff] %v309
          %516 = vst [vmem:[%s164 + $0x6f0] sm:$0xff] %v309
          %517 = vst [vmem:[%s164 + $0x6f8] sm:$0xff] %v309
          %518 = vst [vmem:[%s164 + $0x700] sm:$0xff] %v309
          %519 = vst [vmem:[%s164 + $0x708] sm:$0xff] %v309
          %520 = vst [vmem:[%s164 + $0x710] sm:$0xff] %v309
          %521 = vst [vmem:[%s164 + $0x718] sm:$0xff] %v309
          %522 = vst [vmem:[%s164 + $0x720] sm:$0xff] %v309
          %523 = vst [vmem:[%s164 + $0x728] sm:$0xff] %v309
          %524 = vst [vmem:[%s164 + $0x730] sm:$0xff] %v309
          %525 = vst [vmem:[%s164 + $0x738] sm:$0xff] %v309
          %526 = vst [vmem:[%s164 + $0x740] sm:$0xff] %v309
          %527 = vst [vmem:[%s164 + $0x748] sm:$0xff] %v309
          %528 = vst [vmem:[%s164 + $0x750] sm:$0xff] %v309
          %529 = vst [vmem:[%s164 + $0x758] sm:$0xff] %v309
          %530 = vst [vmem:[%s164 + $0x760] sm:$0xff] %v309
          %531 = vst [vmem:[%s164 + $0x768] sm:$0xff] %v309
          %532 = vst [vmem:[%s164 + $0x770] sm:$0xff] %v309
          %533 = vst [vmem:[%s164 + $0x778] sm:$0xff] %v309
          %534 = vst [vmem:[%s164 + $0x780] sm:$0xff] %v309
          %535 = vst [vmem:[%s164 + $0x788] sm:$0xff] %v309
          %536 = vst [vmem:[%s164 + $0x790] sm:$0xff] %v309
          %537 = vst [vmem:[%s164 + $0x798] sm:$0xff] %v309
          %538 = vst [vmem:[%s164 + $0x7a0] sm:$0xff] %v309
          %539 = vst [vmem:[%s164 + $0x7a8] sm:$0xff] %v309
          %540 = vst [vmem:[%s164 + $0x7b0] sm:$0xff] %v309
          %541 = vst [vmem:[%s164 + $0x7b8] sm:$0xff] %v309
          %542 = vst [vmem:[%s164 + $0x7c0] sm:$0xff] %v309
          %543 = vst [vmem:[%s164 + $0x7c8] sm:$0xff] %v309
          %544 = vst [vmem:[%s164 + $0x7d0] sm:$0xff] %v309
          %545 = vst [vmem:[%s164 + $0x7d8] sm:$0xff] %v309
          %546 = vst [vmem:[%s164 + $0x7e0] sm:$0xff] %v309
          %547 = vst [vmem:[%s164 + $0x7e8] sm:$0xff] %v309
          %548 = vst [vmem:[%s164 + $0x7f0] sm:$0xff] %v309
          %549 = vst [vmem:[%s164 + $0x7f8] sm:$0xff] %v309
          %550 = vst [vmem:[%s164 + $0x880] sm:$0xff] %v309
          %551 = vst [vmem:[%s164 + $0x888] sm:$0xff] %v309
          %552 = vst [vmem:[%s164 + $0x890] sm:$0xff] %v309
          %553 = vst [vmem:[%s164 + $0x898] sm:$0xff] %v309
          %554 = vst [vmem:[%s164 + $0x8a0] sm:$0xff] %v309
          %555 = vst [vmem:[%s164 + $0x8a8] sm:$0xff] %v309
          %556 = vst [vmem:[%s164 + $0x8b0] sm:$0xff] %v309
          %557 = vst [vmem:[%s164 + $0x8b8] sm:$0xff] %v309
          %558 = vst [vmem:[%s164 + $0x8c0] sm:$0xff] %v309
          %559 = vst [vmem:[%s164 + $0x8c8] sm:$0xff] %v309
          %560 = vst [vmem:[%s164 + $0x8d0] sm:$0xff] %v309
          %561 = vst [vmem:[%s164 + $0x8d8] sm:$0xff] %v309
          %562 = vst [vmem:[%s164 + $0x8e0] sm:$0xff] %v309
          %563 = vst [vmem:[%s164 + $0x8e8] sm:$0xff] %v309
          %564 = vst [vmem:[%s164 + $0x8f0] sm:$0xff] %v309
          %565 = vst [vmem:[%s164 + $0x8f8] sm:$0xff] %v309
          %566 = vst [vmem:[%s164 + $0x900] sm:$0xff] %v309
          %567 = vst [vmem:[%s164 + $0x908] sm:$0xff] %v309
          %568 = vst [vmem:[%s164 + $0x910] sm:$0xff] %v309
          %569 = vst [vmem:[%s164 + $0x918] sm:$0xff] %v309
          %570 = vst [vmem:[%s164 + $0x920] sm:$0xff] %v309
          %571 = vst [vmem:[%s164 + $0x928] sm:$0xff] %v309
          %572 = vst [vmem:[%s164 + $0x930] sm:$0xff] %v309
          %573 = vst [vmem:[%s164 + $0x938] sm:$0xff] %v309
          %574 = vst [vmem:[%s164 + $0x940] sm:$0xff] %v309
          %575 = vst [vmem:[%s164 + $0x948] sm:$0xff] %v309
          %576 = vst [vmem:[%s164 + $0x950] sm:$0xff] %v309
          %577 = vst [vmem:[%s164 + $0x958] sm:$0xff] %v309
          %578 = vst [vmem:[%s164 + $0x960] sm:$0xff] %v309
          %579 = vst [vmem:[%s164 + $0x968] sm:$0xff] %v309
          %580 = vst [vmem:[%s164 + $0x970] sm:$0xff] %v309
          %581 = vst [vmem:[%s164 + $0x978] sm:$0xff] %v309
          %582 = vst [vmem:[%s164 + $0x980] sm:$0xff] %v309
          %583 = vst [vmem:[%s164 + $0x988] sm:$0xff] %v309
          %584 = vst [vmem:[%s164 + $0x990] sm:$0xff] %v309
          %585 = vst [vmem:[%s164 + $0x998] sm:$0xff] %v309
          %586 = vst [vmem:[%s164 + $0x9a0] sm:$0xff] %v309
          %587 = vst [vmem:[%s164 + $0x9a8] sm:$0xff] %v309
          %588 = vst [vmem:[%s164 + $0x9b0] sm:$0xff] %v309
          %589 = vst [vmem:[%s164 + $0x9b8] sm:$0xff] %v309
          %590 = vst [vmem:[%s164 + $0x9c0] sm:$0xff] %v309
          %591 = vst [vmem:[%s164 + $0x9c8] sm:$0xff] %v309
          %592 = vst [vmem:[%s164 + $0x9d0] sm:$0xff] %v309
          %593 = vst [vmem:[%s164 + $0x9d8] sm:$0xff] %v309
          %594 = vst [vmem:[%s164 + $0x9e0] sm:$0xff] %v309
          %595 = vst [vmem:[%s164 + $0x9e8] sm:$0xff] %v309
          %596 = vst [vmem:[%s164 + $0x9f0] sm:$0xff] %v309
          %597 = vst [vmem:[%s164 + $0x9f8] sm:$0xff] %v309
          %598 = vst [vmem:[%s164 + $0xa00] sm:$0xff] %v309
          %599 = vst [vmem:[%s164 + $0xa08] sm:$0xff] %v309
          %600 = vst [vmem:[%s164 + $0xa10] sm:$0xff] %v309
          %601 = vst [vmem:[%s164 + $0xa18] sm:$0xff] %v309
          %602 = vst [vmem:[%s164 + $0xa20] sm:$0xff] %v309
          %603 = vst [vmem:[%s164 + $0xa28] sm:$0xff] %v309
          %604 = vst [vmem:[%s164 + $0xa30] sm:$0xff] %v309
          %605 = vst [vmem:[%s164 + $0xa38] sm:$0xff] %v309
          %606 = vst [vmem:[%s164 + $0xa40] sm:$0xff] %v309
          %607 = vst [vmem:[%s164 + $0xa48] sm:$0xff] %v309
          %608 = vst [vmem:[%s164 + $0xa50] sm:$0xff] %v309
          %609 = vst [vmem:[%s164 + $0xa58] sm:$0xff] %v309
          %610 = vst [vmem:[%s164 + $0xa60] sm:$0xff] %v309
          %611 = vst [vmem:[%s164 + $0xa68] sm:$0xff] %v309
          %612 = vst [vmem:[%s164 + $0xa70] sm:$0xff] %v309
          %613 = vst [vmem:[%s164 + $0xa78] sm:$0xff] %v309
          %614 = vst [vmem:[%s164 + $0xa80] sm:$0xff] %v309
          %615 = vst [vmem:[%s164 + $0xa88] sm:$0xff] %v309
          %616 = vst [vmem:[%s164 + $0xa90] sm:$0xff] %v309
          %617 = vst [vmem:[%s164 + $0xa98] sm:$0xff] %v309
          %618 = vst [vmem:[%s164 + $0xaa0] sm:$0xff] %v309
          %619 = vst [vmem:[%s164 + $0xaa8] sm:$0xff] %v309
          %620 = vst [vmem:[%s164 + $0xab0] sm:$0xff] %v309
          %621 = vst [vmem:[%s164 + $0xab8] sm:$0xff] %v309
          %622 = vst [vmem:[%s164 + $0xac0] sm:$0xff] %v309
          %623 = vst [vmem:[%s164 + $0xac8] sm:$0xff] %v309
          %624 = vst [vmem:[%s164 + $0xad0] sm:$0xff] %v309
          %625 = vst [vmem:[%s164 + $0xad8] sm:$0xff] %v309
          %626 = vst [vmem:[%s164 + $0xae0] sm:$0xff] %v309
          %627 = vst [vmem:[%s164 + $0xae8] sm:$0xff] %v309
          %628 = vst [vmem:[%s164 + $0xaf0] sm:$0xff] %v309
          %629 = vst [vmem:[%s164 + $0xaf8] sm:$0xff] %v309
          %630 = vst [vmem:[%s164 + $0xb00] sm:$0xff] %v309
          %631 = vst [vmem:[%s164 + $0xb08] sm:$0xff] %v309
          %632 = vst [vmem:[%s164 + $0xb10] sm:$0xff] %v309
          %633 = vst [vmem:[%s164 + $0xb18] sm:$0xff] %v309
          %634 = vst [vmem:[%s164 + $0xb20] sm:$0xff] %v309
          %635 = vst [vmem:[%s164 + $0xb28] sm:$0xff] %v309
          %636 = vst [vmem:[%s164 + $0xb30] sm:$0xff] %v309
          %637 = vst [vmem:[%s164 + $0xb38] sm:$0xff] %v309
          %638 = vst [vmem:[%s164 + $0xb40] sm:$0xff] %v309
          %639 = vst [vmem:[%s164 + $0xb48] sm:$0xff] %v309
          %640 = vst [vmem:[%s164 + $0xb50] sm:$0xff] %v309
          %641 = vst [vmem:[%s164 + $0xb58] sm:$0xff] %v309
          %642 = vst [vmem:[%s164 + $0xb60] sm:$0xff] %v309
          %643 = vst [vmem:[%s164 + $0xb68] sm:$0xff] %v309
          %644 = vst [vmem:[%s164 + $0xb70] sm:$0xff] %v309
          %645 = vst [vmem:[%s164 + $0xb78] sm:$0xff] %v309
          %646 = vst [vmem:[%s164 + $0xb80] sm:$0xff] %v309
          %647 = vst [vmem:[%s164 + $0xb88] sm:$0xff] %v309
          %648 = vst [vmem:[%s164 + $0xb90] sm:$0xff] %v309
          %649 = vst [vmem:[%s164 + $0xb98] sm:$0xff] %v309
          %650 = vst [vmem:[%s164 + $0xba0] sm:$0xff] %v309
          %651 = vst [vmem:[%s164 + $0xba8] sm:$0xff] %v309
          %652 = vst [vmem:[%s164 + $0xbb0] sm:$0xff] %v309
          %653 = vst [vmem:[%s164 + $0xbb8] sm:$0xff] %v309
          %654 = vst [vmem:[%s164 + $0xbc0] sm:$0xff] %v309
          %655 = vst [vmem:[%s164 + $0xbc8] sm:$0xff] %v309
          %656 = vst [vmem:[%s164 + $0xbd0] sm:$0xff] %v309
          %657 = vst [vmem:[%s164 + $0xbd8] sm:$0xff] %v309
          %658 = vst [vmem:[%s164 + $0xbe0] sm:$0xff] %v309
          %659 = vst [vmem:[%s164 + $0xbe8] sm:$0xff] %v309
          %660 = vst [vmem:[%s164 + $0xbf0] sm:$0xff] %v309
          %661 = vst [vmem:[%s164 + $0xbf8] sm:$0xff] %v309
          %662 = vst [vmem:[%s164 + $0xc00] sm:$0xff] %v309
          %663 = vst [vmem:[%s164 + $0xc08] sm:$0xff] %v309
          %664 = vst [vmem:[%s164 + $0xc10] sm:$0xff] %v309
          %665 = vst [vmem:[%s164 + $0xc18] sm:$0xff] %v309
          %666 = vst [vmem:[%s164 + $0xc20] sm:$0xff] %v309
          %667 = vst [vmem:[%s164 + $0xc28] sm:$0xff] %v309
          %668 = vst [vmem:[%s164 + $0xc30] sm:$0xff] %v309
          %669 = vst [vmem:[%s164 + $0xc38] sm:$0xff] %v309
          %670 = vst [vmem:[%s164 + $0xc40] sm:$0xff] %v309
          %671 = vst [vmem:[%s164 + $0xc48] sm:$0xff] %v309
          %672 = vst [vmem:[%s164 + $0xc50] sm:$0xff] %v309
          %673 = vst [vmem:[%s164 + $0xc58] sm:$0xff] %v309
          %674 = vst [vmem:[%s164 + $0xc60] sm:$0xff] %v309
          %675 = vst [vmem:[%s164 + $0xc68] sm:$0xff] %v309
          %676 = vst [vmem:[%s164 + $0xc70] sm:$0xff] %v309
          %677 = vst [vmem:[%s164 + $0xc78] sm:$0xff] %v309
          %678 = vst [vmem:[%s164 + $0xc80] sm:$0xff] %v309
          %679 = vst [vmem:[%s164 + $0xc88] sm:$0xff] %v309
          %680 = vst [vmem:[%s164 + $0xc90] sm:$0xff] %v309
          %681 = vst [vmem:[%s164 + $0xc98] sm:$0xff] %v309
          %682 = vst [vmem:[%s164 + $0xca0] sm:$0xff] %v309
          %683 = vst [vmem:[%s164 + $0xca8] sm:$0xff] %v309
          %684 = vst [vmem:[%s164 + $0xcb0] sm:$0xff] %v309
          %685 = vst [vmem:[%s164 + $0xcb8] sm:$0xff] %v309
          %686 = vst [vmem:[%s164 + $0xcc0] sm:$0xff] %v309
          %687 = vst [vmem:[%s164 + $0xcc8] sm:$0xff] %v309
          %688 = vst [vmem:[%s164 + $0xcd0] sm:$0xff] %v309
          %689 = vst [vmem:[%s164 + $0xcd8] sm:$0xff] %v309
          %690 = vst [vmem:[%s164 + $0xce0] sm:$0xff] %v309
          %691 = vst [vmem:[%s164 + $0xce8] sm:$0xff] %v309
          %692 = vst [vmem:[%s164 + $0xcf0] sm:$0xff] %v309
          %693 = vst [vmem:[%s164 + $0xcf8] sm:$0xff] %v309
          %694 = vst [vmem:[%s164 + $0xd00] sm:$0xff] %v309
          %695 = vst [vmem:[%s164 + $0xd08] sm:$0xff] %v309
          %696 = vst [vmem:[%s164 + $0xd10] sm:$0xff] %v309
          %697 = vst [vmem:[%s164 + $0xd18] sm:$0xff] %v309
          %698 = vst [vmem:[%s164 + $0xd20] sm:$0xff] %v309
          %699 = vst [vmem:[%s164 + $0xd28] sm:$0xff] %v309
          %700 = vst [vmem:[%s164 + $0xd30] sm:$0xff] %v309
          %701 = vst [vmem:[%s164 + $0xd38] sm:$0xff] %v309
          %702 = vst [vmem:[%s164 + $0xd40] sm:$0xff] %v309
          %703 = vst [vmem:[%s164 + $0xd48] sm:$0xff] %v309
          %704 = vst [vmem:[%s164 + $0xd50] sm:$0xff] %v309
          %705 = vst [vmem:[%s164 + $0xd58] sm:$0xff] %v309
          %706 = vst [vmem:[%s164 + $0xd60] sm:$0xff] %v309
          %707 = vst [vmem:[%s164 + $0xd68] sm:$0xff] %v309
          %708 = vst [vmem:[%s164 + $0xd70] sm:$0xff] %v309
          %709 = vst [vmem:[%s164 + $0xd78] sm:$0xff] %v309
          %710 = vst [vmem:[%s164 + $0xd80] sm:$0xff] %v309
          %711 = vst [vmem:[%s164 + $0xd88] sm:$0xff] %v309
          %712 = vst [vmem:[%s164 + $0xd90] sm:$0xff] %v309
          %713 = vst [vmem:[%s164 + $0xd98] sm:$0xff] %v309
          %714 = vst [vmem:[%s164 + $0xda0] sm:$0xff] %v309
          %715 = vst [vmem:[%s164 + $0xda8] sm:$0xff] %v309
          %716 = vst [vmem:[%s164 + $0xdb0] sm:$0xff] %v309
          %717 = vst [vmem:[%s164 + $0xdb8] sm:$0xff] %v309
          %718 = vst [vmem:[%s164 + $0xdc0] sm:$0xff] %v309
          %719 = vst [vmem:[%s164 + $0xdc8] sm:$0xff] %v309
          %720 = vst [vmem:[%s164 + $0xdd0] sm:$0xff] %v309
          %721 = vst [vmem:[%s164 + $0xdd8] sm:$0xff] %v309
          %722 = vst [vmem:[%s164 + $0xde0] sm:$0xff] %v309
          %723 = vst [vmem:[%s164 + $0xde8] sm:$0xff] %v309
          %724 = vst [vmem:[%s164 + $0xdf0] sm:$0xff] %v309
          %725 = vst [vmem:[%s164 + $0xdf8] sm:$0xff] %v309
          %726 = vst [vmem:[%s164 + $0xe00] sm:$0xff] %v309
          %727 = vst [vmem:[%s164 + $0xe08] sm:$0xff] %v309
          %728 = vst [vmem:[%s164 + $0xe10] sm:$0xff] %v309
          %729 = vst [vmem:[%s164 + $0xe18] sm:$0xff] %v309
          %730 = vst [vmem:[%s164 + $0xe20] sm:$0xff] %v309
          %731 = vst [vmem:[%s164 + $0xe28] sm:$0xff] %v309
          %732 = vst [vmem:[%s164 + $0xe30] sm:$0xff] %v309
          %733 = vst [vmem:[%s164 + $0xe38] sm:$0xff] %v309
          %734 = vst [vmem:[%s164 + $0xe40] sm:$0xff] %v309
          %735 = vst [vmem:[%s164 + $0xe48] sm:$0xff] %v309
          %736 = vst [vmem:[%s164 + $0xe50] sm:$0xff] %v309
          %737 = vst [vmem:[%s164 + $0xe58] sm:$0xff] %v309
          %738 = vst [vmem:[%s164 + $0xe60] sm:$0xff] %v309
          %739 = vst [vmem:[%s164 + $0xe68] sm:$0xff] %v309
          %740 = vst [vmem:[%s164 + $0xe70] sm:$0xff] %v309
          %741 = vst [vmem:[%s164 + $0xe78] sm:$0xff] %v309
          %742 = vst [vmem:[%s164 + $0xe80] sm:$0xff] %v309
          %743 = vst [vmem:[%s164 + $0xe88] sm:$0xff] %v309
          %744 = vst [vmem:[%s164 + $0xe90] sm:$0xff] %v309
          %745 = vst [vmem:[%s164 + $0xe98] sm:$0xff] %v309
          %746 = vst [vmem:[%s164 + $0xea0] sm:$0xff] %v309
          %747 = vst [vmem:[%s164 + $0xea8] sm:$0xff] %v309
          %748 = vst [vmem:[%s164 + $0xeb0] sm:$0xff] %v309
          %749 = vst [vmem:[%s164 + $0xeb8] sm:$0xff] %v309
          %750 = vst [vmem:[%s164 + $0xec0] sm:$0xff] %v309
          %751 = vst [vmem:[%s164 + $0xec8] sm:$0xff] %v309
          %752 = vst [vmem:[%s164 + $0xed0] sm:$0xff] %v309
          %753 = vst [vmem:[%s164 + $0xed8] sm:$0xff] %v309
          %754 = vst [vmem:[%s164 + $0xee0] sm:$0xff] %v309
          %755 = vst [vmem:[%s164 + $0xee8] sm:$0xff] %v309
          %756 = vst [vmem:[%s164 + $0xef0] sm:$0xff] %v309
          %757 = vst [vmem:[%s164 + $0xef8] sm:$0xff] %v309
          %758 = vst [vmem:[%s164 + $0xf00] sm:$0xff] %v309
          %759 = vst [vmem:[%s164 + $0xf08] sm:$0xff] %v309
          %760 = vst [vmem:[%s164 + $0xf10] sm:$0xff] %v309
          %761 = vst [vmem:[%s164 + $0xf18] sm:$0xff] %v309
          %762 = vst [vmem:[%s164 + $0xf20] sm:$0xff] %v309
          %763 = vst [vmem:[%s164 + $0xf28] sm:$0xff] %v309
          %764 = vst [vmem:[%s164 + $0xf30] sm:$0xff] %v309
          %765 = vst [vmem:[%s164 + $0xf38] sm:$0xff] %v309
          %766 = vst [vmem:[%s164 + $0xf40] sm:$0xff] %v309
          %767 = vst [vmem:[%s164 + $0xf48] sm:$0xff] %v309
          %768 = vst [vmem:[%s164 + $0xf50] sm:$0xff] %v309
          %769 = vst [vmem:[%s164 + $0xf58] sm:$0xff] %v309
          %770 = vst [vmem:[%s164 + $0xf60] sm:$0xff] %v309
          %771 = vst [vmem:[%s164 + $0xf68] sm:$0xff] %v309
          %772 = vst [vmem:[%s164 + $0xf70] sm:$0xff] %v309
          %773 = vst [vmem:[%s164 + $0xf78] sm:$0xff] %v309
          %774 = vst [vmem:[%s164 + $0xf80] sm:$0xff] %v309
          %775 = vst [vmem:[%s164 + $0xf88] sm:$0xff] %v309
          %776 = vst [vmem:[%s164 + $0xf90] sm:$0xff] %v309
          %777 = vst [vmem:[%s164 + $0xf98] sm:$0xff] %v309
          %778 = vst [vmem:[%s164 + $0xfa0] sm:$0xff] %v309
          %779 = vst [vmem:[%s164 + $0xfa8] sm:$0xff] %v309
          %780 = vst [vmem:[%s164 + $0xfb0] sm:$0xff] %v309
          %781 = vst [vmem:[%s164 + $0xfb8] sm:$0xff] %v309
          %782 = vst [vmem:[%s164 + $0xfc0] sm:$0xff] %v309
          %783 = vst [vmem:[%s164 + $0xfc8] sm:$0xff] %v309
          %784 = vst [vmem:[%s164 + $0xfd0] sm:$0xff] %v309
          %785 = vst [vmem:[%s164 + $0xfd8] sm:$0xff] %v309
          %786 = vst [vmem:[%s164 + $0xfe0] sm:$0xff] %v309
          %787 = vst [vmem:[%s164 + $0xfe8] sm:$0xff] %v309
          %788 = vst [vmem:[%s164 + $0xff0] sm:$0xff] %v309
          %789 = vst [vmem:[%s164 + $0xff8] sm:$0xff] %v309
        $region36: #{generalized_rcnn_forward.8} parent=27 // pred_fallthru
          _
        %p790 = scmp.gt.s32.totalorder %s22, 0
        // Predicated region
        $region37: #{generalized_rcnn_forward.8} parent=27 // pred_check
          %p791 = pneg %p790
        $region38: #{generalized_rcnn_forward.8} parent=27 // pred_check_branch
          %793 = sbr.rel (%p791) target = $region40
        $region39: #{generalized_rcnn_forward.8} parent=27 // pred_region
          %v794 = vstv %s174
          %795 = vst [vmem:[%s164] sm:$0xff] %v794
          %796 = vst [vmem:[%s164 + $0x8] sm:$0xff] %v794
          %797 = vst [vmem:[%s164 + $0x10] sm:$0xff] %v794
          %798 = vst [vmem:[%s164 + $0x18] sm:$0xff] %v794
          %799 = vst [vmem:[%s164 + $0x20] sm:$0xff] %v794
          %800 = vst [vmem:[%s164 + $0x28] sm:$0xff] %v794
          %801 = vst [vmem:[%s164 + $0x30] sm:$0xff] %v794
          %802 = vst [vmem:[%s164 + $0x38] sm:$0xff] %v794
          %803 = vst [vmem:[%s164 + $0x40] sm:$0xff] %v794
          %804 = vst [vmem:[%s164 + $0x48] sm:$0xff] %v794
          %805 = vst [vmem:[%s164 + $0x50] sm:$0xff] %v794
          %806 = vst [vmem:[%s164 + $0x58] sm:$0xff] %v794
          %807 = vst [vmem:[%s164 + $0x60] sm:$0xff] %v794
          %808 = vst [vmem:[%s164 + $0x68] sm:$0xff] %v794
          %809 = vst [vmem:[%s164 + $0x70] sm:$0xff] %v794
          %810 = vst [vmem:[%s164 + $0x78] sm:$0xff] %v794
          %811 = vst [vmem:[%s164 + $0x80] sm:$0xff] %v794
          %812 = vst [vmem:[%s164 + $0x88] sm:$0xff] %v794
          %813 = vst [vmem:[%s164 + $0x90] sm:$0xff] %v794
          %814 = vst [vmem:[%s164 + $0x98] sm:$0xff] %v794
          %815 = vst [vmem:[%s164 + $0xa0] sm:$0xff] %v794
          %816 = vst [vmem:[%s164 + $0xa8] sm:$0xff] %v794
          %817 = vst [vmem:[%s164 + $0xb0] sm:$0xff] %v794
          %818 = vst [vmem:[%s164 + $0xb8] sm:$0xff] %v794
          %819 = vst [vmem:[%s164 + $0xc0] sm:$0xff] %v794
          %820 = vst [vmem:[%s164 + $0xc8] sm:$0xff] %v794
          %821 = vst [vmem:[%s164 + $0xd0] sm:$0xff] %v794
          %822 = vst [vmem:[%s164 + $0xd8] sm:$0xff] %v794
          %823 = vst [vmem:[%s164 + $0xe0] sm:$0xff] %v794
          %824 = vst [vmem:[%s164 + $0xe8] sm:$0xff] %v794
          %825 = vst [vmem:[%s164 + $0xf0] sm:$0xff] %v794
          %826 = vst [vmem:[%s164 + $0xf8] sm:$0xff] %v794
          %827 = vst [vmem:[%s164 + $0x100] sm:$0xff] %v794
          %828 = vst [vmem:[%s164 + $0x108] sm:$0xff] %v794
          %829 = vst [vmem:[%s164 + $0x110] sm:$0xff] %v794
          %830 = vst [vmem:[%s164 + $0x118] sm:$0xff] %v794
          %831 = vst [vmem:[%s164 + $0x120] sm:$0xff] %v794
          %832 = vst [vmem:[%s164 + $0x128] sm:$0xff] %v794
          %833 = vst [vmem:[%s164 + $0x130] sm:$0xff] %v794
          %834 = vst [vmem:[%s164 + $0x138] sm:$0xff] %v794
          %835 = vst [vmem:[%s164 + $0x140] sm:$0xff] %v794
          %836 = vst [vmem:[%s164 + $0x148] sm:$0xff] %v794
          %837 = vst [vmem:[%s164 + $0x150] sm:$0xff] %v794
          %838 = vst [vmem:[%s164 + $0x158] sm:$0xff] %v794
          %839 = vst [vmem:[%s164 + $0x160] sm:$0xff] %v794
          %840 = vst [vmem:[%s164 + $0x168] sm:$0xff] %v794
          %841 = vst [vmem:[%s164 + $0x170] sm:$0xff] %v794
          %842 = vst [vmem:[%s164 + $0x178] sm:$0xff] %v794
          %843 = vst [vmem:[%s164 + $0x180] sm:$0xff] %v794
          %844 = vst [vmem:[%s164 + $0x188] sm:$0xff] %v794
          %845 = vst [vmem:[%s164 + $0x190] sm:$0xff] %v794
          %846 = vst [vmem:[%s164 + $0x198] sm:$0xff] %v794
          %847 = vst [vmem:[%s164 + $0x1a0] sm:$0xff] %v794
          %848 = vst [vmem:[%s164 + $0x1a8] sm:$0xff] %v794
          %849 = vst [vmem:[%s164 + $0x1b0] sm:$0xff] %v794
          %850 = vst [vmem:[%s164 + $0x1b8] sm:$0xff] %v794
          %851 = vst [vmem:[%s164 + $0x1c0] sm:$0xff] %v794
          %852 = vst [vmem:[%s164 + $0x1c8] sm:$0xff] %v794
          %853 = vst [vmem:[%s164 + $0x1d0] sm:$0xff] %v794
          %854 = vst [vmem:[%s164 + $0x1d8] sm:$0xff] %v794
          %855 = vst [vmem:[%s164 + $0x1e0] sm:$0xff] %v794
          %856 = vst [vmem:[%s164 + $0x1e8] sm:$0xff] %v794
          %857 = vst [vmem:[%s164 + $0x1f0] sm:$0xff] %v794
          %858 = vst [vmem:[%s164 + $0x1f8] sm:$0xff] %v794
          %859 = vst [vmem:[%s164 + $0x200] sm:$0xff] %v794
          %860 = vst [vmem:[%s164 + $0x208] sm:$0xff] %v794
          %861 = vst [vmem:[%s164 + $0x210] sm:$0xff] %v794
          %862 = vst [vmem:[%s164 + $0x218] sm:$0xff] %v794
          %863 = vst [vmem:[%s164 + $0x220] sm:$0xff] %v794
          %864 = vst [vmem:[%s164 + $0x228] sm:$0xff] %v794
          %865 = vst [vmem:[%s164 + $0x230] sm:$0xff] %v794
          %866 = vst [vmem:[%s164 + $0x238] sm:$0xff] %v794
          %867 = vst [vmem:[%s164 + $0x240] sm:$0xff] %v794
          %868 = vst [vmem:[%s164 + $0x248] sm:$0xff] %v794
          %869 = vst [vmem:[%s164 + $0x250] sm:$0xff] %v794
          %870 = vst [vmem:[%s164 + $0x258] sm:$0xff] %v794
          %871 = vst [vmem:[%s164 + $0x260] sm:$0xff] %v794
          %872 = vst [vmem:[%s164 + $0x268] sm:$0xff] %v794
          %873 = vst [vmem:[%s164 + $0x270] sm:$0xff] %v794
          %874 = vst [vmem:[%s164 + $0x278] sm:$0xff] %v794
          %875 = vst [vmem:[%s164 + $0x280] sm:$0xff] %v794
          %876 = vst [vmem:[%s164 + $0x288] sm:$0xff] %v794
          %877 = vst [vmem:[%s164 + $0x290] sm:$0xff] %v794
          %878 = vst [vmem:[%s164 + $0x298] sm:$0xff] %v794
          %879 = vst [vmem:[%s164 + $0x2a0] sm:$0xff] %v794
          %880 = vst [vmem:[%s164 + $0x2a8] sm:$0xff] %v794
          %881 = vst [vmem:[%s164 + $0x2b0] sm:$0xff] %v794
          %882 = vst [vmem:[%s164 + $0x2b8] sm:$0xff] %v794
          %883 = vst [vmem:[%s164 + $0x2c0] sm:$0xff] %v794
          %884 = vst [vmem:[%s164 + $0x2c8] sm:$0xff] %v794
          %885 = vst [vmem:[%s164 + $0x2d0] sm:$0xff] %v794
          %886 = vst [vmem:[%s164 + $0x2d8] sm:$0xff] %v794
          %887 = vst [vmem:[%s164 + $0x2e0] sm:$0xff] %v794
          %888 = vst [vmem:[%s164 + $0x2e8] sm:$0xff] %v794
          %889 = vst [vmem:[%s164 + $0x2f0] sm:$0xff] %v794
          %890 = vst [vmem:[%s164 + $0x2f8] sm:$0xff] %v794
          %891 = vst [vmem:[%s164 + $0x300] sm:$0xff] %v794
          %892 = vst [vmem:[%s164 + $0x308] sm:$0xff] %v794
          %893 = vst [vmem:[%s164 + $0x310] sm:$0xff] %v794
          %894 = vst [vmem:[%s164 + $0x318] sm:$0xff] %v794
          %895 = vst [vmem:[%s164 + $0x320] sm:$0xff] %v794
          %896 = vst [vmem:[%s164 + $0x328] sm:$0xff] %v794
          %897 = vst [vmem:[%s164 + $0x330] sm:$0xff] %v794
          %898 = vst [vmem:[%s164 + $0x338] sm:$0xff] %v794
          %899 = vst [vmem:[%s164 + $0x340] sm:$0xff] %v794
          %900 = vst [vmem:[%s164 + $0x348] sm:$0xff] %v794
          %901 = vst [vmem:[%s164 + $0x350] sm:$0xff] %v794
          %902 = vst [vmem:[%s164 + $0x358] sm:$0xff] %v794
          %903 = vst [vmem:[%s164 + $0x360] sm:$0xff] %v794
          %904 = vst [vmem:[%s164 + $0x368] sm:$0xff] %v794
          %905 = vst [vmem:[%s164 + $0x370] sm:$0xff] %v794
          %906 = vst [vmem:[%s164 + $0x378] sm:$0xff] %v794
          %907 = vst [vmem:[%s164 + $0x380] sm:$0xff] %v794
          %908 = vst [vmem:[%s164 + $0x388] sm:$0xff] %v794
          %909 = vst [vmem:[%s164 + $0x390] sm:$0xff] %v794
          %910 = vst [vmem:[%s164 + $0x398] sm:$0xff] %v794
          %911 = vst [vmem:[%s164 + $0x3a0] sm:$0xff] %v794
          %912 = vst [vmem:[%s164 + $0x3a8] sm:$0xff] %v794
          %913 = vst [vmem:[%s164 + $0x3b0] sm:$0xff] %v794
          %914 = vst [vmem:[%s164 + $0x3b8] sm:$0xff] %v794
          %915 = vst [vmem:[%s164 + $0x3c0] sm:$0xff] %v794
          %916 = vst [vmem:[%s164 + $0x3c8] sm:$0xff] %v794
          %917 = vst [vmem:[%s164 + $0x3d0] sm:$0xff] %v794
          %918 = vst [vmem:[%s164 + $0x3d8] sm:$0xff] %v794
          %919 = vst [vmem:[%s164 + $0x3e0] sm:$0xff] %v794
          %920 = vst [vmem:[%s164 + $0x3e8] sm:$0xff] %v794
          %921 = vst [vmem:[%s164 + $0x3f0] sm:$0xff] %v794
          %922 = vst [vmem:[%s164 + $0x3f8] sm:$0xff] %v794
          %923 = vst [vmem:[%s164 + $0x400] sm:$0xff] %v794
          %924 = vst [vmem:[%s164 + $0x408] sm:$0xff] %v794
          %925 = vst [vmem:[%s164 + $0x410] sm:$0xff] %v794
          %926 = vst [vmem:[%s164 + $0x418] sm:$0xff] %v794
          %927 = vst [vmem:[%s164 + $0x420] sm:$0xff] %v794
          %928 = vst [vmem:[%s164 + $0x428] sm:$0xff] %v794
          %929 = vst [vmem:[%s164 + $0x430] sm:$0xff] %v794
          %930 = vst [vmem:[%s164 + $0x438] sm:$0xff] %v794
          %931 = vst [vmem:[%s164 + $0x440] sm:$0xff] %v794
          %932 = vst [vmem:[%s164 + $0x448] sm:$0xff] %v794
          %933 = vst [vmem:[%s164 + $0x450] sm:$0xff] %v794
          %934 = vst [vmem:[%s164 + $0x458] sm:$0xff] %v794
          %935 = vst [vmem:[%s164 + $0x460] sm:$0xff] %v794
          %936 = vst [vmem:[%s164 + $0x468] sm:$0xff] %v794
          %937 = vst [vmem:[%s164 + $0x470] sm:$0xff] %v794
          %938 = vst [vmem:[%s164 + $0x478] sm:$0xff] %v794
          %939 = vst [vmem:[%s164 + $0x480] sm:$0xff] %v794
          %940 = vst [vmem:[%s164 + $0x488] sm:$0xff] %v794
          %941 = vst [vmem:[%s164 + $0x490] sm:$0xff] %v794
          %942 = vst [vmem:[%s164 + $0x498] sm:$0xff] %v794
          %943 = vst [vmem:[%s164 + $0x4a0] sm:$0xff] %v794
          %944 = vst [vmem:[%s164 + $0x4a8] sm:$0xff] %v794
          %945 = vst [vmem:[%s164 + $0x4b0] sm:$0xff] %v794
          %946 = vst [vmem:[%s164 + $0x4b8] sm:$0xff] %v794
          %947 = vst [vmem:[%s164 + $0x4c0] sm:$0xff] %v794
          %948 = vst [vmem:[%s164 + $0x4c8] sm:$0xff] %v794
          %949 = vst [vmem:[%s164 + $0x4d0] sm:$0xff] %v794
          %950 = vst [vmem:[%s164 + $0x4d8] sm:$0xff] %v794
          %951 = vst [vmem:[%s164 + $0x4e0] sm:$0xff] %v794
          %952 = vst [vmem:[%s164 + $0x4e8] sm:$0xff] %v794
          %953 = vst [vmem:[%s164 + $0x4f0] sm:$0xff] %v794
          %954 = vst [vmem:[%s164 + $0x4f8] sm:$0xff] %v794
          %955 = vst [vmem:[%s164 + $0x500] sm:$0xff] %v794
          %956 = vst [vmem:[%s164 + $0x508] sm:$0xff] %v794
          %957 = vst [vmem:[%s164 + $0x510] sm:$0xff] %v794
          %958 = vst [vmem:[%s164 + $0x518] sm:$0xff] %v794
          %959 = vst [vmem:[%s164 + $0x520] sm:$0xff] %v794
          %960 = vst [vmem:[%s164 + $0x528] sm:$0xff] %v794
          %961 = vst [vmem:[%s164 + $0x530] sm:$0xff] %v794
          %962 = vst [vmem:[%s164 + $0x538] sm:$0xff] %v794
          %963 = vst [vmem:[%s164 + $0x540] sm:$0xff] %v794
          %964 = vst [vmem:[%s164 + $0x548] sm:$0xff] %v794
          %965 = vst [vmem:[%s164 + $0x550] sm:$0xff] %v794
          %966 = vst [vmem:[%s164 + $0x558] sm:$0xff] %v794
          %967 = vst [vmem:[%s164 + $0x560] sm:$0xff] %v794
          %968 = vst [vmem:[%s164 + $0x568] sm:$0xff] %v794
          %969 = vst [vmem:[%s164 + $0x570] sm:$0xff] %v794
          %970 = vst [vmem:[%s164 + $0x578] sm:$0xff] %v794
          %971 = vst [vmem:[%s164 + $0x580] sm:$0xff] %v794
          %972 = vst [vmem:[%s164 + $0x588] sm:$0xff] %v794
          %973 = vst [vmem:[%s164 + $0x590] sm:$0xff] %v794
          %974 = vst [vmem:[%s164 + $0x598] sm:$0xff] %v794
          %975 = vst [vmem:[%s164 + $0x5a0] sm:$0xff] %v794
          %976 = vst [vmem:[%s164 + $0x5a8] sm:$0xff] %v794
          %977 = vst [vmem:[%s164 + $0x5b0] sm:$0xff] %v794
          %978 = vst [vmem:[%s164 + $0x5b8] sm:$0xff] %v794
          %979 = vst [vmem:[%s164 + $0x5c0] sm:$0xff] %v794
          %980 = vst [vmem:[%s164 + $0x5c8] sm:$0xff] %v794
          %981 = vst [vmem:[%s164 + $0x5d0] sm:$0xff] %v794
          %982 = vst [vmem:[%s164 + $0x5d8] sm:$0xff] %v794
          %983 = vst [vmem:[%s164 + $0x5e0] sm:$0xff] %v794
          %984 = vst [vmem:[%s164 + $0x5e8] sm:$0xff] %v794
          %985 = vst [vmem:[%s164 + $0x5f0] sm:$0xff] %v794
          %986 = vst [vmem:[%s164 + $0x5f8] sm:$0xff] %v794
          %987 = vst [vmem:[%s164 + $0x600] sm:$0xff] %v794
          %988 = vst [vmem:[%s164 + $0x608] sm:$0xff] %v794
          %989 = vst [vmem:[%s164 + $0x610] sm:$0xff] %v794
          %990 = vst [vmem:[%s164 + $0x618] sm:$0xff] %v794
          %991 = vst [vmem:[%s164 + $0x620] sm:$0xff] %v794
          %992 = vst [vmem:[%s164 + $0x628] sm:$0xff] %v794
          %993 = vst [vmem:[%s164 + $0x630] sm:$0xff] %v794
          %994 = vst [vmem:[%s164 + $0x638] sm:$0xff] %v794
          %995 = vst [vmem:[%s164 + $0x640] sm:$0xff] %v794
          %996 = vst [vmem:[%s164 + $0x648] sm:$0xff] %v794
          %997 = vst [vmem:[%s164 + $0x650] sm:$0xff] %v794
          %998 = vst [vmem:[%s164 + $0x658] sm:$0xff] %v794
          %999 = vst [vmem:[%s164 + $0x660] sm:$0xff] %v794
          %1000 = vst [vmem:[%s164 + $0x668] sm:$0xff] %v794
          %1001 = vst [vmem:[%s164 + $0x670] sm:$0xff] %v794
          %1002 = vst [vmem:[%s164 + $0x678] sm:$0xff] %v794
          %1003 = vst [vmem:[%s164 + $0x680] sm:$0xff] %v794
          %1004 = vst [vmem:[%s164 + $0x688] sm:$0xff] %v794
          %1005 = vst [vmem:[%s164 + $0x690] sm:$0xff] %v794
          %1006 = vst [vmem:[%s164 + $0x698] sm:$0xff] %v794
          %1007 = vst [vmem:[%s164 + $0x6a0] sm:$0xff] %v794
          %1008 = vst [vmem:[%s164 + $0x6a8] sm:$0xff] %v794
          %1009 = vst [vmem:[%s164 + $0x6b0] sm:$0xff] %v794
          %1010 = vst [vmem:[%s164 + $0x6b8] sm:$0xff] %v794
          %1011 = vst [vmem:[%s164 + $0x6c0] sm:$0xff] %v794
          %1012 = vst [vmem:[%s164 + $0x6c8] sm:$0xff] %v794
          %1013 = vst [vmem:[%s164 + $0x6d0] sm:$0xff] %v794
          %1014 = vst [vmem:[%s164 + $0x6d8] sm:$0xff] %v794
          %1015 = vst [vmem:[%s164 + $0x6e0] sm:$0xff] %v794
          %1016 = vst [vmem:[%s164 + $0x6e8] sm:$0xff] %v794
          %1017 = vst [vmem:[%s164 + $0x6f0] sm:$0xff] %v794
          %1018 = vst [vmem:[%s164 + $0x6f8] sm:$0xff] %v794
          %1019 = vst [vmem:[%s164 + $0x700] sm:$0xff] %v794
          %1020 = vst [vmem:[%s164 + $0x708] sm:$0xff] %v794
          %1021 = vst [vmem:[%s164 + $0x710] sm:$0xff] %v794
          %1022 = vst [vmem:[%s164 + $0x718] sm:$0xff] %v794
          %1023 = vst [vmem:[%s164 + $0x720] sm:$0xff] %v794
          %1024 = vst [vmem:[%s164 + $0x728] sm:$0xff] %v794
          %1025 = vst [vmem:[%s164 + $0x730] sm:$0xff] %v794
          %1026 = vst [vmem:[%s164 + $0x738] sm:$0xff] %v794
          %1027 = vst [vmem:[%s164 + $0x740] sm:$0xff] %v794
          %1028 = vst [vmem:[%s164 + $0x748] sm:$0xff] %v794
          %1029 = vst [vmem:[%s164 + $0x750] sm:$0xff] %v794
          %1030 = vst [vmem:[%s164 + $0x758] sm:$0xff] %v794
          %1031 = vst [vmem:[%s164 + $0x760] sm:$0xff] %v794
          %1032 = vst [vmem:[%s164 + $0x768] sm:$0xff] %v794
          %1033 = vst [vmem:[%s164 + $0x770] sm:$0xff] %v794
          %1034 = vst [vmem:[%s164 + $0x778] sm:$0xff] %v794
          %1035 = vst [vmem:[%s164 + $0x780] sm:$0xff] %v794
          %1036 = vst [vmem:[%s164 + $0x788] sm:$0xff] %v794
          %1037 = vst [vmem:[%s164 + $0x790] sm:$0xff] %v794
          %1038 = vst [vmem:[%s164 + $0x798] sm:$0xff] %v794
          %1039 = vst [vmem:[%s164 + $0x7a0] sm:$0xff] %v794
          %1040 = vst [vmem:[%s164 + $0x7a8] sm:$0xff] %v794
          %1041 = vst [vmem:[%s164 + $0x7b0] sm:$0xff] %v794
          %1042 = vst [vmem:[%s164 + $0x7b8] sm:$0xff] %v794
          %1043 = vst [vmem:[%s164 + $0x7c0] sm:$0xff] %v794
          %1044 = vst [vmem:[%s164 + $0x7c8] sm:$0xff] %v794
          %1045 = vst [vmem:[%s164 + $0x7d0] sm:$0xff] %v794
          %1046 = vst [vmem:[%s164 + $0x7d8] sm:$0xff] %v794
          %1047 = vst [vmem:[%s164 + $0x7e0] sm:$0xff] %v794
          %1048 = vst [vmem:[%s164 + $0x7e8] sm:$0xff] %v794
          %1049 = vst [vmem:[%s164 + $0x7f0] sm:$0xff] %v794
          %1050 = vst [vmem:[%s164 + $0x7f8] sm:$0xff] %v794
          %1051 = vst [vmem:[%s164 + $0x800] sm:$0xff] %v794
          %1052 = vst [vmem:[%s164 + $0x808] sm:$0xff] %v794
          %1053 = vst [vmem:[%s164 + $0x810] sm:$0xff] %v794
          %1054 = vst [vmem:[%s164 + $0x818] sm:$0xff] %v794
          %1055 = vst [vmem:[%s164 + $0x820] sm:$0xff] %v794
          %1056 = vst [vmem:[%s164 + $0x828] sm:$0xff] %v794
          %1057 = vst [vmem:[%s164 + $0x830] sm:$0xff] %v794
          %1058 = vst [vmem:[%s164 + $0x838] sm:$0xff] %v794
          %1059 = vst [vmem:[%s164 + $0x840] sm:$0xff] %v794
          %1060 = vst [vmem:[%s164 + $0x848] sm:$0xff] %v794
          %1061 = vst [vmem:[%s164 + $0x850] sm:$0xff] %v794
          %1062 = vst [vmem:[%s164 + $0x858] sm:$0xff] %v794
          %1063 = vst [vmem:[%s164 + $0x860] sm:$0xff] %v794
          %1064 = vst [vmem:[%s164 + $0x868] sm:$0xff] %v794
          %1065 = vst [vmem:[%s164 + $0x870] sm:$0xff] %v794
          %1066 = vst [vmem:[%s164 + $0x878] sm:$0xff] %v794
          %1067 = vst [vmem:[%s164 + $0x880] sm:$0xff] %v794
          %1068 = vst [vmem:[%s164 + $0x888] sm:$0xff] %v794
          %1069 = vst [vmem:[%s164 + $0x890] sm:$0xff] %v794
          %1070 = vst [vmem:[%s164 + $0x898] sm:$0xff] %v794
          %1071 = vst [vmem:[%s164 + $0x8a0] sm:$0xff] %v794
          %1072 = vst [vmem:[%s164 + $0x8a8] sm:$0xff] %v794
          %1073 = vst [vmem:[%s164 + $0x8b0] sm:$0xff] %v794
          %1074 = vst [vmem:[%s164 + $0x8b8] sm:$0xff] %v794
          %1075 = vst [vmem:[%s164 + $0x8c0] sm:$0xff] %v794
          %1076 = vst [vmem:[%s164 + $0x8c8] sm:$0xff] %v794
          %1077 = vst [vmem:[%s164 + $0x8d0] sm:$0xff] %v794
          %1078 = vst [vmem:[%s164 + $0x8d8] sm:$0xff] %v794
          %1079 = vst [vmem:[%s164 + $0x8e0] sm:$0xff] %v794
          %1080 = vst [vmem:[%s164 + $0x8e8] sm:$0xff] %v794
          %1081 = vst [vmem:[%s164 + $0x8f0] sm:$0xff] %v794
          %1082 = vst [vmem:[%s164 + $0x8f8] sm:$0xff] %v794
          %1083 = vst [vmem:[%s164 + $0x900] sm:$0xff] %v794
          %1084 = vst [vmem:[%s164 + $0x908] sm:$0xff] %v794
          %1085 = vst [vmem:[%s164 + $0x910] sm:$0xff] %v794
          %1086 = vst [vmem:[%s164 + $0x918] sm:$0xff] %v794
          %1087 = vst [vmem:[%s164 + $0x920] sm:$0xff] %v794
          %1088 = vst [vmem:[%s164 + $0x928] sm:$0xff] %v794
          %1089 = vst [vmem:[%s164 + $0x930] sm:$0xff] %v794
          %1090 = vst [vmem:[%s164 + $0x938] sm:$0xff] %v794
          %1091 = vst [vmem:[%s164 + $0x940] sm:$0xff] %v794
          %1092 = vst [vmem:[%s164 + $0x948] sm:$0xff] %v794
          %1093 = vst [vmem:[%s164 + $0x950] sm:$0xff] %v794
          %1094 = vst [vmem:[%s164 + $0x958] sm:$0xff] %v794
          %1095 = vst [vmem:[%s164 + $0x960] sm:$0xff] %v794
          %1096 = vst [vmem:[%s164 + $0x968] sm:$0xff] %v794
          %1097 = vst [vmem:[%s164 + $0x970] sm:$0xff] %v794
          %1098 = vst [vmem:[%s164 + $0x978] sm:$0xff] %v794
          %1099 = vst [vmem:[%s164 + $0x980] sm:$0xff] %v794
          %1100 = vst [vmem:[%s164 + $0x988] sm:$0xff] %v794
          %1101 = vst [vmem:[%s164 + $0x990] sm:$0xff] %v794
          %1102 = vst [vmem:[%s164 + $0x998] sm:$0xff] %v794
          %1103 = vst [vmem:[%s164 + $0x9a0] sm:$0xff] %v794
          %1104 = vst [vmem:[%s164 + $0x9a8] sm:$0xff] %v794
          %1105 = vst [vmem:[%s164 + $0x9b0] sm:$0xff] %v794
          %1106 = vst [vmem:[%s164 + $0x9b8] sm:$0xff] %v794
          %1107 = vst [vmem:[%s164 + $0x9c0] sm:$0xff] %v794
          %1108 = vst [vmem:[%s164 + $0x9c8] sm:$0xff] %v794
          %1109 = vst [vmem:[%s164 + $0x9d0] sm:$0xff] %v794
          %1110 = vst [vmem:[%s164 + $0x9d8] sm:$0xff] %v794
          %1111 = vst [vmem:[%s164 + $0x9e0] sm:$0xff] %v794
          %1112 = vst [vmem:[%s164 + $0x9e8] sm:$0xff] %v794
          %1113 = vst [vmem:[%s164 + $0x9f0] sm:$0xff] %v794
          %1114 = vst [vmem:[%s164 + $0x9f8] sm:$0xff] %v794
          %1115 = vst [vmem:[%s164 + $0xa00] sm:$0xff] %v794
          %1116 = vst [vmem:[%s164 + $0xa08] sm:$0xff] %v794
          %1117 = vst [vmem:[%s164 + $0xa10] sm:$0xff] %v794
          %1118 = vst [vmem:[%s164 + $0xa18] sm:$0xff] %v794
          %1119 = vst [vmem:[%s164 + $0xa20] sm:$0xff] %v794
          %1120 = vst [vmem:[%s164 + $0xa28] sm:$0xff] %v794
          %1121 = vst [vmem:[%s164 + $0xa30] sm:$0xff] %v794
          %1122 = vst [vmem:[%s164 + $0xa38] sm:$0xff] %v794
          %1123 = vst [vmem:[%s164 + $0xa40] sm:$0xff] %v794
          %1124 = vst [vmem:[%s164 + $0xa48] sm:$0xff] %v794
          %1125 = vst [vmem:[%s164 + $0xa50] sm:$0xff] %v794
          %1126 = vst [vmem:[%s164 + $0xa58] sm:$0xff] %v794
          %1127 = vst [vmem:[%s164 + $0xa60] sm:$0xff] %v794
          %1128 = vst [vmem:[%s164 + $0xa68] sm:$0xff] %v794
          %1129 = vst [vmem:[%s164 + $0xa70] sm:$0xff] %v794
          %1130 = vst [vmem:[%s164 + $0xa78] sm:$0xff] %v794
          %1131 = vst [vmem:[%s164 + $0xa80] sm:$0xff] %v794
          %1132 = vst [vmem:[%s164 + $0xa88] sm:$0xff] %v794
          %1133 = vst [vmem:[%s164 + $0xa90] sm:$0xff] %v794
          %1134 = vst [vmem:[%s164 + $0xa98] sm:$0xff] %v794
          %1135 = vst [vmem:[%s164 + $0xaa0] sm:$0xff] %v794
          %1136 = vst [vmem:[%s164 + $0xaa8] sm:$0xff] %v794
          %1137 = vst [vmem:[%s164 + $0xab0] sm:$0xff] %v794
          %1138 = vst [vmem:[%s164 + $0xab8] sm:$0xff] %v794
          %1139 = vst [vmem:[%s164 + $0xac0] sm:$0xff] %v794
          %1140 = vst [vmem:[%s164 + $0xac8] sm:$0xff] %v794
          %1141 = vst [vmem:[%s164 + $0xad0] sm:$0xff] %v794
          %1142 = vst [vmem:[%s164 + $0xad8] sm:$0xff] %v794
          %1143 = vst [vmem:[%s164 + $0xae0] sm:$0xff] %v794
          %1144 = vst [vmem:[%s164 + $0xae8] sm:$0xff] %v794
          %1145 = vst [vmem:[%s164 + $0xaf0] sm:$0xff] %v794
          %1146 = vst [vmem:[%s164 + $0xaf8] sm:$0xff] %v794
          %1147 = vst [vmem:[%s164 + $0xb00] sm:$0xff] %v794
          %1148 = vst [vmem:[%s164 + $0xb08] sm:$0xff] %v794
          %1149 = vst [vmem:[%s164 + $0xb10] sm:$0xff] %v794
          %1150 = vst [vmem:[%s164 + $0xb18] sm:$0xff] %v794
          %1151 = vst [vmem:[%s164 + $0xb20] sm:$0xff] %v794
          %1152 = vst [vmem:[%s164 + $0xb28] sm:$0xff] %v794
          %1153 = vst [vmem:[%s164 + $0xb30] sm:$0xff] %v794
          %1154 = vst [vmem:[%s164 + $0xb38] sm:$0xff] %v794
          %1155 = vst [vmem:[%s164 + $0xb40] sm:$0xff] %v794
          %1156 = vst [vmem:[%s164 + $0xb48] sm:$0xff] %v794
          %1157 = vst [vmem:[%s164 + $0xb50] sm:$0xff] %v794
          %1158 = vst [vmem:[%s164 + $0xb58] sm:$0xff] %v794
          %1159 = vst [vmem:[%s164 + $0xb60] sm:$0xff] %v794
          %1160 = vst [vmem:[%s164 + $0xb68] sm:$0xff] %v794
          %1161 = vst [vmem:[%s164 + $0xb70] sm:$0xff] %v794
          %1162 = vst [vmem:[%s164 + $0xb78] sm:$0xff] %v794
          %1163 = vst [vmem:[%s164 + $0xb80] sm:$0xff] %v794
          %1164 = vst [vmem:[%s164 + $0xb88] sm:$0xff] %v794
          %1165 = vst [vmem:[%s164 + $0xb90] sm:$0xff] %v794
          %1166 = vst [vmem:[%s164 + $0xb98] sm:$0xff] %v794
          %1167 = vst [vmem:[%s164 + $0xba0] sm:$0xff] %v794
          %1168 = vst [vmem:[%s164 + $0xba8] sm:$0xff] %v794
          %1169 = vst [vmem:[%s164 + $0xbb0] sm:$0xff] %v794
          %1170 = vst [vmem:[%s164 + $0xbb8] sm:$0xff] %v794
          %1171 = vst [vmem:[%s164 + $0xbc0] sm:$0xff] %v794
          %1172 = vst [vmem:[%s164 + $0xbc8] sm:$0xff] %v794
          %1173 = vst [vmem:[%s164 + $0xbd0] sm:$0xff] %v794
          %1174 = vst [vmem:[%s164 + $0xbd8] sm:$0xff] %v794
          %1175 = vst [vmem:[%s164 + $0xbe0] sm:$0xff] %v794
          %1176 = vst [vmem:[%s164 + $0xbe8] sm:$0xff] %v794
          %1177 = vst [vmem:[%s164 + $0xbf0] sm:$0xff] %v794
          %1178 = vst [vmem:[%s164 + $0xbf8] sm:$0xff] %v794
          %1179 = vst [vmem:[%s164 + $0xc00] sm:$0xff] %v794
          %1180 = vst [vmem:[%s164 + $0xc08] sm:$0xff] %v794
          %1181 = vst [vmem:[%s164 + $0xc10] sm:$0xff] %v794
          %1182 = vst [vmem:[%s164 + $0xc18] sm:$0xff] %v794
          %1183 = vst [vmem:[%s164 + $0xc20] sm:$0xff] %v794
          %1184 = vst [vmem:[%s164 + $0xc28] sm:$0xff] %v794
          %1185 = vst [vmem:[%s164 + $0xc30] sm:$0xff] %v794
          %1186 = vst [vmem:[%s164 + $0xc38] sm:$0xff] %v794
          %1187 = vst [vmem:[%s164 + $0xc40] sm:$0xff] %v794
          %1188 = vst [vmem:[%s164 + $0xc48] sm:$0xff] %v794
          %1189 = vst [vmem:[%s164 + $0xc50] sm:$0xff] %v794
          %1190 = vst [vmem:[%s164 + $0xc58] sm:$0xff] %v794
          %1191 = vst [vmem:[%s164 + $0xc60] sm:$0xff] %v794
          %1192 = vst [vmem:[%s164 + $0xc68] sm:$0xff] %v794
          %1193 = vst [vmem:[%s164 + $0xc70] sm:$0xff] %v794
          %1194 = vst [vmem:[%s164 + $0xc78] sm:$0xff] %v794
          %1195 = vst [vmem:[%s164 + $0xc80] sm:$0xff] %v794
          %1196 = vst [vmem:[%s164 + $0xc88] sm:$0xff] %v794
          %1197 = vst [vmem:[%s164 + $0xc90] sm:$0xff] %v794
          %1198 = vst [vmem:[%s164 + $0xc98] sm:$0xff] %v794
          %1199 = vst [vmem:[%s164 + $0xca0] sm:$0xff] %v794
          %1200 = vst [vmem:[%s164 + $0xca8] sm:$0xff] %v794
          %1201 = vst [vmem:[%s164 + $0xcb0] sm:$0xff] %v794
          %1202 = vst [vmem:[%s164 + $0xcb8] sm:$0xff] %v794
          %1203 = vst [vmem:[%s164 + $0xcc0] sm:$0xff] %v794
          %1204 = vst [vmem:[%s164 + $0xcc8] sm:$0xff] %v794
          %1205 = vst [vmem:[%s164 + $0xcd0] sm:$0xff] %v794
          %1206 = vst [vmem:[%s164 + $0xcd8] sm:$0xff] %v794
          %1207 = vst [vmem:[%s164 + $0xce0] sm:$0xff] %v794
          %1208 = vst [vmem:[%s164 + $0xce8] sm:$0xff] %v794
          %1209 = vst [vmem:[%s164 + $0xcf0] sm:$0xff] %v794
          %1210 = vst [vmem:[%s164 + $0xcf8] sm:$0xff] %v794
          %1211 = vst [vmem:[%s164 + $0xd00] sm:$0xff] %v794
          %1212 = vst [vmem:[%s164 + $0xd08] sm:$0xff] %v794
          %1213 = vst [vmem:[%s164 + $0xd10] sm:$0xff] %v794
          %1214 = vst [vmem:[%s164 + $0xd18] sm:$0xff] %v794
          %1215 = vst [vmem:[%s164 + $0xd20] sm:$0xff] %v794
          %1216 = vst [vmem:[%s164 + $0xd28] sm:$0xff] %v794
          %1217 = vst [vmem:[%s164 + $0xd30] sm:$0xff] %v794
          %1218 = vst [vmem:[%s164 + $0xd38] sm:$0xff] %v794
          %1219 = vst [vmem:[%s164 + $0xd40] sm:$0xff] %v794
          %1220 = vst [vmem:[%s164 + $0xd48] sm:$0xff] %v794
          %1221 = vst [vmem:[%s164 + $0xd50] sm:$0xff] %v794
          %1222 = vst [vmem:[%s164 + $0xd58] sm:$0xff] %v794
          %1223 = vst [vmem:[%s164 + $0xd60] sm:$0xff] %v794
          %1224 = vst [vmem:[%s164 + $0xd68] sm:$0xff] %v794
          %1225 = vst [vmem:[%s164 + $0xd70] sm:$0xff] %v794
          %1226 = vst [vmem:[%s164 + $0xd78] sm:$0xff] %v794
          %1227 = vst [vmem:[%s164 + $0xd80] sm:$0xff] %v794
          %1228 = vst [vmem:[%s164 + $0xd88] sm:$0xff] %v794
          %1229 = vst [vmem:[%s164 + $0xd90] sm:$0xff] %v794
          %1230 = vst [vmem:[%s164 + $0xd98] sm:$0xff] %v794
          %1231 = vst [vmem:[%s164 + $0xda0] sm:$0xff] %v794
          %1232 = vst [vmem:[%s164 + $0xda8] sm:$0xff] %v794
          %1233 = vst [vmem:[%s164 + $0xdb0] sm:$0xff] %v794
          %1234 = vst [vmem:[%s164 + $0xdb8] sm:$0xff] %v794
          %1235 = vst [vmem:[%s164 + $0xdc0] sm:$0xff] %v794
          %1236 = vst [vmem:[%s164 + $0xdc8] sm:$0xff] %v794
          %1237 = vst [vmem:[%s164 + $0xdd0] sm:$0xff] %v794
          %1238 = vst [vmem:[%s164 + $0xdd8] sm:$0xff] %v794
          %1239 = vst [vmem:[%s164 + $0xde0] sm:$0xff] %v794
          %1240 = vst [vmem:[%s164 + $0xde8] sm:$0xff] %v794
          %1241 = vst [vmem:[%s164 + $0xdf0] sm:$0xff] %v794
          %1242 = vst [vmem:[%s164 + $0xdf8] sm:$0xff] %v794
          %1243 = vst [vmem:[%s164 + $0xe00] sm:$0xff] %v794
          %1244 = vst [vmem:[%s164 + $0xe08] sm:$0xff] %v794
          %1245 = vst [vmem:[%s164 + $0xe10] sm:$0xff] %v794
          %1246 = vst [vmem:[%s164 + $0xe18] sm:$0xff] %v794
          %1247 = vst [vmem:[%s164 + $0xe20] sm:$0xff] %v794
          %1248 = vst [vmem:[%s164 + $0xe28] sm:$0xff] %v794
          %1249 = vst [vmem:[%s164 + $0xe30] sm:$0xff] %v794
          %1250 = vst [vmem:[%s164 + $0xe38] sm:$0xff] %v794
          %1251 = vst [vmem:[%s164 + $0xe40] sm:$0xff] %v794
          %1252 = vst [vmem:[%s164 + $0xe48] sm:$0xff] %v794
          %1253 = vst [vmem:[%s164 + $0xe50] sm:$0xff] %v794
          %1254 = vst [vmem:[%s164 + $0xe58] sm:$0xff] %v794
          %1255 = vst [vmem:[%s164 + $0xe60] sm:$0xff] %v794
          %1256 = vst [vmem:[%s164 + $0xe68] sm:$0xff] %v794
          %1257 = vst [vmem:[%s164 + $0xe70] sm:$0xff] %v794
          %1258 = vst [vmem:[%s164 + $0xe78] sm:$0xff] %v794
          %1259 = vst [vmem:[%s164 + $0xe80] sm:$0xff] %v794
          %1260 = vst [vmem:[%s164 + $0xe88] sm:$0xff] %v794
          %1261 = vst [vmem:[%s164 + $0xe90] sm:$0xff] %v794
          %1262 = vst [vmem:[%s164 + $0xe98] sm:$0xff] %v794
          %1263 = vst [vmem:[%s164 + $0xea0] sm:$0xff] %v794
          %1264 = vst [vmem:[%s164 + $0xea8] sm:$0xff] %v794
          %1265 = vst [vmem:[%s164 + $0xeb0] sm:$0xff] %v794
          %1266 = vst [vmem:[%s164 + $0xeb8] sm:$0xff] %v794
          %1267 = vst [vmem:[%s164 + $0xec0] sm:$0xff] %v794
          %1268 = vst [vmem:[%s164 + $0xec8] sm:$0xff] %v794
          %1269 = vst [vmem:[%s164 + $0xed0] sm:$0xff] %v794
          %1270 = vst [vmem:[%s164 + $0xed8] sm:$0xff] %v794
          %1271 = vst [vmem:[%s164 + $0xee0] sm:$0xff] %v794
          %1272 = vst [vmem:[%s164 + $0xee8] sm:$0xff] %v794
          %1273 = vst [vmem:[%s164 + $0xef0] sm:$0xff] %v794
          %1274 = vst [vmem:[%s164 + $0xef8] sm:$0xff] %v794
          %1275 = vst [vmem:[%s164 + $0xf00] sm:$0xff] %v794
          %1276 = vst [vmem:[%s164 + $0xf08] sm:$0xff] %v794
          %1277 = vst [vmem:[%s164 + $0xf10] sm:$0xff] %v794
          %1278 = vst [vmem:[%s164 + $0xf18] sm:$0xff] %v794
          %1279 = vst [vmem:[%s164 + $0xf20] sm:$0xff] %v794
          %1280 = vst [vmem:[%s164 + $0xf28] sm:$0xff] %v794
          %1281 = vst [vmem:[%s164 + $0xf30] sm:$0xff] %v794
          %1282 = vst [vmem:[%s164 + $0xf38] sm:$0xff] %v794
          %1283 = vst [vmem:[%s164 + $0xf40] sm:$0xff] %v794
          %1284 = vst [vmem:[%s164 + $0xf48] sm:$0xff] %v794
          %1285 = vst [vmem:[%s164 + $0xf50] sm:$0xff] %v794
          %1286 = vst [vmem:[%s164 + $0xf58] sm:$0xff] %v794
          %1287 = vst [vmem:[%s164 + $0xf60] sm:$0xff] %v794
          %1288 = vst [vmem:[%s164 + $0xf68] sm:$0xff] %v794
          %1289 = vst [vmem:[%s164 + $0xf70] sm:$0xff] %v794
          %1290 = vst [vmem:[%s164 + $0xf78] sm:$0xff] %v794
          %1291 = vst [vmem:[%s164 + $0xf80] sm:$0xff] %v794
          %1292 = vst [vmem:[%s164 + $0xf88] sm:$0xff] %v794
          %1293 = vst [vmem:[%s164 + $0xf90] sm:$0xff] %v794
          %1294 = vst [vmem:[%s164 + $0xf98] sm:$0xff] %v794
          %1295 = vst [vmem:[%s164 + $0xfa0] sm:$0xff] %v794
          %1296 = vst [vmem:[%s164 + $0xfa8] sm:$0xff] %v794
          %1297 = vst [vmem:[%s164 + $0xfb0] sm:$0xff] %v794
          %1298 = vst [vmem:[%s164 + $0xfb8] sm:$0xff] %v794
          %1299 = vst [vmem:[%s164 + $0xfc0] sm:$0xff] %v794
          %1300 = vst [vmem:[%s164 + $0xfc8] sm:$0xff] %v794
          %1301 = vst [vmem:[%s164 + $0xfd0] sm:$0xff] %v794
          %1302 = vst [vmem:[%s164 + $0xfd8] sm:$0xff] %v794
          %1303 = vst [vmem:[%s164 + $0xfe0] sm:$0xff] %v794
          %1304 = vst [vmem:[%s164 + $0xfe8] sm:$0xff] %v794
          %1305 = vst [vmem:[%s164 + $0xff0] sm:$0xff] %v794
          %1306 = vst [vmem:[%s164 + $0xff8] sm:$0xff] %v794
        $region40: #{generalized_rcnn_forward.8} parent=27 // pred_fallthru
          _
        %s1307 = sand.u32 %s86, 1
        %s1308 = scalar_lea.sflag [#allocation3], %s1307
        %s1309 = sand.u32 %s86, 1
        %s1310 = smul.addr %s1309, 4096
        %s1311 = scalar_lea.vmem [#allocation5], %s1310
        // Predicated region
        $region41: #{generalized_rcnn_forward.8} parent=27 // pred_check
          %p1312 = pneg %p96
        $region42: #{generalized_rcnn_forward.8} parent=27 // pred_check_branch
          %1314 = sbr.rel (%p1312) target = $region44
        $region43: #{generalized_rcnn_forward.8} parent=27 // pred_region
          %s1315 = smul.u32 2, %s22
          %1317 = vsyncadd %s1308, 0
          %s1318 = smul.addr %s1315, 256
          %s1319 = smul.addr %s21, 8192
          %s1320 = sadd.s32 %s1318, %s1319
          %s1321 = smul.addr %s1320, 8
          %s1322 = scalar_lea.hbm %s2, %s1321
          %s1323 = sshll.u32 %s1311, 4
          %s1324 = int_to_ptr.vmem [resolvable:$true] %s1323
          %s1325 = sshll.u32 %s1322, 4
          %s1326 = int_to_ptr.hbm [resolvable:$true] %s1325
          %1331 = dma.vmem_to_hbm [thread:$0]  %s1324, 65536, %s1326, %s1308, 32768, 32768, 2048
        $region44: #{generalized_rcnn_forward.8} parent=27 // pred_fallthru
          _
      $region28: #{generalized_rcnn_forward.8} parent=5 // pred_fallthru
        _
      %p1332 = scmp.le.s32.totalorder 2, %s12
      // Predicated region
      $region45: #{generalized_rcnn_forward.8} parent=5 // pred_check
        %p1333 = pneg %p1332
      $region46: #{generalized_rcnn_forward.8} parent=5 // pred_check_branch
        %1335 = sbr.rel (%p1333) target = $region48
      $region47: #{generalized_rcnn_forward.8} parent=5 // pred_region
        %s1336 = ssub.s32 %s12, 2
        // Predicated region
        $region49: #{generalized_rcnn_forward.8} parent=47 // pred_check
          %p1337 = pneg %p102
        $region50: #{generalized_rcnn_forward.8} parent=47 // pred_check_branch
          %1339 = sbr.rel (%p1337) target = $region52
        $region51: #{generalized_rcnn_forward.8} parent=47 // pred_region
          %s1340 = sand.u32 %s87, 1
          %s1341 = scalar_lea.sflag [#allocation3], %s1340
          %s1342 = sand.u32 %s87, 1
          %s1343 = smul.addr %s1342, 4096
          %s1344 = scalar_lea.vmem [#allocation5], %s1343
          %1346 = dma.done %s1341, 65536
        $region52: #{generalized_rcnn_forward.8} parent=47 // pred_fallthru
          _
      $region48: #{generalized_rcnn_forward.8} parent=5 // pred_fallthru
        _
    $region6: #{generalized_rcnn_forward.8} parent=1 // loop_footer
      %s16 = sadd.s32 1, %s12
    $region7: #{generalized_rcnn_forward.8} parent=1 // loop_footer_branch
      %11 = sbr.rel target = $region3
    $region8: #{generalized_rcnn_forward.8} parent=1 // loop_exit
      _
    %1347 = vsyncpa [#allocation3], 1
    %s1348 = scalar_lea.sflag [#allocation3], 1
    %1349 = vsyncpa %s1348, 1
    %1350 = vsyncpa [#allocation4], 1
    %s1351 = scalar_lea.sflag [#allocation4], 1
    %1352 = vsyncpa %s1351, 1

// kernel: tile.18
$region0: #{tile.18}
  #allocation0 [shape = 's32[1]{0}', space=sflag, size = 0x4, scoped, tag = 'scoped memory for tile.18']
  %s0 = inlined_call_operand.vmem [shape: f32[3], index: 0, kind: input, shape index: {}]
  %s1 = inlined_call_operand.vmem [shape: f32[2,3], index: 1, kind: output, shape index: {}]
  // Predicated region
  $region2: #{tile.18} parent=0 // pred_check
    _
  $region3: #{tile.18} parent=0 // pred_check_branch
    %3 = sbr.rel (0) target = $region5
  $region4: #{tile.18} parent=0 // pred_region
    _
  $region5: #{tile.18} parent=0 // pred_fallthru
    _
  %v4 = vld [vmem:[%s0] ss:$0 sm:$0xff]
  %5 = vst [vmem:[%s1] sm:$0x3] %v4

// kernel: tile.19
$region0: #{tile.19}
  %s0 = inlined_call_operand.vmem [shape: f32[2,3], index: 0, kind: input, shape index: {}]
  %s1 = inlined_call_operand.vmem [shape: f32[6], index: 1, kind: output, shape index: {}]
  $region1: #{tile.19} parent=0
    #allocation0 [shape = 'u8[4096]{0}', space=vmem, size = 0x1000, scoped, tag = 'scoped mem for output reshape']
    #allocation1 [shape = 'u8[4096]{0}', space=vmem, size = 0x1000, scoped, tag = 'scoped mem for input reshape']
    %s3 = ssub.s32 4, 1
    %v4 = vld [vmem:[%s0] sm:%s3]
    %5 = vst [vmem:[#allocation1] sm:%s3] %v4
    %v6 = vld [vmem:[#allocation1] sm:$0x1]
    %vm7 = vcmask 23552
    %8 = vst.msk [vmem:[#allocation0] sm:$0x1] %vm7, %v6
    %s9 = scalar_lea.vmem [#allocation1], 1
    %v10 = vld [vmem:[%s9] sm:$0x1]
    %11 = vrot.lane.b32.xlu0 %v10, 3
    %v12 = vpop.permute.xlu0 %11
    %vm13 = vcmask 48152
    %14 = vst.msk [vmem:[#allocation0] sm:$0x1] %vm13, %v12
    %s16 = ssub.s32 2, 1
    %v17 = vld [vmem:[#allocation0] sm:%s16]
    %s19 = ssub.s32 2, 1
    %20 = vst [vmem:[%s1] sm:%s19] %v17

// kernel: generalized_rcnn_forward.9
$region0: #{generalized_rcnn_forward.9}
  #allocation0 [shape = 'u32[]', space=smem, size = 0x4, offset = 0x4, fixed_abs, tag = 'smem constant byte address 0x4 - core index']
  #allocation1 [shape = 'u32[72,128]{1,0:T(1,128)}', space=vmem, size = 0x9000, scoped, tag = 'internal scratch']
  %s0 = inlined_call_operand.vmem [shape: f32[2], index: 0, kind: input, shape index: {}]
  %s1 = inlined_call_operand.vmem [shape: f32[2,8,1024], index: 1, kind: input, shape index: {}]
  %s2 = inlined_call_operand.vmem [shape: f32[2,128,16384], index: 2, kind: output, shape index: {}]
  %s3 = sld [smem:[#allocation0]]
  $region53: #{generalized_rcnn_forward.9} parent=0
    _
  %s5 = ssub.s32 1, %s3
  %s6 = scalar_select 0, %s5, %s3
  $region1: #{generalized_rcnn_forward.9} parent=0
    #allocation2 [shape = 'u8[512]{0}', space=smem, size = 0x200, scoped, tag = 'input window, operand 0, single buffered']
    #allocation3 [shape = 's32[2]{0}', space=sflag, size = 0x8, scoped, tag = 'scoped memory for generalized_rcnn_forward.9']
    %7 = vsyncpa [#allocation3], 0
    loop: start=0, step=1, limit=10
    $region2: #{generalized_rcnn_forward.9} parent=1 // loop_pre_header
      _
    $region3: #{generalized_rcnn_forward.9} parent=1 // loop_header
      %s9 = sphi 0, %s13
      %p10 = scmp.ge.s32.totalorder %s9, 10
      %s16 = sphi 0, %s28
      %s17 = sphi 0, %s24
      %s18 = sphi 0, %s16
      %s19 = sphi 0, %s17
      %s20 = sphi 0, %s18
      %s21 = sphi 0, %s19
      %s29 = sphi 0, %s29
      %s31 = sphi 0, %s29
      %s32 = sphi 0, %s31
      %s46 = sphi 0, %s32
      %s52 = sphi 0, %s54
      %s55 = sphi 0, %s52
      %s56 = sphi 0, %s55
      %s72 = sphi 0, %s56
      %s80 = sphi 0, %s82
      %s83 = sphi 0, %s80
      %s84 = sphi 0, %s83
      %s100 = sphi 0, %s84
    $region4: #{generalized_rcnn_forward.9} parent=1 // loop_header_branch
      %12 = sbr.rel (%p10) target = $region8
    $region5: #{generalized_rcnn_forward.9} parent=1 // loop_body
      %s14 = ssub.s32 %s9, 1
      %s15 = ssub.s32 %s9, 2
      %s22 = sadd.s32 1, %s17
      %p23 = scmp.ge.s32.totalorder %s22, 4
      %s24 = scalar_select %p23, 0, %s22
      %s25 = sadd.s32 1, %s16
      %s26 = scalar_select %p23, %s25, %s16
      %p27 = scmp.ge.s32.totalorder %s26, 2
      %s28 = scalar_select %p27, 0, %s26
      %s30 = sadd.s32 %s29, 1
      %p33 = scmp.eq.s32.totalorder %s9, 7
      %p34 = scmp.ne.s32.totalorder %s29, %s31
      %p35 = scmp.eq.s32.totalorder %s9, 0
      %p36 = por %p34, %p35
      %p37 = scmp.ne.s32.totalorder %s29, %s31
      %p38 = scmp.eq.s32.totalorder %s14, 7
      %p39 = por %p37, %p38
      %p40 = scmp.ne.s32.totalorder %s31, %s32
      %p41 = scmp.eq.s32.totalorder %s14, 0
      %p42 = por %p40, %p41
      %p43 = scmp.ne.s32.totalorder %s31, %s32
      %p44 = scmp.eq.s32.totalorder %s15, 7
      %p45 = por %p43, %p44
      %p47 = scmp.ne.s32.totalorder %s32, %s46
      %p48 = scmp.eq.s32.totalorder %s15, 0
      %p49 = por %p47, %p48
      %s50 = ssub.s32 %s16, %s28
      %p51 = scmp.eq.s32.totalorder %s50, 0
      %s53 = sadd.s32 %s52, 1
      %s54 = scalar_select %p51, %s52, %s53
      %p57 = pneg %p51
      %p58 = scmp.eq.s32.totalorder %s9, 7
      %p59 = por %p57, %p58
      %p60 = scmp.ne.s32.totalorder %s52, %s55
      %p61 = scmp.eq.s32.totalorder %s9, 0
      %p62 = por %p60, %p61
      %p63 = scmp.ne.s32.totalorder %s52, %s55
      %p64 = scmp.eq.s32.totalorder %s14, 7
      %p65 = por %p63, %p64
      %p66 = scmp.ne.s32.totalorder %s55, %s56
      %p67 = scmp.eq.s32.totalorder %s14, 0
      %p68 = por %p66, %p67
      %p69 = scmp.ne.s32.totalorder %s55, %s56
      %p70 = scmp.eq.s32.totalorder %s15, 7
      %p71 = por %p69, %p70
      %p73 = scmp.ne.s32.totalorder %s56, %s72
      %p74 = scmp.eq.s32.totalorder %s15, 0
      %p75 = por %p73, %p74
      %s76 = ssub.s32 %s16, %s28
      %s77 = ssub.s32 %s17, %s24
      %s78 = sor.u32 %s76, %s77
      %p79 = scmp.eq.s32.totalorder %s78, 0
      %s81 = sadd.s32 %s80, 1
      %s82 = scalar_select %p79, %s80, %s81
      %p85 = pneg %p79
      %p86 = scmp.eq.s32.totalorder %s9, 7
      %p87 = por %p85, %p86
      %p88 = scmp.ne.s32.totalorder %s80, %s83
      %p89 = scmp.eq.s32.totalorder %s9, 0
      %p90 = por %p88, %p89
      %p91 = scmp.ne.s32.totalorder %s80, %s83
      %p92 = scmp.eq.s32.totalorder %s14, 7
      %p93 = por %p91, %p92
      %p94 = scmp.ne.s32.totalorder %s83, %s84
      %p95 = scmp.eq.s32.totalorder %s14, 0
      %p96 = por %p94, %p95
      %p97 = scmp.ne.s32.totalorder %s83, %s84
      %p98 = scmp.eq.s32.totalorder %s15, 7
      %p99 = por %p97, %p98
      %p101 = scmp.ne.s32.totalorder %s84, %s100
      %p102 = scmp.eq.s32.totalorder %s15, 0
      %p103 = por %p101, %p102
      %p104 = scmp.le.s32.totalorder 1, %s9
      %p105 = scmp.lt.s32.totalorder %s9, 9
      %p106 = pnand %p104, %p105
      %p107 = pneg %p106
      // Predicated region
      $region9: #{generalized_rcnn_forward.9} parent=5 // pred_check
        _
      $region10: #{generalized_rcnn_forward.9} parent=5 // pred_check_branch
        %109 = sbr.rel (%p106) target = $region12
      $region11: #{generalized_rcnn_forward.9} parent=5 // pred_region
        %s110 = ssub.s32 %s9, 1
        // Predicated region
        $region13: #{generalized_rcnn_forward.9} parent=11 // pred_check
          %p111 = pneg %p42
        $region14: #{generalized_rcnn_forward.9} parent=11 // pred_check_branch
          %113 = sbr.rel (%p111) target = $region16
        $region15: #{generalized_rcnn_forward.9} parent=11 // pred_region
          %115 = vsyncadd [#allocation3], 0
          %s117 = sshll.u32 %s0, 4
          %s118 = int_to_ptr.vmem [resolvable:$true] %s117
          %120 = dma.vmem_to_smem %s118, 16, [#allocation2], [#allocation3]
        $region16: #{generalized_rcnn_forward.9} parent=11 // pred_fallthru
          _
      $region12: #{generalized_rcnn_forward.9} parent=5 // pred_fallthru
        _
      %p121 = scmp.lt.s32.totalorder %s9, 8
      // Predicated region
      $region17: #{generalized_rcnn_forward.9} parent=5 // pred_check
        %p122 = pneg %p121
      $region18: #{generalized_rcnn_forward.9} parent=5 // pred_check_branch
        %124 = sbr.rel (%p122) target = $region20
      $region19: #{generalized_rcnn_forward.9} parent=5 // pred_region
        // Predicated region
        $region21: #{generalized_rcnn_forward.9} parent=19 // pred_check
          %p125 = pneg %p62
        $region22: #{generalized_rcnn_forward.9} parent=19 // pred_check_branch
          %127 = sbr.rel (%p125) target = $region24
        $region23: #{generalized_rcnn_forward.9} parent=19 // pred_region
          %p128 = scmp.lt.s32.totalorder %s16, 1
          %s129 = scalar_select %p128, %s16, 1
          %s130 = smul.addr %s129, 8
          %s131 = smul.addr %s130, 8
          %s132 = scalar_lea.vmem %s1, %s131
        $region24: #{generalized_rcnn_forward.9} parent=19 // pred_fallthru
          _
      $region20: #{generalized_rcnn_forward.9} parent=5 // pred_fallthru
        _
      %p133 = scmp.le.s32.totalorder 1, %s9
      %p134 = scmp.lt.s32.totalorder %s9, 9
      %p135 = pnand %p133, %p134
      %p136 = pneg %p135
      // Predicated region
      $region25: #{generalized_rcnn_forward.9} parent=5 // pred_check
        _
      $region26: #{generalized_rcnn_forward.9} parent=5 // pred_check_branch
        %138 = sbr.rel (%p135) target = $region28
      $region27: #{generalized_rcnn_forward.9} parent=5 // pred_region
        %s139 = ssub.s32 %s9, 1
        // Predicated region
        $region29: #{generalized_rcnn_forward.9} parent=27 // pred_check
          %p140 = pneg %p42
        $region30: #{generalized_rcnn_forward.9} parent=27 // pred_check_branch
          %142 = sbr.rel (%p140) target = $region32
        $region31: #{generalized_rcnn_forward.9} parent=27 // pred_region
          %144 = dma.done [#allocation3], 16
        $region32: #{generalized_rcnn_forward.9} parent=27 // pred_fallthru
          _
        %145 = sfence
        %p146 = pneg %p42
        %p147 = pneg %p39
        %p148 = scmp.lt.s32.totalorder %s18, 1
        %s149 = scalar_select %p148, %s18, 1
        %s150 = smul.addr %s149, 8
        %s151 = smul.addr %s150, 8
        %s152 = scalar_lea.vmem %s1, %s151
        %p153 = pneg %p68
        %p154 = pneg %p65
        %p155 = pneg %p96
        %p156 = pneg %p93
        %s157 = smul.u32 4, %s19
        %p158 = scmp.lt.s32.totalorder %s18, 1
        %s159 = scalar_select %p158, %s18, 1
        %p160 = scmp.lt.s32.totalorder %s157, 15
        %s161 = scalar_select %p160, %s157, 15
        %s162 = smul.addr %s161, 128
        %s163 = smul.addr %s159, 2048
        %s164 = sadd.s32 %s162, %s163
        %s165 = smul.addr %s164, 8
        %s166 = scalar_lea.vmem %s2, %s165
        %p167 = scmp.lt.s32.totalorder %s18, 1
        %s168 = scalar_select %p167, %s18, 1
        %s169 = smul.addr %s168, 8
        %s170 = smul.addr %s169, 8
        %s171 = scalar_lea.vmem %s1, %s170
        %s172 = smul.u32 4, %s19
        %p173 = scmp.lt.s32.totalorder %s18, 1
        %s174 = scalar_select %p173, %s18, 1
        %p175 = scmp.lt.s32.totalorder %s172, 15
        %s176 = scalar_select %p175, %s172, 15
        %s177 = smul.addr %s176, 128
        %s178 = smul.addr %s174, 2048
        %s179 = sadd.s32 %s177, %s178
        %s180 = smul.addr %s179, 8
        %s181 = scalar_lea.vmem %s2, %s180
        %s182 = smul.u32 4, %s19
        %s183 = sld [smem:[#allocation2]]
        %s184 = sld [smem:[#allocation2 + $0x1]]
        %s185 = ssub.f32 0.0, %s183
        %s186 = smul.f32 %s185, %s184
        %p187 = scmp.eq.s32.totalorder %s19, 0
        // Predicated region
        $region33: #{generalized_rcnn_forward.9} parent=27 // pred_check
          %p188 = pneg %p187
        $region34: #{generalized_rcnn_forward.9} parent=27 // pred_check_branch
          %190 = sbr.rel (%p188) target = $region36
        $region35: #{generalized_rcnn_forward.9} parent=27 // pred_region
          %v191 = vld [vmem:[%s171] sm:$0xff]
          %v192 = vld [vmem:[%s171 + $0x8] sm:$0xff]
          %v193 = vld [vmem:[%s171 + $0x10] sm:$0xff]
          %v194 = vld [vmem:[%s171 + $0x18] sm:$0xff]
          %v195 = vld [vmem:[%s171 + $0x20] sm:$0xff]
          %v196 = vld [vmem:[%s171 + $0x28] sm:$0xff]
          %v197 = vld [vmem:[%s171 + $0x30] sm:$0xff]
          %v198 = vld [vmem:[%s171 + $0x38] sm:$0xff]
          %v199 = vstv %s183
          %v200 = vsub.f32 %v191, %v199
          %v201 = vsub.f32 %v192, %v199
          %v202 = vsub.f32 %v193, %v199
          %v203 = vsub.f32 %v194, %v199
          %v204 = vsub.f32 %v195, %v199
          %v205 = vsub.f32 %v196, %v199
          %v206 = vsub.f32 %v197, %v199
          %v207 = vsub.f32 %v198, %v199
          %v208 = vstv %s184
          %v209 = vmul.f32 %v200, %v208
          %v210 = vmul.f32 %v201, %v208
          %v211 = vmul.f32 %v202, %v208
          %v212 = vmul.f32 %v203, %v208
          %v213 = vmul.f32 %v204, %v208
          %v214 = vmul.f32 %v205, %v208
          %v215 = vmul.f32 %v206, %v208
          %v216 = vmul.f32 %v207, %v208
          %217 = vst [vmem:[%s181] sm:$0xff] %v209
          %218 = vst [vmem:[%s181 + $0x8] sm:$0xff] %v210
          %219 = vst [vmem:[%s181 + $0x10] sm:$0xff] %v211
          %220 = vst [vmem:[%s181 + $0x18] sm:$0xff] %v212
          %221 = vst [vmem:[%s181 + $0x20] sm:$0xff] %v213
          %222 = vst [vmem:[%s181 + $0x28] sm:$0xff] %v214
          %223 = vst [vmem:[%s181 + $0x30] sm:$0xff] %v215
          %224 = vst [vmem:[%s181 + $0x38] sm:$0xff] %v216
          %v225 = vstv %s186
          %226 = vst [vmem:[%s181 + $0x40] sm:$0xff] %v225
          %227 = vst [vmem:[%s181 + $0x48] sm:$0xff] %v225
          %228 = vst [vmem:[%s181 + $0x50] sm:$0xff] %v225
          %229 = vst [vmem:[%s181 + $0x58] sm:$0xff] %v225
          %230 = vst [vmem:[%s181 + $0x60] sm:$0xff] %v225
          %231 = vst [vmem:[%s181 + $0x68] sm:$0xff] %v225
          %232 = vst [vmem:[%s181 + $0x70] sm:$0xff] %v225
          %233 = vst [vmem:[%s181 + $0x78] sm:$0xff] %v225
          %234 = vst [vmem:[%s181 + $0x80] sm:$0xff] %v225
          %235 = vst [vmem:[%s181 + $0x88] sm:$0xff] %v225
          %236 = vst [vmem:[%s181 + $0x90] sm:$0xff] %v225
          %237 = vst [vmem:[%s181 + $0x98] sm:$0xff] %v225
          %238 = vst [vmem:[%s181 + $0xa0] sm:$0xff] %v225
          %239 = vst [vmem:[%s181 + $0xa8] sm:$0xff] %v225
          %240 = vst [vmem:[%s181 + $0xb0] sm:$0xff] %v225
          %241 = vst [vmem:[%s181 + $0xb8] sm:$0xff] %v225
          %242 = vst [vmem:[%s181 + $0xc0] sm:$0xff] %v225
          %243 = vst [vmem:[%s181 + $0xc8] sm:$0xff] %v225
          %244 = vst [vmem:[%s181 + $0xd0] sm:$0xff] %v225
          %245 = vst [vmem:[%s181 + $0xd8] sm:$0xff] %v225
          %246 = vst [vmem:[%s181 + $0xe0] sm:$0xff] %v225
          %247 = vst [vmem:[%s181 + $0xe8] sm:$0xff] %v225
          %248 = vst [vmem:[%s181 + $0xf0] sm:$0xff] %v225
          %249 = vst [vmem:[%s181 + $0xf8] sm:$0xff] %v225
          %250 = vst [vmem:[%s181 + $0x100] sm:$0xff] %v225
          %251 = vst [vmem:[%s181 + $0x108] sm:$0xff] %v225
          %252 = vst [vmem:[%s181 + $0x110] sm:$0xff] %v225
          %253 = vst [vmem:[%s181 + $0x118] sm:$0xff] %v225
          %254 = vst [vmem:[%s181 + $0x120] sm:$0xff] %v225
          %255 = vst [vmem:[%s181 + $0x128] sm:$0xff] %v225
          %256 = vst [vmem:[%s181 + $0x130] sm:$0xff] %v225
          %257 = vst [vmem:[%s181 + $0x138] sm:$0xff] %v225
          %258 = vst [vmem:[%s181 + $0x140] sm:$0xff] %v225
          %259 = vst [vmem:[%s181 + $0x148] sm:$0xff] %v225
          %260 = vst [vmem:[%s181 + $0x150] sm:$0xff] %v225
          %261 = vst [vmem:[%s181 + $0x158] sm:$0xff] %v225
          %262 = vst [vmem:[%s181 + $0x160] sm:$0xff] %v225
          %263 = vst [vmem:[%s181 + $0x168] sm:$0xff] %v225
          %264 = vst [vmem:[%s181 + $0x170] sm:$0xff] %v225
          %265 = vst [vmem:[%s181 + $0x178] sm:$0xff] %v225
          %266 = vst [vmem:[%s181 + $0x180] sm:$0xff] %v225
          %267 = vst [vmem:[%s181 + $0x188] sm:$0xff] %v225
          %268 = vst [vmem:[%s181 + $0x190] sm:$0xff] %v225
          %269 = vst [vmem:[%s181 + $0x198] sm:$0xff] %v225
          %270 = vst [vmem:[%s181 + $0x1a0] sm:$0xff] %v225
          %271 = vst [vmem:[%s181 + $0x1a8] sm:$0xff] %v225
          %272 = vst [vmem:[%s181 + $0x1b0] sm:$0xff] %v225
          %273 = vst [vmem:[%s181 + $0x1b8] sm:$0xff] %v225
          %274 = vst [vmem:[%s181 + $0x1c0] sm:$0xff] %v225
          %275 = vst [vmem:[%s181 + $0x1c8] sm:$0xff] %v225
          %276 = vst [vmem:[%s181 + $0x1d0] sm:$0xff] %v225
          %277 = vst [vmem:[%s181 + $0x1d8] sm:$0xff] %v225
          %278 = vst [vmem:[%s181 + $0x1e0] sm:$0xff] %v225
          %279 = vst [vmem:[%s181 + $0x1e8] sm:$0xff] %v225
          %280 = vst [vmem:[%s181 + $0x1f0] sm:$0xff] %v225
          %281 = vst [vmem:[%s181 + $0x1f8] sm:$0xff] %v225
          %282 = vst [vmem:[%s181 + $0x200] sm:$0xff] %v225
          %283 = vst [vmem:[%s181 + $0x208] sm:$0xff] %v225
          %284 = vst [vmem:[%s181 + $0x210] sm:$0xff] %v225
          %285 = vst [vmem:[%s181 + $0x218] sm:$0xff] %v225
          %286 = vst [vmem:[%s181 + $0x220] sm:$0xff] %v225
          %287 = vst [vmem:[%s181 + $0x228] sm:$0xff] %v225
          %288 = vst [vmem:[%s181 + $0x230] sm:$0xff] %v225
          %289 = vst [vmem:[%s181 + $0x238] sm:$0xff] %v225
          %290 = vst [vmem:[%s181 + $0x240] sm:$0xff] %v225
          %291 = vst [vmem:[%s181 + $0x248] sm:$0xff] %v225
          %292 = vst [vmem:[%s181 + $0x250] sm:$0xff] %v225
          %293 = vst [vmem:[%s181 + $0x258] sm:$0xff] %v225
          %294 = vst [vmem:[%s181 + $0x260] sm:$0xff] %v225
          %295 = vst [vmem:[%s181 + $0x268] sm:$0xff] %v225
          %296 = vst [vmem:[%s181 + $0x270] sm:$0xff] %v225
          %297 = vst [vmem:[%s181 + $0x278] sm:$0xff] %v225
          %298 = vst [vmem:[%s181 + $0x280] sm:$0xff] %v225
          %299 = vst [vmem:[%s181 + $0x288] sm:$0xff] %v225
          %300 = vst [vmem:[%s181 + $0x290] sm:$0xff] %v225
          %301 = vst [vmem:[%s181 + $0x298] sm:$0xff] %v225
          %302 = vst [vmem:[%s181 + $0x2a0] sm:$0xff] %v225
          %303 = vst [vmem:[%s181 + $0x2a8] sm:$0xff] %v225
          %304 = vst [vmem:[%s181 + $0x2b0] sm:$0xff] %v225
          %305 = vst [vmem:[%s181 + $0x2b8] sm:$0xff] %v225
          %306 = vst [vmem:[%s181 + $0x2c0] sm:$0xff] %v225
          %307 = vst [vmem:[%s181 + $0x2c8] sm:$0xff] %v225
          %308 = vst [vmem:[%s181 + $0x2d0] sm:$0xff] %v225
          %309 = vst [vmem:[%s181 + $0x2d8] sm:$0xff] %v225
          %310 = vst [vmem:[%s181 + $0x2e0] sm:$0xff] %v225
          %311 = vst [vmem:[%s181 + $0x2e8] sm:$0xff] %v225
          %312 = vst [vmem:[%s181 + $0x2f0] sm:$0xff] %v225
          %313 = vst [vmem:[%s181 + $0x2f8] sm:$0xff] %v225
          %314 = vst [vmem:[%s181 + $0x300] sm:$0xff] %v225
          %315 = vst [vmem:[%s181 + $0x308] sm:$0xff] %v225
          %316 = vst [vmem:[%s181 + $0x310] sm:$0xff] %v225
          %317 = vst [vmem:[%s181 + $0x318] sm:$0xff] %v225
          %318 = vst [vmem:[%s181 + $0x320] sm:$0xff] %v225
          %319 = vst [vmem:[%s181 + $0x328] sm:$0xff] %v225
          %320 = vst [vmem:[%s181 + $0x330] sm:$0xff] %v225
          %321 = vst [vmem:[%s181 + $0x338] sm:$0xff] %v225
          %322 = vst [vmem:[%s181 + $0x340] sm:$0xff] %v225
          %323 = vst [vmem:[%s181 + $0x348] sm:$0xff] %v225
          %324 = vst [vmem:[%s181 + $0x350] sm:$0xff] %v225
          %325 = vst [vmem:[%s181 + $0x358] sm:$0xff] %v225
          %326 = vst [vmem:[%s181 + $0x360] sm:$0xff] %v225
          %327 = vst [vmem:[%s181 + $0x368] sm:$0xff] %v225
          %328 = vst [vmem:[%s181 + $0x370] sm:$0xff] %v225
          %329 = vst [vmem:[%s181 + $0x378] sm:$0xff] %v225
          %330 = vst [vmem:[%s181 + $0x380] sm:$0xff] %v225
          %331 = vst [vmem:[%s181 + $0x388] sm:$0xff] %v225
          %332 = vst [vmem:[%s181 + $0x390] sm:$0xff] %v225
          %333 = vst [vmem:[%s181 + $0x398] sm:$0xff] %v225
          %334 = vst [vmem:[%s181 + $0x3a0] sm:$0xff] %v225
          %335 = vst [vmem:[%s181 + $0x3a8] sm:$0xff] %v225
          %336 = vst [vmem:[%s181 + $0x3b0] sm:$0xff] %v225
          %337 = vst [vmem:[%s181 + $0x3b8] sm:$0xff] %v225
          %338 = vst [vmem:[%s181 + $0x3c0] sm:$0xff] %v225
          %339 = vst [vmem:[%s181 + $0x3c8] sm:$0xff] %v225
          %340 = vst [vmem:[%s181 + $0x3d0] sm:$0xff] %v225
          %341 = vst [vmem:[%s181 + $0x3d8] sm:$0xff] %v225
          %342 = vst [vmem:[%s181 + $0x3e0] sm:$0xff] %v225
          %343 = vst [vmem:[%s181 + $0x3e8] sm:$0xff] %v225
          %344 = vst [vmem:[%s181 + $0x3f0] sm:$0xff] %v225
          %345 = vst [vmem:[%s181 + $0x3f8] sm:$0xff] %v225
          %346 = vst [vmem:[%s181 + $0x400] sm:$0xff] %v225
          %347 = vst [vmem:[%s181 + $0x408] sm:$0xff] %v225
          %348 = vst [vmem:[%s181 + $0x410] sm:$0xff] %v225
          %349 = vst [vmem:[%s181 + $0x418] sm:$0xff] %v225
          %350 = vst [vmem:[%s181 + $0x420] sm:$0xff] %v225
          %351 = vst [vmem:[%s181 + $0x428] sm:$0xff] %v225
          %352 = vst [vmem:[%s181 + $0x430] sm:$0xff] %v225
          %353 = vst [vmem:[%s181 + $0x438] sm:$0xff] %v225
          %354 = vst [vmem:[%s181 + $0x440] sm:$0xff] %v225
          %355 = vst [vmem:[%s181 + $0x448] sm:$0xff] %v225
          %356 = vst [vmem:[%s181 + $0x450] sm:$0xff] %v225
          %357 = vst [vmem:[%s181 + $0x458] sm:$0xff] %v225
          %358 = vst [vmem:[%s181 + $0x460] sm:$0xff] %v225
          %359 = vst [vmem:[%s181 + $0x468] sm:$0xff] %v225
          %360 = vst [vmem:[%s181 + $0x470] sm:$0xff] %v225
          %361 = vst [vmem:[%s181 + $0x478] sm:$0xff] %v225
          %362 = vst [vmem:[%s181 + $0x480] sm:$0xff] %v225
          %363 = vst [vmem:[%s181 + $0x488] sm:$0xff] %v225
          %364 = vst [vmem:[%s181 + $0x490] sm:$0xff] %v225
          %365 = vst [vmem:[%s181 + $0x498] sm:$0xff] %v225
          %366 = vst [vmem:[%s181 + $0x4a0] sm:$0xff] %v225
          %367 = vst [vmem:[%s181 + $0x4a8] sm:$0xff] %v225
          %368 = vst [vmem:[%s181 + $0x4b0] sm:$0xff] %v225
          %369 = vst [vmem:[%s181 + $0x4b8] sm:$0xff] %v225
          %370 = vst [vmem:[%s181 + $0x4c0] sm:$0xff] %v225
          %371 = vst [vmem:[%s181 + $0x4c8] sm:$0xff] %v225
          %372 = vst [vmem:[%s181 + $0x4d0] sm:$0xff] %v225
          %373 = vst [vmem:[%s181 + $0x4d8] sm:$0xff] %v225
          %374 = vst [vmem:[%s181 + $0x4e0] sm:$0xff] %v225
          %375 = vst [vmem:[%s181 + $0x4e8] sm:$0xff] %v225
          %376 = vst [vmem:[%s181 + $0x4f0] sm:$0xff] %v225
          %377 = vst [vmem:[%s181 + $0x4f8] sm:$0xff] %v225
          %378 = vst [vmem:[%s181 + $0x500] sm:$0xff] %v225
          %379 = vst [vmem:[%s181 + $0x508] sm:$0xff] %v225
          %380 = vst [vmem:[%s181 + $0x510] sm:$0xff] %v225
          %381 = vst [vmem:[%s181 + $0x518] sm:$0xff] %v225
          %382 = vst [vmem:[%s181 + $0x520] sm:$0xff] %v225
          %383 = vst [vmem:[%s181 + $0x528] sm:$0xff] %v225
          %384 = vst [vmem:[%s181 + $0x530] sm:$0xff] %v225
          %385 = vst [vmem:[%s181 + $0x538] sm:$0xff] %v225
          %386 = vst [vmem:[%s181 + $0x540] sm:$0xff] %v225
          %387 = vst [vmem:[%s181 + $0x548] sm:$0xff] %v225
          %388 = vst [vmem:[%s181 + $0x550] sm:$0xff] %v225
          %389 = vst [vmem:[%s181 + $0x558] sm:$0xff] %v225
          %390 = vst [vmem:[%s181 + $0x560] sm:$0xff] %v225
          %391 = vst [vmem:[%s181 + $0x568] sm:$0xff] %v225
          %392 = vst [vmem:[%s181 + $0x570] sm:$0xff] %v225
          %393 = vst [vmem:[%s181 + $0x578] sm:$0xff] %v225
          %394 = vst [vmem:[%s181 + $0x580] sm:$0xff] %v225
          %395 = vst [vmem:[%s181 + $0x588] sm:$0xff] %v225
          %396 = vst [vmem:[%s181 + $0x590] sm:$0xff] %v225
          %397 = vst [vmem:[%s181 + $0x598] sm:$0xff] %v225
          %398 = vst [vmem:[%s181 + $0x5a0] sm:$0xff] %v225
          %399 = vst [vmem:[%s181 + $0x5a8] sm:$0xff] %v225
          %400 = vst [vmem:[%s181 + $0x5b0] sm:$0xff] %v225
          %401 = vst [vmem:[%s181 + $0x5b8] sm:$0xff] %v225
          %402 = vst [vmem:[%s181 + $0x5c0] sm:$0xff] %v225
          %403 = vst [vmem:[%s181 + $0x5c8] sm:$0xff] %v225
          %404 = vst [vmem:[%s181 + $0x5d0] sm:$0xff] %v225
          %405 = vst [vmem:[%s181 + $0x5d8] sm:$0xff] %v225
          %406 = vst [vmem:[%s181 + $0x5e0] sm:$0xff] %v225
          %407 = vst [vmem:[%s181 + $0x5e8] sm:$0xff] %v225
          %408 = vst [vmem:[%s181 + $0x5f0] sm:$0xff] %v225
          %409 = vst [vmem:[%s181 + $0x5f8] sm:$0xff] %v225
          %410 = vst [vmem:[%s181 + $0x600] sm:$0xff] %v225
          %411 = vst [vmem:[%s181 + $0x608] sm:$0xff] %v225
          %412 = vst [vmem:[%s181 + $0x610] sm:$0xff] %v225
          %413 = vst [vmem:[%s181 + $0x618] sm:$0xff] %v225
          %414 = vst [vmem:[%s181 + $0x620] sm:$0xff] %v225
          %415 = vst [vmem:[%s181 + $0x628] sm:$0xff] %v225
          %416 = vst [vmem:[%s181 + $0x630] sm:$0xff] %v225
          %417 = vst [vmem:[%s181 + $0x638] sm:$0xff] %v225
          %418 = vst [vmem:[%s181 + $0x640] sm:$0xff] %v225
          %419 = vst [vmem:[%s181 + $0x648] sm:$0xff] %v225
          %420 = vst [vmem:[%s181 + $0x650] sm:$0xff] %v225
          %421 = vst [vmem:[%s181 + $0x658] sm:$0xff] %v225
          %422 = vst [vmem:[%s181 + $0x660] sm:$0xff] %v225
          %423 = vst [vmem:[%s181 + $0x668] sm:$0xff] %v225
          %424 = vst [vmem:[%s181 + $0x670] sm:$0xff] %v225
          %425 = vst [vmem:[%s181 + $0x678] sm:$0xff] %v225
          %426 = vst [vmem:[%s181 + $0x680] sm:$0xff] %v225
          %427 = vst [vmem:[%s181 + $0x688] sm:$0xff] %v225
          %428 = vst [vmem:[%s181 + $0x690] sm:$0xff] %v225
          %429 = vst [vmem:[%s181 + $0x698] sm:$0xff] %v225
          %430 = vst [vmem:[%s181 + $0x6a0] sm:$0xff] %v225
          %431 = vst [vmem:[%s181 + $0x6a8] sm:$0xff] %v225
          %432 = vst [vmem:[%s181 + $0x6b0] sm:$0xff] %v225
          %433 = vst [vmem:[%s181 + $0x6b8] sm:$0xff] %v225
          %434 = vst [vmem:[%s181 + $0x6c0] sm:$0xff] %v225
          %435 = vst [vmem:[%s181 + $0x6c8] sm:$0xff] %v225
          %436 = vst [vmem:[%s181 + $0x6d0] sm:$0xff] %v225
          %437 = vst [vmem:[%s181 + $0x6d8] sm:$0xff] %v225
          %438 = vst [vmem:[%s181 + $0x6e0] sm:$0xff] %v225
          %439 = vst [vmem:[%s181 + $0x6e8] sm:$0xff] %v225
          %440 = vst [vmem:[%s181 + $0x6f0] sm:$0xff] %v225
          %441 = vst [vmem:[%s181 + $0x6f8] sm:$0xff] %v225
          %442 = vst [vmem:[%s181 + $0x700] sm:$0xff] %v225
          %443 = vst [vmem:[%s181 + $0x708] sm:$0xff] %v225
          %444 = vst [vmem:[%s181 + $0x710] sm:$0xff] %v225
          %445 = vst [vmem:[%s181 + $0x718] sm:$0xff] %v225
          %446 = vst [vmem:[%s181 + $0x720] sm:$0xff] %v225
          %447 = vst [vmem:[%s181 + $0x728] sm:$0xff] %v225
          %448 = vst [vmem:[%s181 + $0x730] sm:$0xff] %v225
          %449 = vst [vmem:[%s181 + $0x738] sm:$0xff] %v225
          %450 = vst [vmem:[%s181 + $0x740] sm:$0xff] %v225
          %451 = vst [vmem:[%s181 + $0x748] sm:$0xff] %v225
          %452 = vst [vmem:[%s181 + $0x750] sm:$0xff] %v225
          %453 = vst [vmem:[%s181 + $0x758] sm:$0xff] %v225
          %454 = vst [vmem:[%s181 + $0x760] sm:$0xff] %v225
          %455 = vst [vmem:[%s181 + $0x768] sm:$0xff] %v225
          %456 = vst [vmem:[%s181 + $0x770] sm:$0xff] %v225
          %457 = vst [vmem:[%s181 + $0x778] sm:$0xff] %v225
          %458 = vst [vmem:[%s181 + $0x780] sm:$0xff] %v225
          %459 = vst [vmem:[%s181 + $0x788] sm:$0xff] %v225
          %460 = vst [vmem:[%s181 + $0x790] sm:$0xff] %v225
          %461 = vst [vmem:[%s181 + $0x798] sm:$0xff] %v225
          %462 = vst [vmem:[%s181 + $0x7a0] sm:$0xff] %v225
          %463 = vst [vmem:[%s181 + $0x7a8] sm:$0xff] %v225
          %464 = vst [vmem:[%s181 + $0x7b0] sm:$0xff] %v225
          %465 = vst [vmem:[%s181 + $0x7b8] sm:$0xff] %v225
          %466 = vst [vmem:[%s181 + $0x7c0] sm:$0xff] %v225
          %467 = vst [vmem:[%s181 + $0x7c8] sm:$0xff] %v225
          %468 = vst [vmem:[%s181 + $0x7d0] sm:$0xff] %v225
          %469 = vst [vmem:[%s181 + $0x7d8] sm:$0xff] %v225
          %470 = vst [vmem:[%s181 + $0x7e0] sm:$0xff] %v225
          %471 = vst [vmem:[%s181 + $0x7e8] sm:$0xff] %v225
          %472 = vst [vmem:[%s181 + $0x7f0] sm:$0xff] %v225
          %473 = vst [vmem:[%s181 + $0x7f8] sm:$0xff] %v225
          %474 = vst [vmem:[%s181 + $0x800] sm:$0xff] %v225
          %475 = vst [vmem:[%s181 + $0x808] sm:$0xff] %v225
          %476 = vst [vmem:[%s181 + $0x810] sm:$0xff] %v225
          %477 = vst [vmem:[%s181 + $0x818] sm:$0xff] %v225
          %478 = vst [vmem:[%s181 + $0x820] sm:$0xff] %v225
          %479 = vst [vmem:[%s181 + $0x828] sm:$0xff] %v225
          %480 = vst [vmem:[%s181 + $0x830] sm:$0xff] %v225
          %481 = vst [vmem:[%s181 + $0x838] sm:$0xff] %v225
          %482 = vst [vmem:[%s181 + $0x840] sm:$0xff] %v225
          %483 = vst [vmem:[%s181 + $0x848] sm:$0xff] %v225
          %484 = vst [vmem:[%s181 + $0x850] sm:$0xff] %v225
          %485 = vst [vmem:[%s181 + $0x858] sm:$0xff] %v225
          %486 = vst [vmem:[%s181 + $0x860] sm:$0xff] %v225
          %487 = vst [vmem:[%s181 + $0x868] sm:$0xff] %v225
          %488 = vst [vmem:[%s181 + $0x870] sm:$0xff] %v225
          %489 = vst [vmem:[%s181 + $0x878] sm:$0xff] %v225
          %490 = vst [vmem:[%s181 + $0x880] sm:$0xff] %v225
          %491 = vst [vmem:[%s181 + $0x888] sm:$0xff] %v225
          %492 = vst [vmem:[%s181 + $0x890] sm:$0xff] %v225
          %493 = vst [vmem:[%s181 + $0x898] sm:$0xff] %v225
          %494 = vst [vmem:[%s181 + $0x8a0] sm:$0xff] %v225
          %495 = vst [vmem:[%s181 + $0x8a8] sm:$0xff] %v225
          %496 = vst [vmem:[%s181 + $0x8b0] sm:$0xff] %v225
          %497 = vst [vmem:[%s181 + $0x8b8] sm:$0xff] %v225
          %498 = vst [vmem:[%s181 + $0x8c0] sm:$0xff] %v225
          %499 = vst [vmem:[%s181 + $0x8c8] sm:$0xff] %v225
          %500 = vst [vmem:[%s181 + $0x8d0] sm:$0xff] %v225
          %501 = vst [vmem:[%s181 + $0x8d8] sm:$0xff] %v225
          %502 = vst [vmem:[%s181 + $0x8e0] sm:$0xff] %v225
          %503 = vst [vmem:[%s181 + $0x8e8] sm:$0xff] %v225
          %504 = vst [vmem:[%s181 + $0x8f0] sm:$0xff] %v225
          %505 = vst [vmem:[%s181 + $0x8f8] sm:$0xff] %v225
          %506 = vst [vmem:[%s181 + $0x900] sm:$0xff] %v225
          %507 = vst [vmem:[%s181 + $0x908] sm:$0xff] %v225
          %508 = vst [vmem:[%s181 + $0x910] sm:$0xff] %v225
          %509 = vst [vmem:[%s181 + $0x918] sm:$0xff] %v225
          %510 = vst [vmem:[%s181 + $0x920] sm:$0xff] %v225
          %511 = vst [vmem:[%s181 + $0x928] sm:$0xff] %v225
          %512 = vst [vmem:[%s181 + $0x930] sm:$0xff] %v225
          %513 = vst [vmem:[%s181 + $0x938] sm:$0xff] %v225
          %514 = vst [vmem:[%s181 + $0x940] sm:$0xff] %v225
          %515 = vst [vmem:[%s181 + $0x948] sm:$0xff] %v225
          %516 = vst [vmem:[%s181 + $0x950] sm:$0xff] %v225
          %517 = vst [vmem:[%s181 + $0x958] sm:$0xff] %v225
          %518 = vst [vmem:[%s181 + $0x960] sm:$0xff] %v225
          %519 = vst [vmem:[%s181 + $0x968] sm:$0xff] %v225
          %520 = vst [vmem:[%s181 + $0x970] sm:$0xff] %v225
          %521 = vst [vmem:[%s181 + $0x978] sm:$0xff] %v225
          %522 = vst [vmem:[%s181 + $0x980] sm:$0xff] %v225
          %523 = vst [vmem:[%s181 + $0x988] sm:$0xff] %v225
          %524 = vst [vmem:[%s181 + $0x990] sm:$0xff] %v225
          %525 = vst [vmem:[%s181 + $0x998] sm:$0xff] %v225
          %526 = vst [vmem:[%s181 + $0x9a0] sm:$0xff] %v225
          %527 = vst [vmem:[%s181 + $0x9a8] sm:$0xff] %v225
          %528 = vst [vmem:[%s181 + $0x9b0] sm:$0xff] %v225
          %529 = vst [vmem:[%s181 + $0x9b8] sm:$0xff] %v225
          %530 = vst [vmem:[%s181 + $0x9c0] sm:$0xff] %v225
          %531 = vst [vmem:[%s181 + $0x9c8] sm:$0xff] %v225
          %532 = vst [vmem:[%s181 + $0x9d0] sm:$0xff] %v225
          %533 = vst [vmem:[%s181 + $0x9d8] sm:$0xff] %v225
          %534 = vst [vmem:[%s181 + $0x9e0] sm:$0xff] %v225
          %535 = vst [vmem:[%s181 + $0x9e8] sm:$0xff] %v225
          %536 = vst [vmem:[%s181 + $0x9f0] sm:$0xff] %v225
          %537 = vst [vmem:[%s181 + $0x9f8] sm:$0xff] %v225
          %538 = vst [vmem:[%s181 + $0xa00] sm:$0xff] %v225
          %539 = vst [vmem:[%s181 + $0xa08] sm:$0xff] %v225
          %540 = vst [vmem:[%s181 + $0xa10] sm:$0xff] %v225
          %541 = vst [vmem:[%s181 + $0xa18] sm:$0xff] %v225
          %542 = vst [vmem:[%s181 + $0xa20] sm:$0xff] %v225
          %543 = vst [vmem:[%s181 + $0xa28] sm:$0xff] %v225
          %544 = vst [vmem:[%s181 + $0xa30] sm:$0xff] %v225
          %545 = vst [vmem:[%s181 + $0xa38] sm:$0xff] %v225
          %546 = vst [vmem:[%s181 + $0xa40] sm:$0xff] %v225
          %547 = vst [vmem:[%s181 + $0xa48] sm:$0xff] %v225
          %548 = vst [vmem:[%s181 + $0xa50] sm:$0xff] %v225
          %549 = vst [vmem:[%s181 + $0xa58] sm:$0xff] %v225
          %550 = vst [vmem:[%s181 + $0xa60] sm:$0xff] %v225
          %551 = vst [vmem:[%s181 + $0xa68] sm:$0xff] %v225
          %552 = vst [vmem:[%s181 + $0xa70] sm:$0xff] %v225
          %553 = vst [vmem:[%s181 + $0xa78] sm:$0xff] %v225
          %554 = vst [vmem:[%s181 + $0xa80] sm:$0xff] %v225
          %555 = vst [vmem:[%s181 + $0xa88] sm:$0xff] %v225
          %556 = vst [vmem:[%s181 + $0xa90] sm:$0xff] %v225
          %557 = vst [vmem:[%s181 + $0xa98] sm:$0xff] %v225
          %558 = vst [vmem:[%s181 + $0xaa0] sm:$0xff] %v225
          %559 = vst [vmem:[%s181 + $0xaa8] sm:$0xff] %v225
          %560 = vst [vmem:[%s181 + $0xab0] sm:$0xff] %v225
          %561 = vst [vmem:[%s181 + $0xab8] sm:$0xff] %v225
          %562 = vst [vmem:[%s181 + $0xac0] sm:$0xff] %v225
          %563 = vst [vmem:[%s181 + $0xac8] sm:$0xff] %v225
          %564 = vst [vmem:[%s181 + $0xad0] sm:$0xff] %v225
          %565 = vst [vmem:[%s181 + $0xad8] sm:$0xff] %v225
          %566 = vst [vmem:[%s181 + $0xae0] sm:$0xff] %v225
          %567 = vst [vmem:[%s181 + $0xae8] sm:$0xff] %v225
          %568 = vst [vmem:[%s181 + $0xaf0] sm:$0xff] %v225
          %569 = vst [vmem:[%s181 + $0xaf8] sm:$0xff] %v225
          %570 = vst [vmem:[%s181 + $0xb00] sm:$0xff] %v225
          %571 = vst [vmem:[%s181 + $0xb08] sm:$0xff] %v225
          %572 = vst [vmem:[%s181 + $0xb10] sm:$0xff] %v225
          %573 = vst [vmem:[%s181 + $0xb18] sm:$0xff] %v225
          %574 = vst [vmem:[%s181 + $0xb20] sm:$0xff] %v225
          %575 = vst [vmem:[%s181 + $0xb28] sm:$0xff] %v225
          %576 = vst [vmem:[%s181 + $0xb30] sm:$0xff] %v225
          %577 = vst [vmem:[%s181 + $0xb38] sm:$0xff] %v225
          %578 = vst [vmem:[%s181 + $0xb40] sm:$0xff] %v225
          %579 = vst [vmem:[%s181 + $0xb48] sm:$0xff] %v225
          %580 = vst [vmem:[%s181 + $0xb50] sm:$0xff] %v225
          %581 = vst [vmem:[%s181 + $0xb58] sm:$0xff] %v225
          %582 = vst [vmem:[%s181 + $0xb60] sm:$0xff] %v225
          %583 = vst [vmem:[%s181 + $0xb68] sm:$0xff] %v225
          %584 = vst [vmem:[%s181 + $0xb70] sm:$0xff] %v225
          %585 = vst [vmem:[%s181 + $0xb78] sm:$0xff] %v225
          %586 = vst [vmem:[%s181 + $0xb80] sm:$0xff] %v225
          %587 = vst [vmem:[%s181 + $0xb88] sm:$0xff] %v225
          %588 = vst [vmem:[%s181 + $0xb90] sm:$0xff] %v225
          %589 = vst [vmem:[%s181 + $0xb98] sm:$0xff] %v225
          %590 = vst [vmem:[%s181 + $0xba0] sm:$0xff] %v225
          %591 = vst [vmem:[%s181 + $0xba8] sm:$0xff] %v225
          %592 = vst [vmem:[%s181 + $0xbb0] sm:$0xff] %v225
          %593 = vst [vmem:[%s181 + $0xbb8] sm:$0xff] %v225
          %594 = vst [vmem:[%s181 + $0xbc0] sm:$0xff] %v225
          %595 = vst [vmem:[%s181 + $0xbc8] sm:$0xff] %v225
          %596 = vst [vmem:[%s181 + $0xbd0] sm:$0xff] %v225
          %597 = vst [vmem:[%s181 + $0xbd8] sm:$0xff] %v225
          %598 = vst [vmem:[%s181 + $0xbe0] sm:$0xff] %v225
          %599 = vst [vmem:[%s181 + $0xbe8] sm:$0xff] %v225
          %600 = vst [vmem:[%s181 + $0xbf0] sm:$0xff] %v225
          %601 = vst [vmem:[%s181 + $0xbf8] sm:$0xff] %v225
          %602 = vst [vmem:[%s181 + $0xc00] sm:$0xff] %v225
          %603 = vst [vmem:[%s181 + $0xc08] sm:$0xff] %v225
          %604 = vst [vmem:[%s181 + $0xc10] sm:$0xff] %v225
          %605 = vst [vmem:[%s181 + $0xc18] sm:$0xff] %v225
          %606 = vst [vmem:[%s181 + $0xc20] sm:$0xff] %v225
          %607 = vst [vmem:[%s181 + $0xc28] sm:$0xff] %v225
          %608 = vst [vmem:[%s181 + $0xc30] sm:$0xff] %v225
          %609 = vst [vmem:[%s181 + $0xc38] sm:$0xff] %v225
          %610 = vst [vmem:[%s181 + $0xc40] sm:$0xff] %v225
          %611 = vst [vmem:[%s181 + $0xc48] sm:$0xff] %v225
          %612 = vst [vmem:[%s181 + $0xc50] sm:$0xff] %v225
          %613 = vst [vmem:[%s181 + $0xc58] sm:$0xff] %v225
          %614 = vst [vmem:[%s181 + $0xc60] sm:$0xff] %v225
          %615 = vst [vmem:[%s181 + $0xc68] sm:$0xff] %v225
          %616 = vst [vmem:[%s181 + $0xc70] sm:$0xff] %v225
          %617 = vst [vmem:[%s181 + $0xc78] sm:$0xff] %v225
          %618 = vst [vmem:[%s181 + $0xc80] sm:$0xff] %v225
          %619 = vst [vmem:[%s181 + $0xc88] sm:$0xff] %v225
          %620 = vst [vmem:[%s181 + $0xc90] sm:$0xff] %v225
          %621 = vst [vmem:[%s181 + $0xc98] sm:$0xff] %v225
          %622 = vst [vmem:[%s181 + $0xca0] sm:$0xff] %v225
          %623 = vst [vmem:[%s181 + $0xca8] sm:$0xff] %v225
          %624 = vst [vmem:[%s181 + $0xcb0] sm:$0xff] %v225
          %625 = vst [vmem:[%s181 + $0xcb8] sm:$0xff] %v225
          %626 = vst [vmem:[%s181 + $0xcc0] sm:$0xff] %v225
          %627 = vst [vmem:[%s181 + $0xcc8] sm:$0xff] %v225
          %628 = vst [vmem:[%s181 + $0xcd0] sm:$0xff] %v225
          %629 = vst [vmem:[%s181 + $0xcd8] sm:$0xff] %v225
          %630 = vst [vmem:[%s181 + $0xce0] sm:$0xff] %v225
          %631 = vst [vmem:[%s181 + $0xce8] sm:$0xff] %v225
          %632 = vst [vmem:[%s181 + $0xcf0] sm:$0xff] %v225
          %633 = vst [vmem:[%s181 + $0xcf8] sm:$0xff] %v225
          %634 = vst [vmem:[%s181 + $0xd00] sm:$0xff] %v225
          %635 = vst [vmem:[%s181 + $0xd08] sm:$0xff] %v225
          %636 = vst [vmem:[%s181 + $0xd10] sm:$0xff] %v225
          %637 = vst [vmem:[%s181 + $0xd18] sm:$0xff] %v225
          %638 = vst [vmem:[%s181 + $0xd20] sm:$0xff] %v225
          %639 = vst [vmem:[%s181 + $0xd28] sm:$0xff] %v225
          %640 = vst [vmem:[%s181 + $0xd30] sm:$0xff] %v225
          %641 = vst [vmem:[%s181 + $0xd38] sm:$0xff] %v225
          %642 = vst [vmem:[%s181 + $0xd40] sm:$0xff] %v225
          %643 = vst [vmem:[%s181 + $0xd48] sm:$0xff] %v225
          %644 = vst [vmem:[%s181 + $0xd50] sm:$0xff] %v225
          %645 = vst [vmem:[%s181 + $0xd58] sm:$0xff] %v225
          %646 = vst [vmem:[%s181 + $0xd60] sm:$0xff] %v225
          %647 = vst [vmem:[%s181 + $0xd68] sm:$0xff] %v225
          %648 = vst [vmem:[%s181 + $0xd70] sm:$0xff] %v225
          %649 = vst [vmem:[%s181 + $0xd78] sm:$0xff] %v225
          %650 = vst [vmem:[%s181 + $0xd80] sm:$0xff] %v225
          %651 = vst [vmem:[%s181 + $0xd88] sm:$0xff] %v225
          %652 = vst [vmem:[%s181 + $0xd90] sm:$0xff] %v225
          %653 = vst [vmem:[%s181 + $0xd98] sm:$0xff] %v225
          %654 = vst [vmem:[%s181 + $0xda0] sm:$0xff] %v225
          %655 = vst [vmem:[%s181 + $0xda8] sm:$0xff] %v225
          %656 = vst [vmem:[%s181 + $0xdb0] sm:$0xff] %v225
          %657 = vst [vmem:[%s181 + $0xdb8] sm:$0xff] %v225
          %658 = vst [vmem:[%s181 + $0xdc0] sm:$0xff] %v225
          %659 = vst [vmem:[%s181 + $0xdc8] sm:$0xff] %v225
          %660 = vst [vmem:[%s181 + $0xdd0] sm:$0xff] %v225
          %661 = vst [vmem:[%s181 + $0xdd8] sm:$0xff] %v225
          %662 = vst [vmem:[%s181 + $0xde0] sm:$0xff] %v225
          %663 = vst [vmem:[%s181 + $0xde8] sm:$0xff] %v225
          %664 = vst [vmem:[%s181 + $0xdf0] sm:$0xff] %v225
          %665 = vst [vmem:[%s181 + $0xdf8] sm:$0xff] %v225
          %666 = vst [vmem:[%s181 + $0xe00] sm:$0xff] %v225
          %667 = vst [vmem:[%s181 + $0xe08] sm:$0xff] %v225
          %668 = vst [vmem:[%s181 + $0xe10] sm:$0xff] %v225
          %669 = vst [vmem:[%s181 + $0xe18] sm:$0xff] %v225
          %670 = vst [vmem:[%s181 + $0xe20] sm:$0xff] %v225
          %671 = vst [vmem:[%s181 + $0xe28] sm:$0xff] %v225
          %672 = vst [vmem:[%s181 + $0xe30] sm:$0xff] %v225
          %673 = vst [vmem:[%s181 + $0xe38] sm:$0xff] %v225
          %674 = vst [vmem:[%s181 + $0xe40] sm:$0xff] %v225
          %675 = vst [vmem:[%s181 + $0xe48] sm:$0xff] %v225
          %676 = vst [vmem:[%s181 + $0xe50] sm:$0xff] %v225
          %677 = vst [vmem:[%s181 + $0xe58] sm:$0xff] %v225
          %678 = vst [vmem:[%s181 + $0xe60] sm:$0xff] %v225
          %679 = vst [vmem:[%s181 + $0xe68] sm:$0xff] %v225
          %680 = vst [vmem:[%s181 + $0xe70] sm:$0xff] %v225
          %681 = vst [vmem:[%s181 + $0xe78] sm:$0xff] %v225
          %682 = vst [vmem:[%s181 + $0xe80] sm:$0xff] %v225
          %683 = vst [vmem:[%s181 + $0xe88] sm:$0xff] %v225
          %684 = vst [vmem:[%s181 + $0xe90] sm:$0xff] %v225
          %685 = vst [vmem:[%s181 + $0xe98] sm:$0xff] %v225
          %686 = vst [vmem:[%s181 + $0xea0] sm:$0xff] %v225
          %687 = vst [vmem:[%s181 + $0xea8] sm:$0xff] %v225
          %688 = vst [vmem:[%s181 + $0xeb0] sm:$0xff] %v225
          %689 = vst [vmem:[%s181 + $0xeb8] sm:$0xff] %v225
          %690 = vst [vmem:[%s181 + $0xec0] sm:$0xff] %v225
          %691 = vst [vmem:[%s181 + $0xec8] sm:$0xff] %v225
          %692 = vst [vmem:[%s181 + $0xed0] sm:$0xff] %v225
          %693 = vst [vmem:[%s181 + $0xed8] sm:$0xff] %v225
          %694 = vst [vmem:[%s181 + $0xee0] sm:$0xff] %v225
          %695 = vst [vmem:[%s181 + $0xee8] sm:$0xff] %v225
          %696 = vst [vmem:[%s181 + $0xef0] sm:$0xff] %v225
          %697 = vst [vmem:[%s181 + $0xef8] sm:$0xff] %v225
          %698 = vst [vmem:[%s181 + $0xf00] sm:$0xff] %v225
          %699 = vst [vmem:[%s181 + $0xf08] sm:$0xff] %v225
          %700 = vst [vmem:[%s181 + $0xf10] sm:$0xff] %v225
          %701 = vst [vmem:[%s181 + $0xf18] sm:$0xff] %v225
          %702 = vst [vmem:[%s181 + $0xf20] sm:$0xff] %v225
          %703 = vst [vmem:[%s181 + $0xf28] sm:$0xff] %v225
          %704 = vst [vmem:[%s181 + $0xf30] sm:$0xff] %v225
          %705 = vst [vmem:[%s181 + $0xf38] sm:$0xff] %v225
          %706 = vst [vmem:[%s181 + $0xf40] sm:$0xff] %v225
          %707 = vst [vmem:[%s181 + $0xf48] sm:$0xff] %v225
          %708 = vst [vmem:[%s181 + $0xf50] sm:$0xff] %v225
          %709 = vst [vmem:[%s181 + $0xf58] sm:$0xff] %v225
          %710 = vst [vmem:[%s181 + $0xf60] sm:$0xff] %v225
          %711 = vst [vmem:[%s181 + $0xf68] sm:$0xff] %v225
          %712 = vst [vmem:[%s181 + $0xf70] sm:$0xff] %v225
          %713 = vst [vmem:[%s181 + $0xf78] sm:$0xff] %v225
          %714 = vst [vmem:[%s181 + $0xf80] sm:$0xff] %v225
          %715 = vst [vmem:[%s181 + $0xf88] sm:$0xff] %v225
          %716 = vst [vmem:[%s181 + $0xf90] sm:$0xff] %v225
          %717 = vst [vmem:[%s181 + $0xf98] sm:$0xff] %v225
          %718 = vst [vmem:[%s181 + $0xfa0] sm:$0xff] %v225
          %719 = vst [vmem:[%s181 + $0xfa8] sm:$0xff] %v225
          %720 = vst [vmem:[%s181 + $0xfb0] sm:$0xff] %v225
          %721 = vst [vmem:[%s181 + $0xfb8] sm:$0xff] %v225
          %722 = vst [vmem:[%s181 + $0xfc0] sm:$0xff] %v225
          %723 = vst [vmem:[%s181 + $0xfc8] sm:$0xff] %v225
          %724 = vst [vmem:[%s181 + $0xfd0] sm:$0xff] %v225
          %725 = vst [vmem:[%s181 + $0xfd8] sm:$0xff] %v225
          %726 = vst [vmem:[%s181 + $0xfe0] sm:$0xff] %v225
          %727 = vst [vmem:[%s181 + $0xfe8] sm:$0xff] %v225
          %728 = vst [vmem:[%s181 + $0xff0] sm:$0xff] %v225
          %729 = vst [vmem:[%s181 + $0xff8] sm:$0xff] %v225
        $region36: #{generalized_rcnn_forward.9} parent=27 // pred_fallthru
          _
        %p730 = scmp.gt.s32.totalorder %s19, 0
        // Predicated region
        $region37: #{generalized_rcnn_forward.9} parent=27 // pred_check
          %p731 = pneg %p730
        $region38: #{generalized_rcnn_forward.9} parent=27 // pred_check_branch
          %733 = sbr.rel (%p731) target = $region40
        $region39: #{generalized_rcnn_forward.9} parent=27 // pred_region
          %v734 = vstv %s186
          %735 = vst [vmem:[%s181] sm:$0xff] %v734
          %736 = vst [vmem:[%s181 + $0x8] sm:$0xff] %v734
          %737 = vst [vmem:[%s181 + $0x10] sm:$0xff] %v734
          %738 = vst [vmem:[%s181 + $0x18] sm:$0xff] %v734
          %739 = vst [vmem:[%s181 + $0x20] sm:$0xff] %v734
          %740 = vst [vmem:[%s181 + $0x28] sm:$0xff] %v734
          %741 = vst [vmem:[%s181 + $0x30] sm:$0xff] %v734
          %742 = vst [vmem:[%s181 + $0x38] sm:$0xff] %v734
          %743 = vst [vmem:[%s181 + $0x40] sm:$0xff] %v734
          %744 = vst [vmem:[%s181 + $0x48] sm:$0xff] %v734
          %745 = vst [vmem:[%s181 + $0x50] sm:$0xff] %v734
          %746 = vst [vmem:[%s181 + $0x58] sm:$0xff] %v734
          %747 = vst [vmem:[%s181 + $0x60] sm:$0xff] %v734
          %748 = vst [vmem:[%s181 + $0x68] sm:$0xff] %v734
          %749 = vst [vmem:[%s181 + $0x70] sm:$0xff] %v734
          %750 = vst [vmem:[%s181 + $0x78] sm:$0xff] %v734
          %751 = vst [vmem:[%s181 + $0x80] sm:$0xff] %v734
          %752 = vst [vmem:[%s181 + $0x88] sm:$0xff] %v734
          %753 = vst [vmem:[%s181 + $0x90] sm:$0xff] %v734
          %754 = vst [vmem:[%s181 + $0x98] sm:$0xff] %v734
          %755 = vst [vmem:[%s181 + $0xa0] sm:$0xff] %v734
          %756 = vst [vmem:[%s181 + $0xa8] sm:$0xff] %v734
          %757 = vst [vmem:[%s181 + $0xb0] sm:$0xff] %v734
          %758 = vst [vmem:[%s181 + $0xb8] sm:$0xff] %v734
          %759 = vst [vmem:[%s181 + $0xc0] sm:$0xff] %v734
          %760 = vst [vmem:[%s181 + $0xc8] sm:$0xff] %v734
          %761 = vst [vmem:[%s181 + $0xd0] sm:$0xff] %v734
          %762 = vst [vmem:[%s181 + $0xd8] sm:$0xff] %v734
          %763 = vst [vmem:[%s181 + $0xe0] sm:$0xff] %v734
          %764 = vst [vmem:[%s181 + $0xe8] sm:$0xff] %v734
          %765 = vst [vmem:[%s181 + $0xf0] sm:$0xff] %v734
          %766 = vst [vmem:[%s181 + $0xf8] sm:$0xff] %v734
          %767 = vst [vmem:[%s181 + $0x100] sm:$0xff] %v734
          %768 = vst [vmem:[%s181 + $0x108] sm:$0xff] %v734
          %769 = vst [vmem:[%s181 + $0x110] sm:$0xff] %v734
          %770 = vst [vmem:[%s181 + $0x118] sm:$0xff] %v734
          %771 = vst [vmem:[%s181 + $0x120] sm:$0xff] %v734
          %772 = vst [vmem:[%s181 + $0x128] sm:$0xff] %v734
          %773 = vst [vmem:[%s181 + $0x130] sm:$0xff] %v734
          %774 = vst [vmem:[%s181 + $0x138] sm:$0xff] %v734
          %775 = vst [vmem:[%s181 + $0x140] sm:$0xff] %v734
          %776 = vst [vmem:[%s181 + $0x148] sm:$0xff] %v734
          %777 = vst [vmem:[%s181 + $0x150] sm:$0xff] %v734
          %778 = vst [vmem:[%s181 + $0x158] sm:$0xff] %v734
          %779 = vst [vmem:[%s181 + $0x160] sm:$0xff] %v734
          %780 = vst [vmem:[%s181 + $0x168] sm:$0xff] %v734
          %781 = vst [vmem:[%s181 + $0x170] sm:$0xff] %v734
          %782 = vst [vmem:[%s181 + $0x178] sm:$0xff] %v734
          %783 = vst [vmem:[%s181 + $0x180] sm:$0xff] %v734
          %784 = vst [vmem:[%s181 + $0x188] sm:$0xff] %v734
          %785 = vst [vmem:[%s181 + $0x190] sm:$0xff] %v734
          %786 = vst [vmem:[%s181 + $0x198] sm:$0xff] %v734
          %787 = vst [vmem:[%s181 + $0x1a0] sm:$0xff] %v734
          %788 = vst [vmem:[%s181 + $0x1a8] sm:$0xff] %v734
          %789 = vst [vmem:[%s181 + $0x1b0] sm:$0xff] %v734
          %790 = vst [vmem:[%s181 + $0x1b8] sm:$0xff] %v734
          %791 = vst [vmem:[%s181 + $0x1c0] sm:$0xff] %v734
          %792 = vst [vmem:[%s181 + $0x1c8] sm:$0xff] %v734
          %793 = vst [vmem:[%s181 + $0x1d0] sm:$0xff] %v734
          %794 = vst [vmem:[%s181 + $0x1d8] sm:$0xff] %v734
          %795 = vst [vmem:[%s181 + $0x1e0] sm:$0xff] %v734
          %796 = vst [vmem:[%s181 + $0x1e8] sm:$0xff] %v734
          %797 = vst [vmem:[%s181 + $0x1f0] sm:$0xff] %v734
          %798 = vst [vmem:[%s181 + $0x1f8] sm:$0xff] %v734
          %799 = vst [vmem:[%s181 + $0x200] sm:$0xff] %v734
          %800 = vst [vmem:[%s181 + $0x208] sm:$0xff] %v734
          %801 = vst [vmem:[%s181 + $0x210] sm:$0xff] %v734
          %802 = vst [vmem:[%s181 + $0x218] sm:$0xff] %v734
          %803 = vst [vmem:[%s181 + $0x220] sm:$0xff] %v734
          %804 = vst [vmem:[%s181 + $0x228] sm:$0xff] %v734
          %805 = vst [vmem:[%s181 + $0x230] sm:$0xff] %v734
          %806 = vst [vmem:[%s181 + $0x238] sm:$0xff] %v734
          %807 = vst [vmem:[%s181 + $0x240] sm:$0xff] %v734
          %808 = vst [vmem:[%s181 + $0x248] sm:$0xff] %v734
          %809 = vst [vmem:[%s181 + $0x250] sm:$0xff] %v734
          %810 = vst [vmem:[%s181 + $0x258] sm:$0xff] %v734
          %811 = vst [vmem:[%s181 + $0x260] sm:$0xff] %v734
          %812 = vst [vmem:[%s181 + $0x268] sm:$0xff] %v734
          %813 = vst [vmem:[%s181 + $0x270] sm:$0xff] %v734
          %814 = vst [vmem:[%s181 + $0x278] sm:$0xff] %v734
          %815 = vst [vmem:[%s181 + $0x280] sm:$0xff] %v734
          %816 = vst [vmem:[%s181 + $0x288] sm:$0xff] %v734
          %817 = vst [vmem:[%s181 + $0x290] sm:$0xff] %v734
          %818 = vst [vmem:[%s181 + $0x298] sm:$0xff] %v734
          %819 = vst [vmem:[%s181 + $0x2a0] sm:$0xff] %v734
          %820 = vst [vmem:[%s181 + $0x2a8] sm:$0xff] %v734
          %821 = vst [vmem:[%s181 + $0x2b0] sm:$0xff] %v734
          %822 = vst [vmem:[%s181 + $0x2b8] sm:$0xff] %v734
          %823 = vst [vmem:[%s181 + $0x2c0] sm:$0xff] %v734
          %824 = vst [vmem:[%s181 + $0x2c8] sm:$0xff] %v734
          %825 = vst [vmem:[%s181 + $0x2d0] sm:$0xff] %v734
          %826 = vst [vmem:[%s181 + $0x2d8] sm:$0xff] %v734
          %827 = vst [vmem:[%s181 + $0x2e0] sm:$0xff] %v734
          %828 = vst [vmem:[%s181 + $0x2e8] sm:$0xff] %v734
          %829 = vst [vmem:[%s181 + $0x2f0] sm:$0xff] %v734
          %830 = vst [vmem:[%s181 + $0x2f8] sm:$0xff] %v734
          %831 = vst [vmem:[%s181 + $0x300] sm:$0xff] %v734
          %832 = vst [vmem:[%s181 + $0x308] sm:$0xff] %v734
          %833 = vst [vmem:[%s181 + $0x310] sm:$0xff] %v734
          %834 = vst [vmem:[%s181 + $0x318] sm:$0xff] %v734
          %835 = vst [vmem:[%s181 + $0x320] sm:$0xff] %v734
          %836 = vst [vmem:[%s181 + $0x328] sm:$0xff] %v734
          %837 = vst [vmem:[%s181 + $0x330] sm:$0xff] %v734
          %838 = vst [vmem:[%s181 + $0x338] sm:$0xff] %v734
          %839 = vst [vmem:[%s181 + $0x340] sm:$0xff] %v734
          %840 = vst [vmem:[%s181 + $0x348] sm:$0xff] %v734
          %841 = vst [vmem:[%s181 + $0x350] sm:$0xff] %v734
          %842 = vst [vmem:[%s181 + $0x358] sm:$0xff] %v734
          %843 = vst [vmem:[%s181 + $0x360] sm:$0xff] %v734
          %844 = vst [vmem:[%s181 + $0x368] sm:$0xff] %v734
          %845 = vst [vmem:[%s181 + $0x370] sm:$0xff] %v734
          %846 = vst [vmem:[%s181 + $0x378] sm:$0xff] %v734
          %847 = vst [vmem:[%s181 + $0x380] sm:$0xff] %v734
          %848 = vst [vmem:[%s181 + $0x388] sm:$0xff] %v734
          %849 = vst [vmem:[%s181 + $0x390] sm:$0xff] %v734
          %850 = vst [vmem:[%s181 + $0x398] sm:$0xff] %v734
          %851 = vst [vmem:[%s181 + $0x3a0] sm:$0xff] %v734
          %852 = vst [vmem:[%s181 + $0x3a8] sm:$0xff] %v734
          %853 = vst [vmem:[%s181 + $0x3b0] sm:$0xff] %v734
          %854 = vst [vmem:[%s181 + $0x3b8] sm:$0xff] %v734
          %855 = vst [vmem:[%s181 + $0x3c0] sm:$0xff] %v734
          %856 = vst [vmem:[%s181 + $0x3c8] sm:$0xff] %v734
          %857 = vst [vmem:[%s181 + $0x3d0] sm:$0xff] %v734
          %858 = vst [vmem:[%s181 + $0x3d8] sm:$0xff] %v734
          %859 = vst [vmem:[%s181 + $0x3e0] sm:$0xff] %v734
          %860 = vst [vmem:[%s181 + $0x3e8] sm:$0xff] %v734
          %861 = vst [vmem:[%s181 + $0x3f0] sm:$0xff] %v734
          %862 = vst [vmem:[%s181 + $0x3f8] sm:$0xff] %v734
          %863 = vst [vmem:[%s181 + $0x400] sm:$0xff] %v734
          %864 = vst [vmem:[%s181 + $0x408] sm:$0xff] %v734
          %865 = vst [vmem:[%s181 + $0x410] sm:$0xff] %v734
          %866 = vst [vmem:[%s181 + $0x418] sm:$0xff] %v734
          %867 = vst [vmem:[%s181 + $0x420] sm:$0xff] %v734
          %868 = vst [vmem:[%s181 + $0x428] sm:$0xff] %v734
          %869 = vst [vmem:[%s181 + $0x430] sm:$0xff] %v734
          %870 = vst [vmem:[%s181 + $0x438] sm:$0xff] %v734
          %871 = vst [vmem:[%s181 + $0x440] sm:$0xff] %v734
          %872 = vst [vmem:[%s181 + $0x448] sm:$0xff] %v734
          %873 = vst [vmem:[%s181 + $0x450] sm:$0xff] %v734
          %874 = vst [vmem:[%s181 + $0x458] sm:$0xff] %v734
          %875 = vst [vmem:[%s181 + $0x460] sm:$0xff] %v734
          %876 = vst [vmem:[%s181 + $0x468] sm:$0xff] %v734
          %877 = vst [vmem:[%s181 + $0x470] sm:$0xff] %v734
          %878 = vst [vmem:[%s181 + $0x478] sm:$0xff] %v734
          %879 = vst [vmem:[%s181 + $0x480] sm:$0xff] %v734
          %880 = vst [vmem:[%s181 + $0x488] sm:$0xff] %v734
          %881 = vst [vmem:[%s181 + $0x490] sm:$0xff] %v734
          %882 = vst [vmem:[%s181 + $0x498] sm:$0xff] %v734
          %883 = vst [vmem:[%s181 + $0x4a0] sm:$0xff] %v734
          %884 = vst [vmem:[%s181 + $0x4a8] sm:$0xff] %v734
          %885 = vst [vmem:[%s181 + $0x4b0] sm:$0xff] %v734
          %886 = vst [vmem:[%s181 + $0x4b8] sm:$0xff] %v734
          %887 = vst [vmem:[%s181 + $0x4c0] sm:$0xff] %v734
          %888 = vst [vmem:[%s181 + $0x4c8] sm:$0xff] %v734
          %889 = vst [vmem:[%s181 + $0x4d0] sm:$0xff] %v734
          %890 = vst [vmem:[%s181 + $0x4d8] sm:$0xff] %v734
          %891 = vst [vmem:[%s181 + $0x4e0] sm:$0xff] %v734
          %892 = vst [vmem:[%s181 + $0x4e8] sm:$0xff] %v734
          %893 = vst [vmem:[%s181 + $0x4f0] sm:$0xff] %v734
          %894 = vst [vmem:[%s181 + $0x4f8] sm:$0xff] %v734
          %895 = vst [vmem:[%s181 + $0x500] sm:$0xff] %v734
          %896 = vst [vmem:[%s181 + $0x508] sm:$0xff] %v734
          %897 = vst [vmem:[%s181 + $0x510] sm:$0xff] %v734
          %898 = vst [vmem:[%s181 + $0x518] sm:$0xff] %v734
          %899 = vst [vmem:[%s181 + $0x520] sm:$0xff] %v734
          %900 = vst [vmem:[%s181 + $0x528] sm:$0xff] %v734
          %901 = vst [vmem:[%s181 + $0x530] sm:$0xff] %v734
          %902 = vst [vmem:[%s181 + $0x538] sm:$0xff] %v734
          %903 = vst [vmem:[%s181 + $0x540] sm:$0xff] %v734
          %904 = vst [vmem:[%s181 + $0x548] sm:$0xff] %v734
          %905 = vst [vmem:[%s181 + $0x550] sm:$0xff] %v734
          %906 = vst [vmem:[%s181 + $0x558] sm:$0xff] %v734
          %907 = vst [vmem:[%s181 + $0x560] sm:$0xff] %v734
          %908 = vst [vmem:[%s181 + $0x568] sm:$0xff] %v734
          %909 = vst [vmem:[%s181 + $0x570] sm:$0xff] %v734
          %910 = vst [vmem:[%s181 + $0x578] sm:$0xff] %v734
          %911 = vst [vmem:[%s181 + $0x580] sm:$0xff] %v734
          %912 = vst [vmem:[%s181 + $0x588] sm:$0xff] %v734
          %913 = vst [vmem:[%s181 + $0x590] sm:$0xff] %v734
          %914 = vst [vmem:[%s181 + $0x598] sm:$0xff] %v734
          %915 = vst [vmem:[%s181 + $0x5a0] sm:$0xff] %v734
          %916 = vst [vmem:[%s181 + $0x5a8] sm:$0xff] %v734
          %917 = vst [vmem:[%s181 + $0x5b0] sm:$0xff] %v734
          %918 = vst [vmem:[%s181 + $0x5b8] sm:$0xff] %v734
          %919 = vst [vmem:[%s181 + $0x5c0] sm:$0xff] %v734
          %920 = vst [vmem:[%s181 + $0x5c8] sm:$0xff] %v734
          %921 = vst [vmem:[%s181 + $0x5d0] sm:$0xff] %v734
          %922 = vst [vmem:[%s181 + $0x5d8] sm:$0xff] %v734
          %923 = vst [vmem:[%s181 + $0x5e0] sm:$0xff] %v734
          %924 = vst [vmem:[%s181 + $0x5e8] sm:$0xff] %v734
          %925 = vst [vmem:[%s181 + $0x5f0] sm:$0xff] %v734
          %926 = vst [vmem:[%s181 + $0x5f8] sm:$0xff] %v734
          %927 = vst [vmem:[%s181 + $0x600] sm:$0xff] %v734
          %928 = vst [vmem:[%s181 + $0x608] sm:$0xff] %v734
          %929 = vst [vmem:[%s181 + $0x610] sm:$0xff] %v734
          %930 = vst [vmem:[%s181 + $0x618] sm:$0xff] %v734
          %931 = vst [vmem:[%s181 + $0x620] sm:$0xff] %v734
          %932 = vst [vmem:[%s181 + $0x628] sm:$0xff] %v734
          %933 = vst [vmem:[%s181 + $0x630] sm:$0xff] %v734
          %934 = vst [vmem:[%s181 + $0x638] sm:$0xff] %v734
          %935 = vst [vmem:[%s181 + $0x640] sm:$0xff] %v734
          %936 = vst [vmem:[%s181 + $0x648] sm:$0xff] %v734
          %937 = vst [vmem:[%s181 + $0x650] sm:$0xff] %v734
          %938 = vst [vmem:[%s181 + $0x658] sm:$0xff] %v734
          %939 = vst [vmem:[%s181 + $0x660] sm:$0xff] %v734
          %940 = vst [vmem:[%s181 + $0x668] sm:$0xff] %v734
          %941 = vst [vmem:[%s181 + $0x670] sm:$0xff] %v734
          %942 = vst [vmem:[%s181 + $0x678] sm:$0xff] %v734
          %943 = vst [vmem:[%s181 + $0x680] sm:$0xff] %v734
          %944 = vst [vmem:[%s181 + $0x688] sm:$0xff] %v734
          %945 = vst [vmem:[%s181 + $0x690] sm:$0xff] %v734
          %946 = vst [vmem:[%s181 + $0x698] sm:$0xff] %v734
          %947 = vst [vmem:[%s181 + $0x6a0] sm:$0xff] %v734
          %948 = vst [vmem:[%s181 + $0x6a8] sm:$0xff] %v734
          %949 = vst [vmem:[%s181 + $0x6b0] sm:$0xff] %v734
          %950 = vst [vmem:[%s181 + $0x6b8] sm:$0xff] %v734
          %951 = vst [vmem:[%s181 + $0x6c0] sm:$0xff] %v734
          %952 = vst [vmem:[%s181 + $0x6c8] sm:$0xff] %v734
          %953 = vst [vmem:[%s181 + $0x6d0] sm:$0xff] %v734
          %954 = vst [vmem:[%s181 + $0x6d8] sm:$0xff] %v734
          %955 = vst [vmem:[%s181 + $0x6e0] sm:$0xff] %v734
          %956 = vst [vmem:[%s181 + $0x6e8] sm:$0xff] %v734
          %957 = vst [vmem:[%s181 + $0x6f0] sm:$0xff] %v734
          %958 = vst [vmem:[%s181 + $0x6f8] sm:$0xff] %v734
          %959 = vst [vmem:[%s181 + $0x700] sm:$0xff] %v734
          %960 = vst [vmem:[%s181 + $0x708] sm:$0xff] %v734
          %961 = vst [vmem:[%s181 + $0x710] sm:$0xff] %v734
          %962 = vst [vmem:[%s181 + $0x718] sm:$0xff] %v734
          %963 = vst [vmem:[%s181 + $0x720] sm:$0xff] %v734
          %964 = vst [vmem:[%s181 + $0x728] sm:$0xff] %v734
          %965 = vst [vmem:[%s181 + $0x730] sm:$0xff] %v734
          %966 = vst [vmem:[%s181 + $0x738] sm:$0xff] %v734
          %967 = vst [vmem:[%s181 + $0x740] sm:$0xff] %v734
          %968 = vst [vmem:[%s181 + $0x748] sm:$0xff] %v734
          %969 = vst [vmem:[%s181 + $0x750] sm:$0xff] %v734
          %970 = vst [vmem:[%s181 + $0x758] sm:$0xff] %v734
          %971 = vst [vmem:[%s181 + $0x760] sm:$0xff] %v734
          %972 = vst [vmem:[%s181 + $0x768] sm:$0xff] %v734
          %973 = vst [vmem:[%s181 + $0x770] sm:$0xff] %v734
          %974 = vst [vmem:[%s181 + $0x778] sm:$0xff] %v734
          %975 = vst [vmem:[%s181 + $0x780] sm:$0xff] %v734
          %976 = vst [vmem:[%s181 + $0x788] sm:$0xff] %v734
          %977 = vst [vmem:[%s181 + $0x790] sm:$0xff] %v734
          %978 = vst [vmem:[%s181 + $0x798] sm:$0xff] %v734
          %979 = vst [vmem:[%s181 + $0x7a0] sm:$0xff] %v734
          %980 = vst [vmem:[%s181 + $0x7a8] sm:$0xff] %v734
          %981 = vst [vmem:[%s181 + $0x7b0] sm:$0xff] %v734
          %982 = vst [vmem:[%s181 + $0x7b8] sm:$0xff] %v734
          %983 = vst [vmem:[%s181 + $0x7c0] sm:$0xff] %v734
          %984 = vst [vmem:[%s181 + $0x7c8] sm:$0xff] %v734
          %985 = vst [vmem:[%s181 + $0x7d0] sm:$0xff] %v734
          %986 = vst [vmem:[%s181 + $0x7d8] sm:$0xff] %v734
          %987 = vst [vmem:[%s181 + $0x7e0] sm:$0xff] %v734
          %988 = vst [vmem:[%s181 + $0x7e8] sm:$0xff] %v734
          %989 = vst [vmem:[%s181 + $0x7f0] sm:$0xff] %v734
          %990 = vst [vmem:[%s181 + $0x7f8] sm:$0xff] %v734
          %991 = vst [vmem:[%s181 + $0x800] sm:$0xff] %v734
          %992 = vst [vmem:[%s181 + $0x808] sm:$0xff] %v734
          %993 = vst [vmem:[%s181 + $0x810] sm:$0xff] %v734
          %994 = vst [vmem:[%s181 + $0x818] sm:$0xff] %v734
          %995 = vst [vmem:[%s181 + $0x820] sm:$0xff] %v734
          %996 = vst [vmem:[%s181 + $0x828] sm:$0xff] %v734
          %997 = vst [vmem:[%s181 + $0x830] sm:$0xff] %v734
          %998 = vst [vmem:[%s181 + $0x838] sm:$0xff] %v734
          %999 = vst [vmem:[%s181 + $0x840] sm:$0xff] %v734
          %1000 = vst [vmem:[%s181 + $0x848] sm:$0xff] %v734
          %1001 = vst [vmem:[%s181 + $0x850] sm:$0xff] %v734
          %1002 = vst [vmem:[%s181 + $0x858] sm:$0xff] %v734
          %1003 = vst [vmem:[%s181 + $0x860] sm:$0xff] %v734
          %1004 = vst [vmem:[%s181 + $0x868] sm:$0xff] %v734
          %1005 = vst [vmem:[%s181 + $0x870] sm:$0xff] %v734
          %1006 = vst [vmem:[%s181 + $0x878] sm:$0xff] %v734
          %1007 = vst [vmem:[%s181 + $0x880] sm:$0xff] %v734
          %1008 = vst [vmem:[%s181 + $0x888] sm:$0xff] %v734
          %1009 = vst [vmem:[%s181 + $0x890] sm:$0xff] %v734
          %1010 = vst [vmem:[%s181 + $0x898] sm:$0xff] %v734
          %1011 = vst [vmem:[%s181 + $0x8a0] sm:$0xff] %v734
          %1012 = vst [vmem:[%s181 + $0x8a8] sm:$0xff] %v734
          %1013 = vst [vmem:[%s181 + $0x8b0] sm:$0xff] %v734
          %1014 = vst [vmem:[%s181 + $0x8b8] sm:$0xff] %v734
          %1015 = vst [vmem:[%s181 + $0x8c0] sm:$0xff] %v734
          %1016 = vst [vmem:[%s181 + $0x8c8] sm:$0xff] %v734
          %1017 = vst [vmem:[%s181 + $0x8d0] sm:$0xff] %v734
          %1018 = vst [vmem:[%s181 + $0x8d8] sm:$0xff] %v734
          %1019 = vst [vmem:[%s181 + $0x8e0] sm:$0xff] %v734
          %1020 = vst [vmem:[%s181 + $0x8e8] sm:$0xff] %v734
          %1021 = vst [vmem:[%s181 + $0x8f0] sm:$0xff] %v734
          %1022 = vst [vmem:[%s181 + $0x8f8] sm:$0xff] %v734
          %1023 = vst [vmem:[%s181 + $0x900] sm:$0xff] %v734
          %1024 = vst [vmem:[%s181 + $0x908] sm:$0xff] %v734
          %1025 = vst [vmem:[%s181 + $0x910] sm:$0xff] %v734
          %1026 = vst [vmem:[%s181 + $0x918] sm:$0xff] %v734
          %1027 = vst [vmem:[%s181 + $0x920] sm:$0xff] %v734
          %1028 = vst [vmem:[%s181 + $0x928] sm:$0xff] %v734
          %1029 = vst [vmem:[%s181 + $0x930] sm:$0xff] %v734
          %1030 = vst [vmem:[%s181 + $0x938] sm:$0xff] %v734
          %1031 = vst [vmem:[%s181 + $0x940] sm:$0xff] %v734
          %1032 = vst [vmem:[%s181 + $0x948] sm:$0xff] %v734
          %1033 = vst [vmem:[%s181 + $0x950] sm:$0xff] %v734
          %1034 = vst [vmem:[%s181 + $0x958] sm:$0xff] %v734
          %1035 = vst [vmem:[%s181 + $0x960] sm:$0xff] %v734
          %1036 = vst [vmem:[%s181 + $0x968] sm:$0xff] %v734
          %1037 = vst [vmem:[%s181 + $0x970] sm:$0xff] %v734
          %1038 = vst [vmem:[%s181 + $0x978] sm:$0xff] %v734
          %1039 = vst [vmem:[%s181 + $0x980] sm:$0xff] %v734
          %1040 = vst [vmem:[%s181 + $0x988] sm:$0xff] %v734
          %1041 = vst [vmem:[%s181 + $0x990] sm:$0xff] %v734
          %1042 = vst [vmem:[%s181 + $0x998] sm:$0xff] %v734
          %1043 = vst [vmem:[%s181 + $0x9a0] sm:$0xff] %v734
          %1044 = vst [vmem:[%s181 + $0x9a8] sm:$0xff] %v734
          %1045 = vst [vmem:[%s181 + $0x9b0] sm:$0xff] %v734
          %1046 = vst [vmem:[%s181 + $0x9b8] sm:$0xff] %v734
          %1047 = vst [vmem:[%s181 + $0x9c0] sm:$0xff] %v734
          %1048 = vst [vmem:[%s181 + $0x9c8] sm:$0xff] %v734
          %1049 = vst [vmem:[%s181 + $0x9d0] sm:$0xff] %v734
          %1050 = vst [vmem:[%s181 + $0x9d8] sm:$0xff] %v734
          %1051 = vst [vmem:[%s181 + $0x9e0] sm:$0xff] %v734
          %1052 = vst [vmem:[%s181 + $0x9e8] sm:$0xff] %v734
          %1053 = vst [vmem:[%s181 + $0x9f0] sm:$0xff] %v734
          %1054 = vst [vmem:[%s181 + $0x9f8] sm:$0xff] %v734
          %1055 = vst [vmem:[%s181 + $0xa00] sm:$0xff] %v734
          %1056 = vst [vmem:[%s181 + $0xa08] sm:$0xff] %v734
          %1057 = vst [vmem:[%s181 + $0xa10] sm:$0xff] %v734
          %1058 = vst [vmem:[%s181 + $0xa18] sm:$0xff] %v734
          %1059 = vst [vmem:[%s181 + $0xa20] sm:$0xff] %v734
          %1060 = vst [vmem:[%s181 + $0xa28] sm:$0xff] %v734
          %1061 = vst [vmem:[%s181 + $0xa30] sm:$0xff] %v734
          %1062 = vst [vmem:[%s181 + $0xa38] sm:$0xff] %v734
          %1063 = vst [vmem:[%s181 + $0xa40] sm:$0xff] %v734
          %1064 = vst [vmem:[%s181 + $0xa48] sm:$0xff] %v734
          %1065 = vst [vmem:[%s181 + $0xa50] sm:$0xff] %v734
          %1066 = vst [vmem:[%s181 + $0xa58] sm:$0xff] %v734
          %1067 = vst [vmem:[%s181 + $0xa60] sm:$0xff] %v734
          %1068 = vst [vmem:[%s181 + $0xa68] sm:$0xff] %v734
          %1069 = vst [vmem:[%s181 + $0xa70] sm:$0xff] %v734
          %1070 = vst [vmem:[%s181 + $0xa78] sm:$0xff] %v734
          %1071 = vst [vmem:[%s181 + $0xa80] sm:$0xff] %v734
          %1072 = vst [vmem:[%s181 + $0xa88] sm:$0xff] %v734
          %1073 = vst [vmem:[%s181 + $0xa90] sm:$0xff] %v734
          %1074 = vst [vmem:[%s181 + $0xa98] sm:$0xff] %v734
          %1075 = vst [vmem:[%s181 + $0xaa0] sm:$0xff] %v734
          %1076 = vst [vmem:[%s181 + $0xaa8] sm:$0xff] %v734
          %1077 = vst [vmem:[%s181 + $0xab0] sm:$0xff] %v734
          %1078 = vst [vmem:[%s181 + $0xab8] sm:$0xff] %v734
          %1079 = vst [vmem:[%s181 + $0xac0] sm:$0xff] %v734
          %1080 = vst [vmem:[%s181 + $0xac8] sm:$0xff] %v734
          %1081 = vst [vmem:[%s181 + $0xad0] sm:$0xff] %v734
          %1082 = vst [vmem:[%s181 + $0xad8] sm:$0xff] %v734
          %1083 = vst [vmem:[%s181 + $0xae0] sm:$0xff] %v734
          %1084 = vst [vmem:[%s181 + $0xae8] sm:$0xff] %v734
          %1085 = vst [vmem:[%s181 + $0xaf0] sm:$0xff] %v734
          %1086 = vst [vmem:[%s181 + $0xaf8] sm:$0xff] %v734
          %1087 = vst [vmem:[%s181 + $0xb00] sm:$0xff] %v734
          %1088 = vst [vmem:[%s181 + $0xb08] sm:$0xff] %v734
          %1089 = vst [vmem:[%s181 + $0xb10] sm:$0xff] %v734
          %1090 = vst [vmem:[%s181 + $0xb18] sm:$0xff] %v734
          %1091 = vst [vmem:[%s181 + $0xb20] sm:$0xff] %v734
          %1092 = vst [vmem:[%s181 + $0xb28] sm:$0xff] %v734
          %1093 = vst [vmem:[%s181 + $0xb30] sm:$0xff] %v734
          %1094 = vst [vmem:[%s181 + $0xb38] sm:$0xff] %v734
          %1095 = vst [vmem:[%s181 + $0xb40] sm:$0xff] %v734
          %1096 = vst [vmem:[%s181 + $0xb48] sm:$0xff] %v734
          %1097 = vst [vmem:[%s181 + $0xb50] sm:$0xff] %v734
          %1098 = vst [vmem:[%s181 + $0xb58] sm:$0xff] %v734
          %1099 = vst [vmem:[%s181 + $0xb60] sm:$0xff] %v734
          %1100 = vst [vmem:[%s181 + $0xb68] sm:$0xff] %v734
          %1101 = vst [vmem:[%s181 + $0xb70] sm:$0xff] %v734
          %1102 = vst [vmem:[%s181 + $0xb78] sm:$0xff] %v734
          %1103 = vst [vmem:[%s181 + $0xb80] sm:$0xff] %v734
          %1104 = vst [vmem:[%s181 + $0xb88] sm:$0xff] %v734
          %1105 = vst [vmem:[%s181 + $0xb90] sm:$0xff] %v734
          %1106 = vst [vmem:[%s181 + $0xb98] sm:$0xff] %v734
          %1107 = vst [vmem:[%s181 + $0xba0] sm:$0xff] %v734
          %1108 = vst [vmem:[%s181 + $0xba8] sm:$0xff] %v734
          %1109 = vst [vmem:[%s181 + $0xbb0] sm:$0xff] %v734
          %1110 = vst [vmem:[%s181 + $0xbb8] sm:$0xff] %v734
          %1111 = vst [vmem:[%s181 + $0xbc0] sm:$0xff] %v734
          %1112 = vst [vmem:[%s181 + $0xbc8] sm:$0xff] %v734
          %1113 = vst [vmem:[%s181 + $0xbd0] sm:$0xff] %v734
          %1114 = vst [vmem:[%s181 + $0xbd8] sm:$0xff] %v734
          %1115 = vst [vmem:[%s181 + $0xbe0] sm:$0xff] %v734
          %1116 = vst [vmem:[%s181 + $0xbe8] sm:$0xff] %v734
          %1117 = vst [vmem:[%s181 + $0xbf0] sm:$0xff] %v734
          %1118 = vst [vmem:[%s181 + $0xbf8] sm:$0xff] %v734
          %1119 = vst [vmem:[%s181 + $0xc00] sm:$0xff] %v734
          %1120 = vst [vmem:[%s181 + $0xc08] sm:$0xff] %v734
          %1121 = vst [vmem:[%s181 + $0xc10] sm:$0xff] %v734
          %1122 = vst [vmem:[%s181 + $0xc18] sm:$0xff] %v734
          %1123 = vst [vmem:[%s181 + $0xc20] sm:$0xff] %v734
          %1124 = vst [vmem:[%s181 + $0xc28] sm:$0xff] %v734
          %1125 = vst [vmem:[%s181 + $0xc30] sm:$0xff] %v734
          %1126 = vst [vmem:[%s181 + $0xc38] sm:$0xff] %v734
          %1127 = vst [vmem:[%s181 + $0xc40] sm:$0xff] %v734
          %1128 = vst [vmem:[%s181 + $0xc48] sm:$0xff] %v734
          %1129 = vst [vmem:[%s181 + $0xc50] sm:$0xff] %v734
          %1130 = vst [vmem:[%s181 + $0xc58] sm:$0xff] %v734
          %1131 = vst [vmem:[%s181 + $0xc60] sm:$0xff] %v734
          %1132 = vst [vmem:[%s181 + $0xc68] sm:$0xff] %v734
          %1133 = vst [vmem:[%s181 + $0xc70] sm:$0xff] %v734
          %1134 = vst [vmem:[%s181 + $0xc78] sm:$0xff] %v734
          %1135 = vst [vmem:[%s181 + $0xc80] sm:$0xff] %v734
          %1136 = vst [vmem:[%s181 + $0xc88] sm:$0xff] %v734
          %1137 = vst [vmem:[%s181 + $0xc90] sm:$0xff] %v734
          %1138 = vst [vmem:[%s181 + $0xc98] sm:$0xff] %v734
          %1139 = vst [vmem:[%s181 + $0xca0] sm:$0xff] %v734
          %1140 = vst [vmem:[%s181 + $0xca8] sm:$0xff] %v734
          %1141 = vst [vmem:[%s181 + $0xcb0] sm:$0xff] %v734
          %1142 = vst [vmem:[%s181 + $0xcb8] sm:$0xff] %v734
          %1143 = vst [vmem:[%s181 + $0xcc0] sm:$0xff] %v734
          %1144 = vst [vmem:[%s181 + $0xcc8] sm:$0xff] %v734
          %1145 = vst [vmem:[%s181 + $0xcd0] sm:$0xff] %v734
          %1146 = vst [vmem:[%s181 + $0xcd8] sm:$0xff] %v734
          %1147 = vst [vmem:[%s181 + $0xce0] sm:$0xff] %v734
          %1148 = vst [vmem:[%s181 + $0xce8] sm:$0xff] %v734
          %1149 = vst [vmem:[%s181 + $0xcf0] sm:$0xff] %v734
          %1150 = vst [vmem:[%s181 + $0xcf8] sm:$0xff] %v734
          %1151 = vst [vmem:[%s181 + $0xd00] sm:$0xff] %v734
          %1152 = vst [vmem:[%s181 + $0xd08] sm:$0xff] %v734
          %1153 = vst [vmem:[%s181 + $0xd10] sm:$0xff] %v734
          %1154 = vst [vmem:[%s181 + $0xd18] sm:$0xff] %v734
          %1155 = vst [vmem:[%s181 + $0xd20] sm:$0xff] %v734
          %1156 = vst [vmem:[%s181 + $0xd28] sm:$0xff] %v734
          %1157 = vst [vmem:[%s181 + $0xd30] sm:$0xff] %v734
          %1158 = vst [vmem:[%s181 + $0xd38] sm:$0xff] %v734
          %1159 = vst [vmem:[%s181 + $0xd40] sm:$0xff] %v734
          %1160 = vst [vmem:[%s181 + $0xd48] sm:$0xff] %v734
          %1161 = vst [vmem:[%s181 + $0xd50] sm:$0xff] %v734
          %1162 = vst [vmem:[%s181 + $0xd58] sm:$0xff] %v734
          %1163 = vst [vmem:[%s181 + $0xd60] sm:$0xff] %v734
          %1164 = vst [vmem:[%s181 + $0xd68] sm:$0xff] %v734
          %1165 = vst [vmem:[%s181 + $0xd70] sm:$0xff] %v734
          %1166 = vst [vmem:[%s181 + $0xd78] sm:$0xff] %v734
          %1167 = vst [vmem:[%s181 + $0xd80] sm:$0xff] %v734
          %1168 = vst [vmem:[%s181 + $0xd88] sm:$0xff] %v734
          %1169 = vst [vmem:[%s181 + $0xd90] sm:$0xff] %v734
          %1170 = vst [vmem:[%s181 + $0xd98] sm:$0xff] %v734
          %1171 = vst [vmem:[%s181 + $0xda0] sm:$0xff] %v734
          %1172 = vst [vmem:[%s181 + $0xda8] sm:$0xff] %v734
          %1173 = vst [vmem:[%s181 + $0xdb0] sm:$0xff] %v734
          %1174 = vst [vmem:[%s181 + $0xdb8] sm:$0xff] %v734
          %1175 = vst [vmem:[%s181 + $0xdc0] sm:$0xff] %v734
          %1176 = vst [vmem:[%s181 + $0xdc8] sm:$0xff] %v734
          %1177 = vst [vmem:[%s181 + $0xdd0] sm:$0xff] %v734
          %1178 = vst [vmem:[%s181 + $0xdd8] sm:$0xff] %v734
          %1179 = vst [vmem:[%s181 + $0xde0] sm:$0xff] %v734
          %1180 = vst [vmem:[%s181 + $0xde8] sm:$0xff] %v734
          %1181 = vst [vmem:[%s181 + $0xdf0] sm:$0xff] %v734
          %1182 = vst [vmem:[%s181 + $0xdf8] sm:$0xff] %v734
          %1183 = vst [vmem:[%s181 + $0xe00] sm:$0xff] %v734
          %1184 = vst [vmem:[%s181 + $0xe08] sm:$0xff] %v734
          %1185 = vst [vmem:[%s181 + $0xe10] sm:$0xff] %v734
          %1186 = vst [vmem:[%s181 + $0xe18] sm:$0xff] %v734
          %1187 = vst [vmem:[%s181 + $0xe20] sm:$0xff] %v734
          %1188 = vst [vmem:[%s181 + $0xe28] sm:$0xff] %v734
          %1189 = vst [vmem:[%s181 + $0xe30] sm:$0xff] %v734
          %1190 = vst [vmem:[%s181 + $0xe38] sm:$0xff] %v734
          %1191 = vst [vmem:[%s181 + $0xe40] sm:$0xff] %v734
          %1192 = vst [vmem:[%s181 + $0xe48] sm:$0xff] %v734
          %1193 = vst [vmem:[%s181 + $0xe50] sm:$0xff] %v734
          %1194 = vst [vmem:[%s181 + $0xe58] sm:$0xff] %v734
          %1195 = vst [vmem:[%s181 + $0xe60] sm:$0xff] %v734
          %1196 = vst [vmem:[%s181 + $0xe68] sm:$0xff] %v734
          %1197 = vst [vmem:[%s181 + $0xe70] sm:$0xff] %v734
          %1198 = vst [vmem:[%s181 + $0xe78] sm:$0xff] %v734
          %1199 = vst [vmem:[%s181 + $0xe80] sm:$0xff] %v734
          %1200 = vst [vmem:[%s181 + $0xe88] sm:$0xff] %v734
          %1201 = vst [vmem:[%s181 + $0xe90] sm:$0xff] %v734
          %1202 = vst [vmem:[%s181 + $0xe98] sm:$0xff] %v734
          %1203 = vst [vmem:[%s181 + $0xea0] sm:$0xff] %v734
          %1204 = vst [vmem:[%s181 + $0xea8] sm:$0xff] %v734
          %1205 = vst [vmem:[%s181 + $0xeb0] sm:$0xff] %v734
          %1206 = vst [vmem:[%s181 + $0xeb8] sm:$0xff] %v734
          %1207 = vst [vmem:[%s181 + $0xec0] sm:$0xff] %v734
          %1208 = vst [vmem:[%s181 + $0xec8] sm:$0xff] %v734
          %1209 = vst [vmem:[%s181 + $0xed0] sm:$0xff] %v734
          %1210 = vst [vmem:[%s181 + $0xed8] sm:$0xff] %v734
          %1211 = vst [vmem:[%s181 + $0xee0] sm:$0xff] %v734
          %1212 = vst [vmem:[%s181 + $0xee8] sm:$0xff] %v734
          %1213 = vst [vmem:[%s181 + $0xef0] sm:$0xff] %v734
          %1214 = vst [vmem:[%s181 + $0xef8] sm:$0xff] %v734
          %1215 = vst [vmem:[%s181 + $0xf00] sm:$0xff] %v734
          %1216 = vst [vmem:[%s181 + $0xf08] sm:$0xff] %v734
          %1217 = vst [vmem:[%s181 + $0xf10] sm:$0xff] %v734
          %1218 = vst [vmem:[%s181 + $0xf18] sm:$0xff] %v734
          %1219 = vst [vmem:[%s181 + $0xf20] sm:$0xff] %v734
          %1220 = vst [vmem:[%s181 + $0xf28] sm:$0xff] %v734
          %1221 = vst [vmem:[%s181 + $0xf30] sm:$0xff] %v734
          %1222 = vst [vmem:[%s181 + $0xf38] sm:$0xff] %v734
          %1223 = vst [vmem:[%s181 + $0xf40] sm:$0xff] %v734
          %1224 = vst [vmem:[%s181 + $0xf48] sm:$0xff] %v734
          %1225 = vst [vmem:[%s181 + $0xf50] sm:$0xff] %v734
          %1226 = vst [vmem:[%s181 + $0xf58] sm:$0xff] %v734
          %1227 = vst [vmem:[%s181 + $0xf60] sm:$0xff] %v734
          %1228 = vst [vmem:[%s181 + $0xf68] sm:$0xff] %v734
          %1229 = vst [vmem:[%s181 + $0xf70] sm:$0xff] %v734
          %1230 = vst [vmem:[%s181 + $0xf78] sm:$0xff] %v734
          %1231 = vst [vmem:[%s181 + $0xf80] sm:$0xff] %v734
          %1232 = vst [vmem:[%s181 + $0xf88] sm:$0xff] %v734
          %1233 = vst [vmem:[%s181 + $0xf90] sm:$0xff] %v734
          %1234 = vst [vmem:[%s181 + $0xf98] sm:$0xff] %v734
          %1235 = vst [vmem:[%s181 + $0xfa0] sm:$0xff] %v734
          %1236 = vst [vmem:[%s181 + $0xfa8] sm:$0xff] %v734
          %1237 = vst [vmem:[%s181 + $0xfb0] sm:$0xff] %v734
          %1238 = vst [vmem:[%s181 + $0xfb8] sm:$0xff] %v734
          %1239 = vst [vmem:[%s181 + $0xfc0] sm:$0xff] %v734
          %1240 = vst [vmem:[%s181 + $0xfc8] sm:$0xff] %v734
          %1241 = vst [vmem:[%s181 + $0xfd0] sm:$0xff] %v734
          %1242 = vst [vmem:[%s181 + $0xfd8] sm:$0xff] %v734
          %1243 = vst [vmem:[%s181 + $0xfe0] sm:$0xff] %v734
          %1244 = vst [vmem:[%s181 + $0xfe8] sm:$0xff] %v734
          %1245 = vst [vmem:[%s181 + $0xff0] sm:$0xff] %v734
          %1246 = vst [vmem:[%s181 + $0xff8] sm:$0xff] %v734
        $region40: #{generalized_rcnn_forward.9} parent=27 // pred_fallthru
          _
        %s1247 = smul.u32 4, %s19
        %p1248 = scmp.lt.s32.totalorder %s18, 1
        %s1249 = scalar_select %p1248, %s18, 1
        %p1250 = scmp.lt.s32.totalorder %s1247, 15
        %s1251 = scalar_select %p1250, %s1247, 15
        %s1252 = smul.addr %s1251, 128
        %s1253 = smul.addr %s1249, 2048
        %s1254 = sadd.s32 %s1252, %s1253
        %s1255 = smul.addr %s1254, 8
        %s1256 = scalar_lea.vmem %s2, %s1255
        // Predicated region
        $region41: #{generalized_rcnn_forward.9} parent=27 // pred_check
          %p1257 = pneg %p93
        $region42: #{generalized_rcnn_forward.9} parent=27 // pred_check_branch
          %1259 = sbr.rel (%p1257) target = $region44
        $region43: #{generalized_rcnn_forward.9} parent=27 // pred_region
          %s1260 = smul.u32 4, %s19
        $region44: #{generalized_rcnn_forward.9} parent=27 // pred_fallthru
          _
      $region28: #{generalized_rcnn_forward.9} parent=5 // pred_fallthru
        _
      %p1261 = scmp.le.s32.totalorder 2, %s9
      // Predicated region
      $region45: #{generalized_rcnn_forward.9} parent=5 // pred_check
        %p1262 = pneg %p1261
      $region46: #{generalized_rcnn_forward.9} parent=5 // pred_check_branch
        %1264 = sbr.rel (%p1262) target = $region48
      $region47: #{generalized_rcnn_forward.9} parent=5 // pred_region
        %s1265 = ssub.s32 %s9, 2
        // Predicated region
        $region49: #{generalized_rcnn_forward.9} parent=47 // pred_check
          %p1266 = pneg %p99
        $region50: #{generalized_rcnn_forward.9} parent=47 // pred_check_branch
          %1268 = sbr.rel (%p1266) target = $region52
        $region51: #{generalized_rcnn_forward.9} parent=47 // pred_region
          %s1269 = smul.u32 4, %s21
          %p1270 = scmp.lt.s32.totalorder %s20, 1
          %s1271 = scalar_select %p1270, %s20, 1
          %p1272 = scmp.lt.s32.totalorder %s1269, 15
          %s1273 = scalar_select %p1272, %s1269, 15
          %s1274 = smul.addr %s1273, 128
          %s1275 = smul.addr %s1271, 2048
          %s1276 = sadd.s32 %s1274, %s1275
          %s1277 = smul.addr %s1276, 8
          %s1278 = scalar_lea.vmem %s2, %s1277
        $region52: #{generalized_rcnn_forward.9} parent=47 // pred_fallthru
          _
      $region48: #{generalized_rcnn_forward.9} parent=5 // pred_fallthru
        _
    $region6: #{generalized_rcnn_forward.9} parent=1 // loop_footer
      %s13 = sadd.s32 1, %s9
    $region7: #{generalized_rcnn_forward.9} parent=1 // loop_footer_branch
      %8 = sbr.rel target = $region3
    $region8: #{generalized_rcnn_forward.9} parent=1 // loop_exit
      _
    %1279 = vsyncpa [#allocation3], 1
    %s1280 = scalar_lea.sflag [#allocation3], 1
    %1281 = vsyncpa %s1280, 1

// kernel: generalized_rcnn_forward.5
$region0: #{generalized_rcnn_forward.5}
  #allocation0 [shape = 'u32[]', space=smem, size = 0x4, offset = 0x4, fixed_abs, tag = 'smem constant byte address 0x4 - core index']
  #allocation1 [shape = 'u32[72,128]{1,0:T(1,128)}', space=vmem, size = 0x9000, scoped, tag = 'internal scratch']
  %s0 = inlined_call_operand.vmem [shape: f32[6], index: 0, kind: input, shape index: {}]
  %s1 = inlined_call_operand.vmem [shape: f32[6], index: 1, kind: input, shape index: {}]
  %s2 = inlined_call_operand.vmem [shape: f32[6,1,4096], index: 2, kind: input, shape index: {}]
  %s3 = inlined_call_operand.vmem [shape: f32[6,1,4096], index: 3, kind: output, shape index: {}]
  %s4 = sld [smem:[#allocation0]]
  $region53: #{generalized_rcnn_forward.5} parent=0
    _
  %s6 = ssub.s32 1, %s4
  %s7 = scalar_select 0, %s6, %s4
  $region1: #{generalized_rcnn_forward.5} parent=0
    #allocation2 [shape = 'u8[512]{0}', space=smem, size = 0x200, scoped, tag = 'input window, operand 0, single buffered']
    #allocation3 [shape = 's32[2]{0}', space=sflag, size = 0x8, scoped, tag = 'scoped memory for generalized_rcnn_forward.5']
    #allocation4 [shape = 'u8[512]{0}', space=smem, size = 0x200, scoped, tag = 'input window, operand 1, single buffered']
    #allocation5 [shape = 's32[1]{0}', space=sflag, size = 0x4, scoped, tag = 'scoped memory for generalized_rcnn_forward.5']
    %8 = vsyncpa [#allocation3], 0
    %9 = vsyncpa [#allocation5], 0
    loop: start=0, step=1, limit=8
    $region2: #{generalized_rcnn_forward.5} parent=1 // loop_pre_header
      _
    $region3: #{generalized_rcnn_forward.5} parent=1 // loop_header
      %s11 = sphi 0, %s15
      %p12 = scmp.ge.s32.totalorder %s11, 8
      %s19 = sphi 0, %s19
      %s21 = sphi 0, %s19
      %s22 = sphi 0, %s21
      %s36 = sphi 0, %s22
      %s40 = sphi 0, %s40
      %s42 = sphi 0, %s40
      %s43 = sphi 0, %s42
      %s57 = sphi 0, %s43
      %s63 = sphi 0, %s65
      %s66 = sphi 0, %s63
      %s67 = sphi 0, %s66
      %s83 = sphi 0, %s67
      %s89 = sphi 0, %s91
      %s92 = sphi 0, %s89
      %s93 = sphi 0, %s92
      %s109 = sphi 0, %s93
    $region4: #{generalized_rcnn_forward.5} parent=1 // loop_header_branch
      %14 = sbr.rel (%p12) target = $region8
    $region5: #{generalized_rcnn_forward.5} parent=1 // loop_body
      %s16 = ssub.s32 %s11, 1
      %s17 = ssub.s32 %s11, 2
      %s18 = sadd.s32 %s11, 1
      %s20 = sadd.s32 %s19, 1
      %p23 = scmp.eq.s32.totalorder %s11, 5
      %p24 = scmp.ne.s32.totalorder %s19, %s21
      %p25 = scmp.eq.s32.totalorder %s11, 0
      %p26 = por %p24, %p25
      %p27 = scmp.ne.s32.totalorder %s19, %s21
      %p28 = scmp.eq.s32.totalorder %s16, 5
      %p29 = por %p27, %p28
      %p30 = scmp.ne.s32.totalorder %s21, %s22
      %p31 = scmp.eq.s32.totalorder %s16, 0
      %p32 = por %p30, %p31
      %p33 = scmp.ne.s32.totalorder %s21, %s22
      %p34 = scmp.eq.s32.totalorder %s17, 5
      %p35 = por %p33, %p34
      %p37 = scmp.ne.s32.totalorder %s22, %s36
      %p38 = scmp.eq.s32.totalorder %s17, 0
      %p39 = por %p37, %p38
      %s41 = sadd.s32 %s40, 1
      %p44 = scmp.eq.s32.totalorder %s11, 5
      %p45 = scmp.ne.s32.totalorder %s40, %s42
      %p46 = scmp.eq.s32.totalorder %s11, 0
      %p47 = por %p45, %p46
      %p48 = scmp.ne.s32.totalorder %s40, %s42
      %p49 = scmp.eq.s32.totalorder %s16, 5
      %p50 = por %p48, %p49
      %p51 = scmp.ne.s32.totalorder %s42, %s43
      %p52 = scmp.eq.s32.totalorder %s16, 0
      %p53 = por %p51, %p52
      %p54 = scmp.ne.s32.totalorder %s42, %s43
      %p55 = scmp.eq.s32.totalorder %s17, 5
      %p56 = por %p54, %p55
      %p58 = scmp.ne.s32.totalorder %s43, %s57
      %p59 = scmp.eq.s32.totalorder %s17, 0
      %p60 = por %p58, %p59
      %s61 = ssub.s32 %s11, %s18
      %p62 = scmp.eq.s32.totalorder %s61, 0
      %s64 = sadd.s32 %s63, 1
      %s65 = scalar_select %p62, %s63, %s64
      %p68 = pneg %p62
      %p69 = scmp.eq.s32.totalorder %s11, 5
      %p70 = por %p68, %p69
      %p71 = scmp.ne.s32.totalorder %s63, %s66
      %p72 = scmp.eq.s32.totalorder %s11, 0
      %p73 = por %p71, %p72
      %p74 = scmp.ne.s32.totalorder %s63, %s66
      %p75 = scmp.eq.s32.totalorder %s16, 5
      %p76 = por %p74, %p75
      %p77 = scmp.ne.s32.totalorder %s66, %s67
      %p78 = scmp.eq.s32.totalorder %s16, 0
      %p79 = por %p77, %p78
      %p80 = scmp.ne.s32.totalorder %s66, %s67
      %p81 = scmp.eq.s32.totalorder %s17, 5
      %p82 = por %p80, %p81
      %p84 = scmp.ne.s32.totalorder %s67, %s83
      %p85 = scmp.eq.s32.totalorder %s17, 0
      %p86 = por %p84, %p85
      %s87 = ssub.s32 %s11, %s18
      %p88 = scmp.eq.s32.totalorder %s87, 0
      %s90 = sadd.s32 %s89, 1
      %s91 = scalar_select %p88, %s89, %s90
      %p94 = pneg %p88
      %p95 = scmp.eq.s32.totalorder %s11, 5
      %p96 = por %p94, %p95
      %p97 = scmp.ne.s32.totalorder %s89, %s92
      %p98 = scmp.eq.s32.totalorder %s11, 0
      %p99 = por %p97, %p98
      %p100 = scmp.ne.s32.totalorder %s89, %s92
      %p101 = scmp.eq.s32.totalorder %s16, 5
      %p102 = por %p100, %p101
      %p103 = scmp.ne.s32.totalorder %s92, %s93
      %p104 = scmp.eq.s32.totalorder %s16, 0
      %p105 = por %p103, %p104
      %p106 = scmp.ne.s32.totalorder %s92, %s93
      %p107 = scmp.eq.s32.totalorder %s17, 5
      %p108 = por %p106, %p107
      %p110 = scmp.ne.s32.totalorder %s93, %s109
      %p111 = scmp.eq.s32.totalorder %s17, 0
      %p112 = por %p110, %p111
      %p113 = scmp.le.s32.totalorder 1, %s11
      %p114 = scmp.lt.s32.totalorder %s11, 7
      %p115 = pnand %p113, %p114
      %p116 = pneg %p115
      // Predicated region
      $region9: #{generalized_rcnn_forward.5} parent=5 // pred_check
        _
      $region10: #{generalized_rcnn_forward.5} parent=5 // pred_check_branch
        %118 = sbr.rel (%p115) target = $region12
      $region11: #{generalized_rcnn_forward.5} parent=5 // pred_region
        %s119 = ssub.s32 %s11, 1
        // Predicated region
        $region13: #{generalized_rcnn_forward.5} parent=11 // pred_check
          %p120 = pneg %p32
        $region14: #{generalized_rcnn_forward.5} parent=11 // pred_check_branch
          %122 = sbr.rel (%p120) target = $region16
        $region15: #{generalized_rcnn_forward.5} parent=11 // pred_region
          %124 = vsyncadd [#allocation3], 0
          %s126 = sshll.u32 %s0, 4
          %s127 = int_to_ptr.vmem [resolvable:$true] %s126
          %129 = dma.vmem_to_smem %s127, 16, [#allocation2], [#allocation3]
        $region16: #{generalized_rcnn_forward.5} parent=11 // pred_fallthru
          _
        // Predicated region
        $region17: #{generalized_rcnn_forward.5} parent=11 // pred_check
          %p130 = pneg %p53
        $region18: #{generalized_rcnn_forward.5} parent=11 // pred_check_branch
          %132 = sbr.rel (%p130) target = $region20
        $region19: #{generalized_rcnn_forward.5} parent=11 // pred_region
          %134 = vsyncadd [#allocation5], 0
          %s136 = sshll.u32 %s1, 4
          %s137 = int_to_ptr.vmem [resolvable:$true] %s136
          %139 = dma.vmem_to_smem %s137, 16, [#allocation4], [#allocation5]
        $region20: #{generalized_rcnn_forward.5} parent=11 // pred_fallthru
          _
      $region12: #{generalized_rcnn_forward.5} parent=5 // pred_fallthru
        _
      %p140 = scmp.lt.s32.totalorder %s11, 6
      // Predicated region
      $region21: #{generalized_rcnn_forward.5} parent=5 // pred_check
        %p141 = pneg %p140
      $region22: #{generalized_rcnn_forward.5} parent=5 // pred_check_branch
        %143 = sbr.rel (%p141) target = $region24
      $region23: #{generalized_rcnn_forward.5} parent=5 // pred_region
        // Predicated region
        $region25: #{generalized_rcnn_forward.5} parent=23 // pred_check
          %p144 = pneg %p73
        $region26: #{generalized_rcnn_forward.5} parent=23 // pred_check_branch
          %146 = sbr.rel (%p144) target = $region28
        $region27: #{generalized_rcnn_forward.5} parent=23 // pred_region
          %p147 = scmp.lt.s32.totalorder %s11, 5
          %s148 = scalar_select %p147, %s11, 5
          %s149 = smul.addr %s148, 32
          %s150 = scalar_lea.vmem %s2, %s149
        $region28: #{generalized_rcnn_forward.5} parent=23 // pred_fallthru
          _
      $region24: #{generalized_rcnn_forward.5} parent=5 // pred_fallthru
        _
      %p151 = scmp.le.s32.totalorder 1, %s11
      %p152 = scmp.lt.s32.totalorder %s11, 7
      %p153 = pnand %p151, %p152
      %p154 = pneg %p153
      // Predicated region
      $region29: #{generalized_rcnn_forward.5} parent=5 // pred_check
        _
      $region30: #{generalized_rcnn_forward.5} parent=5 // pred_check_branch
        %156 = sbr.rel (%p153) target = $region32
      $region31: #{generalized_rcnn_forward.5} parent=5 // pred_region
        %s157 = ssub.s32 %s11, 1
        // Predicated region
        $region33: #{generalized_rcnn_forward.5} parent=31 // pred_check
          %p158 = pneg %p32
        $region34: #{generalized_rcnn_forward.5} parent=31 // pred_check_branch
          %160 = sbr.rel (%p158) target = $region36
        $region35: #{generalized_rcnn_forward.5} parent=31 // pred_region
          %162 = dma.done [#allocation3], 16
        $region36: #{generalized_rcnn_forward.5} parent=31 // pred_fallthru
          _
        // Predicated region
        $region37: #{generalized_rcnn_forward.5} parent=31 // pred_check
          %p163 = pneg %p53
        $region38: #{generalized_rcnn_forward.5} parent=31 // pred_check_branch
          %165 = sbr.rel (%p163) target = $region40
        $region39: #{generalized_rcnn_forward.5} parent=31 // pred_region
          %167 = dma.done [#allocation5], 16
        $region40: #{generalized_rcnn_forward.5} parent=31 // pred_fallthru
          _
        %168 = sfence
        %p169 = pneg %p32
        %p170 = pneg %p29
        %p171 = pneg %p53
        %p172 = pneg %p50
        %p173 = scmp.lt.s32.totalorder %s16, 5
        %s174 = scalar_select %p173, %s16, 5
        %s175 = smul.addr %s174, 32
        %s176 = scalar_lea.vmem %s2, %s175
        %p177 = pneg %p79
        %p178 = pneg %p76
        %p179 = pneg %p105
        %p180 = pneg %p102
        %p181 = scmp.lt.s32.totalorder %s16, 5
        %s182 = scalar_select %p181, %s16, 5
        %s183 = smul.addr %s182, 32
        %s184 = scalar_lea.vmem %s3, %s183
        %p185 = scmp.lt.s32.totalorder %s16, 5
        %s186 = scalar_select %p185, %s16, 5
        %s187 = smul.addr %s186, 32
        %s188 = scalar_lea.vmem %s2, %s187
        %p189 = scmp.lt.s32.totalorder %s16, 5
        %s190 = scalar_select %p189, %s16, 5
        %s191 = smul.addr %s190, 32
        %s192 = scalar_lea.vmem %s3, %s191
        %v193 = vld [vmem:[%s188] sm:$0xff]
        %v194 = vld [vmem:[%s188 + $0x8] sm:$0xff]
        %v195 = vld [vmem:[%s188 + $0x10] sm:$0xff]
        %v196 = vld [vmem:[%s188 + $0x18] sm:$0xff]
        %s197 = sld [smem:[#allocation2 + %s16]]
        %v198 = vstv %s197
        %v199 = vsub.f32 %v193, %v198
        %v200 = vsub.f32 %v194, %v198
        %v201 = vsub.f32 %v195, %v198
        %v202 = vsub.f32 %v196, %v198
        %s203 = sld [smem:[#allocation4 + %s16]]
        %v204 = vstv %s203
        %v205 = vmul.f32 %v199, %v204
        %v206 = vmul.f32 %v200, %v204
        %v207 = vmul.f32 %v201, %v204
        %v208 = vmul.f32 %v202, %v204
        %209 = vst [vmem:[%s192] sm:$0xff] %v205
        %210 = vst [vmem:[%s192 + $0x8] sm:$0xff] %v206
        %211 = vst [vmem:[%s192 + $0x10] sm:$0xff] %v207
        %212 = vst [vmem:[%s192 + $0x18] sm:$0xff] %v208
        %p213 = scmp.lt.s32.totalorder %s16, 5
        %s214 = scalar_select %p213, %s16, 5
        %s215 = smul.addr %s214, 32
        %s216 = scalar_lea.vmem %s3, %s215
        // Predicated region
        $region41: #{generalized_rcnn_forward.5} parent=31 // pred_check
          %p217 = pneg %p102
        $region42: #{generalized_rcnn_forward.5} parent=31 // pred_check_branch
          %219 = sbr.rel (%p217) target = $region44
        $region43: #{generalized_rcnn_forward.5} parent=31 // pred_region
          _
        $region44: #{generalized_rcnn_forward.5} parent=31 // pred_fallthru
          _
      $region32: #{generalized_rcnn_forward.5} parent=5 // pred_fallthru
        _
      %p220 = scmp.le.s32.totalorder 2, %s11
      // Predicated region
      $region45: #{generalized_rcnn_forward.5} parent=5 // pred_check
        %p221 = pneg %p220
      $region46: #{generalized_rcnn_forward.5} parent=5 // pred_check_branch
        %223 = sbr.rel (%p221) target = $region48
      $region47: #{generalized_rcnn_forward.5} parent=5 // pred_region
        %s224 = ssub.s32 %s11, 2
        // Predicated region
        $region49: #{generalized_rcnn_forward.5} parent=47 // pred_check
          %p225 = pneg %p108
        $region50: #{generalized_rcnn_forward.5} parent=47 // pred_check_branch
          %227 = sbr.rel (%p225) target = $region52
        $region51: #{generalized_rcnn_forward.5} parent=47 // pred_region
          %p228 = scmp.lt.s32.totalorder %s17, 5
          %s229 = scalar_select %p228, %s17, 5
          %s230 = smul.addr %s229, 32
          %s231 = scalar_lea.vmem %s3, %s230
        $region52: #{generalized_rcnn_forward.5} parent=47 // pred_fallthru
          _
      $region48: #{generalized_rcnn_forward.5} parent=5 // pred_fallthru
        _
    $region6: #{generalized_rcnn_forward.5} parent=1 // loop_footer
      %s15 = sadd.s32 1, %s11
    $region7: #{generalized_rcnn_forward.5} parent=1 // loop_footer_branch
      %10 = sbr.rel target = $region3
    $region8: #{generalized_rcnn_forward.5} parent=1 // loop_exit
      _
    %232 = vsyncpa [#allocation3], 1
    %s233 = scalar_lea.sflag [#allocation3], 1
    %234 = vsyncpa %s233, 1
    %235 = vsyncpa [#allocation5], 1

</llo_original>
